<compile_context>
chip_gen: v7x
topology: tpu7x:2x2x1
jax: 0.10.0
libtpu: 0.0.40
codegen_flags: <defaults>
</compile_context>

<pallas_src>
import functools

import jax
import jax.numpy as jnp
from jax.experimental import pallas as pl
from jax.experimental.pallas import tpu as pltpu

EPS = 1e-5


# ---------------------------------------------------------------------------
# Small host-side helpers
# ---------------------------------------------------------------------------

def _nbytes(shape, dtype):
    size = 1
    for d in shape:
        size *= int(d)
    return size * jnp.dtype(dtype).itemsize


def _vmem_budget_bytes():
    """Generation-aware VMEM budget (~3/4 of physical; 48 MiB on v7x's 64 MiB,
    96 MiB on v5e/v6e's 128 MiB). Falls back to the v7x-safe 48 MiB."""
    cap = 64 << 20
    try:
        info = pltpu.get_tpu_info()
        cap = int(getattr(info, "vmem_capacity_bytes", cap))
    except Exception:
        pass
    return max((cap * 3) // 4, 16 << 20)


def _pick_row_tile(total_rows, target):
    """Multiple-of-8 divisor of `total_rows` close to `target`.

    Hardened: a small array is a single full-extent block; a large array whose
    row count is not a multiple of 8 raises instead of silently becoming one
    giant block; awkward row counts search *upward* (bounded) before settling
    for a tiny tile."""
    if total_rows <= target:
        return total_rows
    if total_rows % 8 != 0:
        raise ValueError("N*H*W must be a multiple of 8 to row-tile the "
                         "Bottleneck passes; pad the input spatially.")
    t = max((min(target, total_rows) // 8) * 8, 8)
    best = 8
    for tile in range(t, 7, -8):
        if total_rows % tile == 0:
            best = tile
            break
    if best < min(128, total_rows):
        # Avoid <128-row tiles (per-step overhead dominates): bounded upward
        # search so one block can never blow the VMEM budget.
        for tile in range(t + 8, min(total_rows, 4 * t) + 1, 8):
            if total_rows % tile == 0:
                return tile
    return best


def _call_params(block_bytes, flops, bytes_accessed, vmem_budget):
    # ~2x for double-buffered pipelining plus in-kernel temporaries; floored
    # for safety, capped at the generation-aware budget.
    vmem = int(min(max(4 * block_bytes + (4 << 20), 16 << 20), vmem_budget))
    return dict(
        compiler_params=pltpu.CompilerParams(
            dimension_semantics=("parallel",),
            vmem_limit_bytes=vmem),
        cost_estimate=pl.CostEstimate(
            flops=int(flops), transcendentals=0,
            bytes_accessed=int(bytes_accessed)))


def _bn_scale_shift(stats, count, gamma, beta):
    # stats: (2, C) raw [sum, sum-of-squares] over all N*H*W rows.
    # Training-mode (biased) variance, folded into per-channel scale/shift.
    mean = stats[0:1, :] / count                       # (1, C)
    var = stats[1:2, :] / count - mean * mean          # (1, C)
    var = jnp.maximum(var, 0.0)   # guard E[x^2]-E[x]^2 cancellation in f32
    scale = gamma * jax.lax.rsqrt(var + EPS)           # (1, C)
    shift = beta - mean * scale                        # (1, C)
    return scale, shift


# ---------------------------------------------------------------------------
# Kernels
# ---------------------------------------------------------------------------

def _conv1_kernel(x_ref, w1_ref, h1_ref, stats_ref, *, matmul_dtype):
    # conv1x1 as a channel matmul on the MXU; cache h1 in matmul_dtype and
    # emit per-tile [sum, sumsq] of the *rounded* values so later passes see
    # exactly the numbers the stats describe.
    h = jnp.dot(x_ref[...].astype(matmul_dtype), w1_ref[...],
                preferred_element_type=jnp.float32)
    h1 = h.astype(h1_ref.dtype)
    h1_ref[...] = h1
    hf = h1.astype(jnp.float32)
    s = jnp.sum(hf, axis=0, keepdims=True)
    ss = jnp.sum(hf * hf, axis=0, keepdims=True)
    stats_ref[...] = jnp.concatenate([s, ss], axis=0)[None]


def _stage2_kernel(h1_ref, s1_ref, b1_ref, w2_ref, h2_ref, stats_ref, pad_ref,
                   *, width, pad, matmul_dtype):
    # One image per grid step:
    #   BN1 (precomputed scale/shift) + ReLU on the cached conv1 output,
    #   then the 3x3 conv (stride 1, pad 1) built entirely in VMEM.
    rows = h1_ref.shape[0]                       # H * W
    cw = h1_ref.shape[1]

    a1 = jnp.maximum(
        h1_ref[...].astype(jnp.float32) * s1_ref[...] + b1_ref[...], 0.0)

    # Zero-padded copy of a1: pad_ref[pad + p] == a1[p], zeros in the halo
    # rows.  The nine 3x3 taps become static-offset slices of this scratch --
    # no HBM im2col and no concatenate-along-sublane shift copies.
    zero_pad = jnp.zeros((pad, cw), jnp.float32)
    pad_ref[0:pad, :] = zero_pad
    pad_ref[pad + rows:pad + rows + pad, :] = zero_pad
    pad_ref[pad:pad + rows, :] = a1

    # Column-validity masks for the +/-1 horizontal taps, generated in-kernel
    # and applied in f32 (keeps the VPU on its native path on v5e).
    col = jax.lax.broadcasted_iota(jnp.int32, (rows, 1), 0) % width
    left_ok = (col >= 1).astype(jnp.float32)         # source col x-1 valid
    right_ok = (col < width - 1).astype(jnp.float32)  # source col x+1 valid

    # K-stacked taps: for each kx the three vertically shifted operands are
    # concatenated along lanes -> 3 MXU matmuls with K = 3*Cw instead of 9
    # with K = Cw (better MXU depth fill, fewer push/drain cycles).
    acc = jnp.zeros((rows, cw), jnp.float32)
    for j, dx in enumerate((-1, 0, 1)):
        base = pad + dx
        op = jnp.concatenate(
            [pad_ref[base - width:base - width + rows, :],
             pad_ref[base:base + rows, :],
             pad_ref[base + width:base + width + rows, :]], axis=1)
        if dx == -1:
            op = op * left_ok
        elif dx == 1:
            op = op * right_ok
        acc = acc + jnp.dot(op.astype(matmul_dtype), w2_ref[j],
                            preferred_element_type=jnp.float32)

    # Store pre-BN2 activations in matmul_dtype (halves their HBM traffic);
    # BN2 partial stats come from the rounded values for self-consistency.
    h2 = acc.astype(h2_ref.dtype)
    h2_ref[...] = h2
    h2f = h2.astype(jnp.float32)
    s = jnp.sum(h2f, axis=0, keepdims=True)
    ss = jnp.sum(h2f * h2f, axis=0, keepdims=True)
    stats_ref[...] = jnp.concatenate([s, ss], axis=0)[None]


def _stats3_kernel(h2_ref, s2_ref, b2_ref, w3_ref, stats_ref, *, matmul_dtype):
    a2 = jnp.maximum(
        h2_ref[...].astype(jnp.float32) * s2_ref[...] + b2_ref[...], 0.0)
    h3 = jnp.dot(a2.astype(matmul_dtype), w3_ref[...],
                 preferred_element_type=jnp.float32)
    s = jnp.sum(h3, axis=0, keepdims=True)
    ss = jnp.sum(h3 * h3, axis=0, keepdims=True)
    stats_ref[...] = jnp.concatenate([s, ss], axis=0)[None]


def _apply_kernel(h2_ref, x_ref, s2_ref, b2_ref, w3_ref, s3_ref, b3_ref,
                  out_ref, *, matmul_dtype):
    a2 = jnp.maximum(
        h2_ref[...].astype(jnp.float32) * s2_ref[...] + b2_ref[...], 0.0)
    h3 = jnp.dot(a2.astype(matmul_dtype), w3_ref[...],
                 preferred_element_type=jnp.float32)
    y = h3 * s3_ref[...] + b3_ref[...] + x_ref[...]
    out_ref[...] = jnp.maximum(y, 0.0).astype(out_ref.dtype)


# ---------------------------------------------------------------------------
# Forward pass
# ---------------------------------------------------------------------------

def bottleneck_forward(x_nhwc, params, *, matmul_dtype=jnp.bfloat16,
                       row_tile_target=None):
    """Bottleneck forward (stride=1, groups=1, dilation=1, downsample=None).

    BatchNorm2d is evaluated with training-mode batch statistics. Matmul/conv
    operands use `matmul_dtype` on the MXU with f32 accumulation; BN/ReLU math
    stays in f32.
    """
    N, H, W, Cin = x_nhwc.shape
    Cw = params["w1"].shape[1]
    Cout = params["w3"].shape[1]
    if Cin != Cout:
        raise ValueError("identity skip requires inplanes == planes*expansion")
    P = H * W
    R = N * P
    if N > 1 and P % 8 != 0:
        raise ValueError("H*W must be a multiple of 8 for per-image blocks")
    f32 = jnp.float32

    budget = _vmem_budget_bytes()
    if row_tile_target is None:
        # v7x (64 MiB VMEM) -> smaller row tiles; v5e/v6e (128 MiB) -> larger.
        row_tile_target = 512 if budget <= (48 << 20) else 1024
    TR = _pick_row_tile(R, row_tile_target)
    T = R // TR

    x2d = x_nhwc.reshape(R, Cin)

    # MXU operand copies of the conv weights.
    w1 = params["w1"].astype(matmul_dtype)                      # (Cin, Cw)
    # 3x3 conv weight, K-stacked over ky per kx: (3, 3*Cw, Cw).
    w2_kx = jnp.transpose(params["w2_hwio"], (1, 0, 2, 3)).reshape(
        3, 3 * Cw, Cw).astype(matmul_dtype)
    w3 = params["w3"].astype(matmul_dtype)                      # (Cw, Cout)

    # ---- pass 1: conv1, cache h1 + its partial stats (row-tiled) -----------
    blocks1 = (_nbytes((TR, Cin), f32) + _nbytes((Cin, Cw), matmul_dtype)
               + _nbytes((TR, Cw), matmul_dtype) + _nbytes((1, 2, Cw), f32)
               + 2 * _nbytes((TR, Cw), f32))
    h1, stats1_p = pl.pallas_call(
        functools.partial(_conv1_kernel, matmul_dtype=matmul_dtype),
        out_shape=(jax.ShapeDtypeStruct((R, Cw), matmul_dtype),
                   jax.ShapeDtypeStruct((T, 2, Cw), f32)),
        grid=(T,),
        in_specs=[pl.BlockSpec((TR, Cin), lambda i: (i, 0)),
                  pl.BlockSpec((Cin, Cw), lambda i: (0, 0))],
        out_specs=(pl.BlockSpec((TR, Cw), lambda i: (i, 0)),
                   pl.BlockSpec((1, 2, Cw), lambda i: (i, 0, 0))),
        **_call_params(blocks1,
                       flops=2 * R * Cin * Cw + 4 * R * Cw,
                       bytes_accessed=_nbytes((R, Cin), f32)
                       + _nbytes((R, Cw), matmul_dtype)
                       + _nbytes((Cin, Cw), matmul_dtype)
                       + _nbytes((T, 2, Cw), f32),
                       vmem_budget=budget),
    )(x2d, w1)
    scale1, shift1 = _bn_scale_shift(jnp.sum(stats1_p, axis=0), R,
                                     params["g1"], params["b1"])

    # ---- pass 2: BN1+ReLU + in-VMEM 3x3 conv (one image / grid step) -------
    PADR = ((W + 1 + 7) // 8) * 8   # halo rows in the padded scratch
    blocks2 = (2 * _nbytes((P, Cw), matmul_dtype)
               + 2 * _nbytes((1, Cw), f32)
               + _nbytes((3, 3 * Cw, Cw), matmul_dtype)
               + _nbytes((P + 2 * PADR, Cw), f32)
               + _nbytes((1, 2, Cw), f32)
               + 8 * _nbytes((P, Cw), f32))
    h2, stats2_p = pl.pallas_call(
        functools.partial(_stage2_kernel, width=W, pad=PADR,
                          matmul_dtype=matmul_dtype),
        out_shape=(jax.ShapeDtypeStruct((R, Cw), matmul_dtype),
                   jax.ShapeDtypeStruct((N, 2, Cw), f32)),
        grid=(N,),
        in_specs=[pl.BlockSpec((P, Cw), lambda n: (n, 0)),
                  pl.BlockSpec((1, Cw), lambda n: (0, 0)),
                  pl.BlockSpec((1, Cw), lambda n: (0, 0)),
                  pl.BlockSpec((3, 3 * Cw, Cw), lambda n: (0, 0, 0))],
        out_specs=(pl.BlockSpec((P, Cw), lambda n: (n, 0)),
                   pl.BlockSpec((1, 2, Cw), lambda n: (n, 0, 0))),
        scratch_shapes=[pltpu.VMEM((P + 2 * PADR, Cw), f32)],
        **_call_params(blocks2,
                       flops=18 * R * Cw * Cw + 8 * R * Cw,
                       bytes_accessed=2 * _nbytes((R, Cw), matmul_dtype)
                       + _nbytes((3, 3 * Cw, Cw), matmul_dtype)
                       + _nbytes((N, 2, Cw), f32),
                       vmem_budget=budget),
    )(h1, scale1, shift1, w2_kx)
    scale2, shift2 = _bn_scale_shift(jnp.sum(stats2_p, axis=0), R,
                                     params["g2"], params["b2"])

    # ---- pass 3: stats of conv3 output (row-tiled) --------------------------
    blocks3 = (_nbytes((TR, Cw), matmul_dtype) + 2 * _nbytes((1, Cw), f32)
               + _nbytes((Cw, Cout), matmul_dtype) + _nbytes((1, 2, Cout), f32)
               + 4 * _nbytes((TR, Cout), f32))
    stats3_p = pl.pallas_call(
        functools.partial(_stats3_kernel, matmul_dtype=matmul_dtype),
        out_shape=jax.ShapeDtypeStruct((T, 2, Cout), f32),
        grid=(T,),
        in_specs=[pl.BlockSpec((TR, Cw), lambda i: (i, 0)),
                  pl.BlockSpec((1, Cw), lambda i: (0, 0)),
                  pl.BlockSpec((1, Cw), lambda i: (0, 0)),
                  pl.BlockSpec((Cw, Cout), lambda i: (0, 0))],
        out_specs=pl.BlockSpec((1, 2, Cout), lambda i: (i, 0, 0)),
        **_call_params(blocks3,
                       flops=2 * R * Cw * Cout + 8 * R * Cw + 4 * R * Cout,
                       bytes_accessed=_nbytes((R, Cw), matmul_dtype)
                       + _nbytes((Cw, Cout), matmul_dtype)
                       + _nbytes((T, 2, Cout), f32),
                       vmem_budget=budget),
    )(h2, scale2, shift2, w3)
    scale3, shift3 = _bn_scale_shift(jnp.sum(stats3_p, axis=0), R,
                                     params["g3"], params["b3"])

    # ---- pass 4: BN2+ReLU -> conv3 -> BN3 -> +identity -> ReLU --------------
    blocks4 = (_nbytes((TR, Cw), matmul_dtype) + 2 * _nbytes((TR, Cout), f32)
               + 2 * _nbytes((1, Cw), f32) + _nbytes((Cw, Cout), matmul_dtype)
               + 2 * _nbytes((1, Cout), f32) + 4 * _nbytes((TR, Cout), f32))
    out2d = pl.pallas_call(
        functools.partial(_apply_kernel, matmul_dtype=matmul_dtype),
        out_shape=jax.ShapeDtypeStruct((R, Cout), f32),
        grid=(T,),
        in_specs=[pl.BlockSpec((TR, Cw), lambda i: (i, 0)),
                  pl.BlockSpec((TR, Cout), lambda i: (i, 0)),
                  pl.BlockSpec((1, Cw), lambda i: (0, 0)),
                  pl.BlockSpec((1, Cw), lambda i: (0, 0)),
                  pl.BlockSpec((Cw, Cout), lambda i: (0, 0)),
                  pl.BlockSpec((1, Cout), lambda i: (0, 0)),
                  pl.BlockSpec((1, Cout), lambda i: (0, 0))],
        out_specs=pl.BlockSpec((TR, Cout), lambda i: (i, 0)),
        **_call_params(blocks4,
                       flops=2 * R * Cw * Cout + 6 * R * Cout,
                       bytes_accessed=_nbytes((R, Cw), matmul_dtype)
                       + 2 * _nbytes((R, Cout), f32)
                       + _nbytes((Cw, Cout), matmul_dtype),
                       vmem_budget=budget),
    )(h2, x2d, scale2, shift2, w3, scale3, shift3)

    return out2d.reshape(N, H, W, Cout)


# ---------------------------------------------------------------------------
# Pure-JAX reference (PyTorch forward semantics, training-mode BatchNorm)
# ---------------------------------------------------------------------------

def bottleneck_reference(x_nhwc, params, matmul_dtype=jnp.float32):
    """`matmul_dtype` emulates the kernel's mixed-precision policy: matmul
    operands and the cached h1/h2 activations are rounded to this dtype,
    accumulation and BatchNorm math stay in float32."""
    hi = jax.lax.Precision.HIGHEST

    def q(a):
        return a.astype(matmul_dtype).astype(jnp.float32)

    def bn(h, g, b):
        mean = jnp.mean(h, axis=(0, 1, 2), keepdims=True)
        var = jnp.mean(jnp.square(h - mean), axis=(0, 1, 2), keepdims=True)
        return ((h - mean) * jax.lax.rsqrt(var + EPS)
                * g.reshape(1, 1, 1, -1) + b.reshape(1, 1, 1, -1))

    h = jnp.einsum('nhwc,co->nhwo', q(x_nhwc), q(params["w1"]), precision=hi)
    h = q(h)  # the kernel caches h1 in matmul_dtype
    h = jax.nn.relu(bn(h, params["g1"], params["b1"]))
    h = jax.lax.conv_general_dilated(
        q(h), q(params["w2_hwio"]), (1, 1), 'SAME',
        dimension_numbers=('NHWC', 'HWIO', 'NHWC'), precision=hi)
    h = q(h)  # the kernel stores h2 in matmul_dtype
    h = jax.nn.relu(bn(h, params["g2"], params["b2"]))
    h = jnp.einsum('nhwc,co->nhwo', q(h), q(params["w3"]), precision=hi)
    h = bn(h, params["g3"], params["b3"])
    return jax.nn.relu(h + x_nhwc)


if __name__ == "__main__":
    # Bottleneck(inplanes=16, planes=4) defaults -> width=4, out channels=16,
    # stride=1, downsample=None, so the identity add is valid.
    inplanes, planes, expansion = 16, 4, 4
    base_width, groups = 64, 1
    width = int(planes * (base_width / 64.0)) * groups   # 4
    cout = planes * expansion                            # 16 == inplanes
    N, H, W = 2, 16, 16

    key = jax.random.PRNGKey(0)
    keys = jax.random.split(key, 10)
    x = jax.random.normal(keys[0], (N, H, W, inplanes), jnp.float32)

    params = {
        # conv1: PyTorch weight (width, inplanes, 1, 1) -> (inplanes, width)
        "w1": 0.3 * jax.random.normal(keys[1], (inplanes, width), jnp.float32),
        "g1": 1.0 + 0.1 * jax.random.normal(keys[2], (1, width), jnp.float32),
        "b1": 0.1 * jax.random.normal(keys[3], (1, width), jnp.float32),
        # conv2: PyTorch weight (width, width, 3, 3) -> HWIO (3, 3, width, width)
        "w2_hwio": 0.2 * jax.random.normal(keys[4], (3, 3, width, width), jnp.float32),
        "g2": 1.0 + 0.1 * jax.random.normal(keys[5], (1, width), jnp.float32),
        "b2": 0.1 * jax.random.normal(keys[6], (1, width), jnp.float32),
        # conv3: PyTorch weight (cout, width, 1, 1) -> (width, cout)
        "w3": 0.3 * jax.random.normal(keys[7], (width, cout), jnp.float32),
        "g3": 1.0 + 0.1 * jax.random.normal(keys[8], (1, cout), jnp.float32),
        "b3": 0.1 * jax.random.normal(keys[9], (1, cout), jnp.float32),
    }

    fwd = jax.jit(bottleneck_forward,
                  static_argnames=("matmul_dtype", "row_tile_target"))

    # Small row tile at toy shape so the multi-step pipelined grid path is
    # exercised; the generation-aware default (512-1024) is used at real sizes.
    tile = 128

    # 1) fp32-MXU path: tight correctness check against the fp32 reference.
    out_f32 = jax.block_until_ready(
        fwd(x, params, matmul_dtype=jnp.float32, row_tile_target=tile))
    assert out_f32.shape == (N, H, W, cout)
    ref_f32 = bottleneck_reference(x, params, jnp.float32)
    err = float(jnp.max(jnp.abs(out_f32 - ref_f32)))
    assert err < 5e-3, f"fp32 path mismatch vs reference: max_err={err}"

    # 2) bf16-MXU path (perf default): compare against a reference with the
    #    same operand/cache rounding policy (residual differences come from
    #    order-dependent f32 accumulation), plus a coarse sanity bound vs the
    #    strict fp32 reference.
    out_bf16 = jax.block_until_ready(
        fwd(x, params, matmul_dtype=jnp.bfloat16, row_tile_target=tile))
    ref_bf16 = bottleneck_reference(x, params, jnp.bfloat16)
    err_m = float(jnp.max(jnp.abs(out_bf16 - ref_bf16)))
    assert err_m < 1e-1, f"bf16 path mismatch vs matched reference: {err_m}"
    err_s = float(jnp.max(jnp.abs(out_bf16 - ref_f32)))
    assert err_s < 5e-1, f"bf16 path drift vs fp32 reference too large: {err_s}"

    print("KERNEL_OK")
</pallas_src>

<mosaic_0001>
module attributes {stable_mosaic.version = 11 : i64} {
  func.func @_stage2_kernel(%arg0: i32, %arg1: memref<256x4xf32, #tpu.memory_space<vmem>>, %arg2: memref<1x4xf32, #tpu.memory_space<vmem>>, %arg3: memref<1x4xf32, #tpu.memory_space<vmem>>, %arg4: memref<3x12x4xf32, #tpu.memory_space<vmem>>, %arg5: memref<256x4xf32, #tpu.memory_space<vmem>>, %arg6: memref<1x2x4xf32, #tpu.memory_space<vmem>>, %arg7: memref<304x4xf32, #tpu.memory_space<vmem>>) attributes {dimension_semantics = [#tpu.dimension_semantics<parallel>], iteration_bounds = array<i64: 2>, scalar_prefetch = 0 : i64, scratch_operands = 1 : i64, tpu.core_type = #tpu.core_type<tc>, window_params = [{transform_indices = @transform_0, window_bounds = array<i64: 256, 4>}, {pipeline_mode = #tpu.pipeline_mode<synchronous>, transform_indices = @transform_1, window_bounds = array<i64: 1, 4>}, {pipeline_mode = #tpu.pipeline_mode<synchronous>, transform_indices = @transform_2, window_bounds = array<i64: 1, 4>}, {pipeline_mode = #tpu.pipeline_mode<synchronous>, transform_indices = @transform_3, window_bounds = array<i64: 3, 12, 4>}, {transform_indices = @transform_4, window_bounds = array<i64: 256, 4>}, {transform_indices = @transform_5, window_bounds = array<i64: 1, 2, 4>}]} {
    %c0 = arith.constant 0 : index
    %c0_0 = arith.constant 0 : index
    %0 = vector.load %arg1[%c0, %c0_0] : memref<256x4xf32, #tpu.memory_space<vmem>>, vector<256x4xf32>
    %c0_1 = arith.constant 0 : index
    %c0_2 = arith.constant 0 : index
    %1 = vector.load %arg2[%c0_1, %c0_2] : memref<1x4xf32, #tpu.memory_space<vmem>>, vector<1x4xf32>
    %2 = vector.broadcast %1 : vector<1x4xf32> to vector<256x4xf32>
    %3 = arith.mulf %0, %2 : vector<256x4xf32>
    %c0_3 = arith.constant 0 : index
    %c0_4 = arith.constant 0 : index
    %4 = vector.load %arg3[%c0_3, %c0_4] : memref<1x4xf32, #tpu.memory_space<vmem>>, vector<1x4xf32>
    %5 = vector.broadcast %4 : vector<1x4xf32> to vector<256x4xf32>
    %6 = arith.addf %3, %5 : vector<256x4xf32>
    %cst = arith.constant 0.000000e+00 : f32
    %7 = vector.broadcast %cst : f32 to vector<256x4xf32>
    %8 = arith.maximumf %6, %7 : vector<256x4xf32>
    %cst_5 = arith.constant 0.000000e+00 : f32
    %9 = vector.broadcast %cst_5 : f32 to vector<24x4xf32>
    %c0_6 = arith.constant 0 : index
    %c0_7 = arith.constant 0 : index
    %10 = vector.load %arg7[%c0_6, %c0_7] : memref<304x4xf32, #tpu.memory_space<vmem>>, vector<24x4xf32>
    tpu.vector_store %arg7[%c0_6, %c0_7], %9 {strides = array<i32>} : memref<304x4xf32, #tpu.memory_space<vmem>>, vector<24x4xf32>,
    %c280 = arith.constant 280 : index
    %c0_8 = arith.constant 0 : index
    %11 = vector.load %arg7[%c280, %c0_8] : memref<304x4xf32, #tpu.memory_space<vmem>>, vector<24x4xf32>
    tpu.vector_store %arg7[%c280, %c0_8], %9 {strides = array<i32>} : memref<304x4xf32, #tpu.memory_space<vmem>>, vector<24x4xf32>,
    %c24 = arith.constant 24 : index
    %c0_9 = arith.constant 0 : index
    %12 = vector.load %arg7[%c24, %c0_9] : memref<304x4xf32, #tpu.memory_space<vmem>>, vector<256x4xf32>
    tpu.vector_store %arg7[%c24, %c0_9], %8 {strides = array<i32>} : memref<304x4xf32, #tpu.memory_space<vmem>>, vector<256x4xf32>,
    %13 = tpu.iota {dimensions = array<i32: 0>} : vector<256x1xi32>
    %c16_i32 = arith.constant 16 : i32
    %c0_i32 = arith.constant 0 : i32
    %14 = arith.cmpi eq, %c16_i32, %c0_i32 : i32
    %c1_i32 = arith.constant 1 : i32
    %15 = arith.select %14, %c1_i32, %c16_i32 : i32
    %16 = vector.broadcast %15 : i32 to vector<256x1xi32>
    %17 = arith.remsi %13, %16 : vector<256x1xi32>
    %c0_i32_10 = arith.constant 0 : i32
    %18 = vector.broadcast %c0_i32_10 : i32 to vector<256x1xi32>
    %19 = arith.cmpi ne, %17, %18 : vector<256x1xi32>
    %c0_i32_11 = arith.constant 0 : i32
    %20 = vector.broadcast %c0_i32_11 : i32 to vector<256x1xi32>
    %21 = arith.cmpi slt, %17, %20 : vector<256x1xi32>
    %c0_i32_12 = arith.constant 0 : i32
    %22 = arith.cmpi slt, %15, %c0_i32_12 : i32
    %23 = vector.broadcast %22 : i1 to vector<256x1xi1>
    %24 = vector.broadcast %23 : vector<256x1xi1> to vector<256x1xi1>
    %25 = arith.xori %21, %24 : vector<256x1xi1>
    %26 = arith.andi %25, %19 : vector<256x1xi1>
    %27 = vector.broadcast %15 : i32 to vector<256x1xi32>
    %28 = arith.addi %17, %27 : vector<256x1xi32>
    %29 = arith.select %26, %28, %17 : vector<256x1xi1>, vector<256x1xi32>
    %c1_i32_13 = arith.constant 1 : i32
    %30 = vector.broadcast %c1_i32_13 : i32 to vector<256x1xi32>
    %31 = arith.cmpi sge, %29, %30 : vector<256x1xi32>
    %32 = arith.extui %31 : vector<256x1xi1> to vector<256x1xi32>
    %33 = arith.sitofp %32 : vector<256x1xi32> to vector<256x1xf32>
    %c15_i32 = arith.constant 15 : i32
    %34 = vector.broadcast %c15_i32 : i32 to vector<256x1xi32>
    %35 = arith.cmpi slt, %29, %34 : vector<256x1xi32>
    %36 = arith.extui %35 : vector<256x1xi1> to vector<256x1xi32>
    %37 = arith.sitofp %36 : vector<256x1xi32> to vector<256x1xf32>
    %cst_14 = arith.constant 0.000000e+00 : f32
    %38 = vector.broadcast %cst_14 : f32 to vector<256x4xf32>
    %c7 = arith.constant 7 : index
    %c0_15 = arith.constant 0 : index
    %39 = vector.load %arg7[%c7, %c0_15] : memref<304x4xf32, #tpu.memory_space<vmem>>, vector<256x4xf32>
    %c23 = arith.constant 23 : index
    %c0_16 = arith.constant 0 : index
    %40 = vector.load %arg7[%c23, %c0_16] : memref<304x4xf32, #tpu.memory_space<vmem>>, vector<256x4xf32>
    %c39 = arith.constant 39 : index
    %c0_17 = arith.constant 0 : index
    %41 = vector.load %arg7[%c39, %c0_17] : memref<304x4xf32, #tpu.memory_space<vmem>>, vector<256x4xf32>
    %42 = tpu.concatenate %39, %40, %41 in 1 : vector<256x4xf32>, vector<256x4xf32>, vector<256x4xf32> -> vector<256x12xf32>
    %43 = vector.broadcast %33 : vector<256x1xf32> to vector<256x12xf32>
    %44 = arith.mulf %42, %43 : vector<256x12xf32>
    %c0_18 = arith.constant 0 : index
    %c0_19 = arith.constant 0 : index
    %c0_20 = arith.constant 0 : index
    %45 = vector.load %arg4[%c0_18, %c0_19, %c0_20] : memref<3x12x4xf32, #tpu.memory_space<vmem>>, vector<1x12x4xf32>
    %46 = vector.shape_cast %45 : vector<1x12x4xf32> to vector<12x4xf32>
    %cst_21 = arith.constant dense<0.000000e+00> : vector<256x4xf32>
    %47 = tpu.matmul %44, %46, %cst_21 {dimension_numbers = #tpu.dot_dimension_numbers<[1], [0], [0], [1], [0, 0, 1, 1], [], []>} : vector<256x12xf32>, vector<12x4xf32>, vector<256x4xf32> -> vector<256x4xf32>
    %48 = arith.addf %38, %47 : vector<256x4xf32>
    %c8 = arith.constant 8 : index
    %c0_22 = arith.constant 0 : index
    %49 = vector.load %arg7[%c8, %c0_22] : memref<304x4xf32, #tpu.memory_space<vmem>>, vector<256x4xf32>
    %c24_23 = arith.constant 24 : index
    %c0_24 = arith.constant 0 : index
    %50 = vector.load %arg7[%c24_23, %c0_24] : memref<304x4xf32, #tpu.memory_space<vmem>>, vector<256x4xf32>
    %c40 = arith.constant 40 : index
    %c0_25 = arith.constant 0 : index
    %51 = vector.load %arg7[%c40, %c0_25] : memref<304x4xf32, #tpu.memory_space<vmem>>, vector<256x4xf32>
    %52 = tpu.concatenate %49, %50, %51 in 1 : vector<256x4xf32>, vector<256x4xf32>, vector<256x4xf32> -> vector<256x12xf32>
    %c1 = arith.constant 1 : index
    %c0_26 = arith.constant 0 : index
    %c0_27 = arith.constant 0 : index
    %53 = vector.load %arg4[%c1, %c0_26, %c0_27] : memref<3x12x4xf32, #tpu.memory_space<vmem>>, vector<1x12x4xf32>
    %54 = vector.shape_cast %53 : vector<1x12x4xf32> to vector<12x4xf32>
    %cst_28 = arith.constant dense<0.000000e+00> : vector<256x4xf32>
    %55 = tpu.matmul %52, %54, %cst_28 {dimension_numbers = #tpu.dot_dimension_numbers<[1], [0], [0], [1], [0, 0, 1, 1], [], []>} : vector<256x12xf32>, vector<12x4xf32>, vector<256x4xf32> -> vector<256x4xf32>
    %56 = arith.addf %48, %55 : vector<256x4xf32>
    %c9 = arith.constant 9 : index
    %c0_29 = arith.constant 0 : index
    %57 = vector.load %arg7[%c9, %c0_29] : memref<304x4xf32, #tpu.memory_space<vmem>>, vector<256x4xf32>
    %c25 = arith.constant 25 : index
    %c0_30 = arith.constant 0 : index
    %58 = vector.load %arg7[%c25, %c0_30] : memref<304x4xf32, #tpu.memory_space<vmem>>, vector<256x4xf32>
    %c41 = arith.constant 41 : index
    %c0_31 = arith.constant 0 : index
    %59 = vector.load %arg7[%c41, %c0_31] : memref<304x4xf32, #tpu.memory_space<vmem>>, vector<256x4xf32>
    %60 = tpu.concatenate %57, %58, %59 in 1 : vector<256x4xf32>, vector<256x4xf32>, vector<256x4xf32> -> vector<256x12xf32>
    %61 = vector.broadcast %37 : vector<256x1xf32> to vector<256x12xf32>
    %62 = arith.mulf %60, %61 : vector<256x12xf32>
    %c2 = arith.constant 2 : index
    %c0_32 = arith.constant 0 : index
    %c0_33 = arith.constant 0 : index
    %63 = vector.load %arg4[%c2, %c0_32, %c0_33] : memref<3x12x4xf32, #tpu.memory_space<vmem>>, vector<1x12x4xf32>
    %64 = vector.shape_cast %63 : vector<1x12x4xf32> to vector<12x4xf32>
    %cst_34 = arith.constant dense<0.000000e+00> : vector<256x4xf32>
    %65 = tpu.matmul %62, %64, %cst_34 {dimension_numbers = #tpu.dot_dimension_numbers<[1], [0], [0], [1], [0, 0, 1, 1], [], []>} : vector<256x12xf32>, vector<12x4xf32>, vector<256x4xf32> -> vector<256x4xf32>
    %66 = arith.addf %56, %65 : vector<256x4xf32>
    %c0_35 = arith.constant 0 : index
    %c0_36 = arith.constant 0 : index
    %67 = vector.load %arg5[%c0_35, %c0_36] : memref<256x4xf32, #tpu.memory_space<vmem>>, vector<256x4xf32>
    tpu.vector_store %arg5[%c0_35, %c0_36], %66 {strides = array<i32>} : memref<256x4xf32, #tpu.memory_space<vmem>>, vector<256x4xf32>,
    %cst_37 = arith.constant dense<0.000000e+00> : vector<4xf32>
    %68 = vector.multi_reduction <add>, %66, %cst_37 [0] : vector<256x4xf32> to vector<4xf32>
    %69 = vector.shape_cast %68 : vector<4xf32> to vector<1x4xf32>
    %70 = arith.mulf %66, %66 : vector<256x4xf32>
    %cst_38 = arith.constant dense<0.000000e+00> : vector<4xf32>
    %71 = vector.multi_reduction <add>, %70, %cst_38 [0] : vector<256x4xf32> to vector<4xf32>
    %72 = vector.shape_cast %71 : vector<4xf32> to vector<1x4xf32>
    %73 = tpu.concatenate %69, %72 in 0 : vector<1x4xf32>, vector<1x4xf32> -> vector<2x4xf32>
    %74 = vector.shape_cast %73 : vector<2x4xf32> to vector<1x2x4xf32>
    %c0_39 = arith.constant 0 : index
    %c0_40 = arith.constant 0 : index
    %c0_41 = arith.constant 0 : index
    %75 = vector.load %arg6[%c0_39, %c0_40, %c0_41] : memref<1x2x4xf32, #tpu.memory_space<vmem>>, vector<1x2x4xf32>
    tpu.vector_store %arg6[%c0_39, %c0_40, %c0_41], %74 {strides = array<i32>} : memref<1x2x4xf32, #tpu.memory_space<vmem>>, vector<1x2x4xf32>,
    return
  }
  func.func @transform_0(%arg0: i32) -> (i32, i32) {
    %c0_i32 = arith.constant 0 : i32
    %c0_i32_0 = arith.constant 0 : i32
    return %arg0, %c0_i32 : i32, i32
  }
  func.func @transform_1(%arg0: i32) -> (i32, i32) {
    %c0_i32 = arith.constant 0 : i32
    %c0_i32_0 = arith.constant 0 : i32
    %c0_i32_1 = arith.constant 0 : i32
    return %c0_i32, %c0_i32_0 : i32, i32
  }
  func.func @transform_2(%arg0: i32) -> (i32, i32) {
    %c0_i32 = arith.constant 0 : i32
    %c0_i32_0 = arith.constant 0 : i32
    %c0_i32_1 = arith.constant 0 : i32
    return %c0_i32, %c0_i32_0 : i32, i32
  }
  func.func @transform_3(%arg0: i32) -> (i32, i32, i32) {
    %c0_i32 = arith.constant 0 : i32
    %c0_i32_0 = arith.constant 0 : i32
    %c0_i32_1 = arith.constant 0 : i32
    %c0_i32_2 = arith.constant 0 : i32
    return %c0_i32, %c0_i32_0, %c0_i32_1 : i32, i32, i32
  }
  func.func @transform_4(%arg0: i32) -> (i32, i32) {
    %c0_i32 = arith.constant 0 : i32
    %c0_i32_0 = arith.constant 0 : i32
    return %arg0, %c0_i32 : i32, i32
  }
  func.func @transform_5(%arg0: i32) -> (i32, i32, i32) {
    %c0_i32 = arith.constant 0 : i32
    %c0_i32_0 = arith.constant 0 : i32
    %c0_i32_1 = arith.constant 0 : i32
    return %arg0, %c0_i32, %c0_i32_0 : i32, i32, i32
  }
}

module attributes {stable_mosaic.version = 11 : i64} {
  func.func @_conv1_kernel(%arg0: i32, %arg1: memref<128x16xf32, #tpu.memory_space<vmem>>, %arg2: memref<16x4xf32, #tpu.memory_space<vmem>>, %arg3: memref<128x4xf32, #tpu.memory_space<vmem>>, %arg4: memref<1x2x4xf32, #tpu.memory_space<vmem>>) attributes {dimension_semantics = [#tpu.dimension_semantics<parallel>], iteration_bounds = array<i64: 4>, scalar_prefetch = 0 : i64, scratch_operands = 0 : i64, tpu.core_type = #tpu.core_type<tc>, window_params = [{transform_indices = @transform_0, window_bounds = array<i64: 128, 16>}, {pipeline_mode = #tpu.pipeline_mode<synchronous>, transform_indices = @transform_1, window_bounds = array<i64: 16, 4>}, {transform_indices = @transform_2, window_bounds = array<i64: 128, 4>}, {transform_indices = @transform_3, window_bounds = array<i64: 1, 2, 4>}]} {
    %c0 = arith.constant 0 : index
    %c0_0 = arith.constant 0 : index
    %0 = vector.load %arg1[%c0, %c0_0] : memref<128x16xf32, #tpu.memory_space<vmem>>, vector<128x16xf32>
    %c0_1 = arith.constant 0 : index
    %c0_2 = arith.constant 0 : index
    %1 = vector.load %arg2[%c0_1, %c0_2] : memref<16x4xf32, #tpu.memory_space<vmem>>, vector<16x4xf32>
    %cst = arith.constant dense<0.000000e+00> : vector<128x4xf32>
    %2 = tpu.matmul %0, %1, %cst {dimension_numbers = #tpu.dot_dimension_numbers<[1], [0], [0], [1], [0, 0, 1, 1], [], []>} : vector<128x16xf32>, vector<16x4xf32>, vector<128x4xf32> -> vector<128x4xf32>
    %c0_3 = arith.constant 0 : index
    %c0_4 = arith.constant 0 : index
    %3 = vector.load %arg3[%c0_3, %c0_4] : memref<128x4xf32, #tpu.memory_space<vmem>>, vector<128x4xf32>
    tpu.vector_store %arg3[%c0_3, %c0_4], %2 {strides = array<i32>} : memref<128x4xf32, #tpu.memory_space<vmem>>, vector<128x4xf32>,
    %cst_5 = arith.constant dense<0.000000e+00> : vector<4xf32>
    %4 = vector.multi_reduction <add>, %2, %cst_5 [0] : vector<128x4xf32> to vector<4xf32>
    %5 = vector.shape_cast %4 : vector<4xf32> to vector<1x4xf32>
    %6 = arith.mulf %2, %2 : vector<128x4xf32>
    %cst_6 = arith.constant dense<0.000000e+00> : vector<4xf32>
    %7 = vector.multi_reduction <add>, %6, %cst_6 [0] : vector<128x4xf32> to vector<4xf32>
    %8 = vector.shape_cast %7 : vector<4xf32> to vector<1x4xf32>
    %9 = tpu.concatenate %5, %8 in 0 : vector<1x4xf32>, vector<1x4xf32> -> vector<2x4xf32>
    %10 = vector.shape_cast %9 : vector<2x4xf32> to vector<1x2x4xf32>
    %c0_7 = arith.constant 0 : index
    %c0_8 = arith.constant 0 : index
    %c0_9 = arith.constant 0 : index
    %11 = vector.load %arg4[%c0_7, %c0_8, %c0_9] : memref<1x2x4xf32, #tpu.memory_space<vmem>>, vector<1x2x4xf32>
    tpu.vector_store %arg4[%c0_7, %c0_8, %c0_9], %10 {strides = array<i32>} : memref<1x2x4xf32, #tpu.memory_space<vmem>>, vector<1x2x4xf32>,
    return
  }
  func.func @transform_0(%arg0: i32) -> (i32, i32) {
    %c0_i32 = arith.constant 0 : i32
    %c0_i32_0 = arith.constant 0 : i32
    return %arg0, %c0_i32 : i32, i32
  }
  func.func @transform_1(%arg0: i32) -> (i32, i32) {
    %c0_i32 = arith.constant 0 : i32
    %c0_i32_0 = arith.constant 0 : i32
    %c0_i32_1 = arith.constant 0 : i32
    return %c0_i32, %c0_i32_0 : i32, i32
  }
  func.func @transform_2(%arg0: i32) -> (i32, i32) {
    %c0_i32 = arith.constant 0 : i32
    %c0_i32_0 = arith.constant 0 : i32
    return %arg0, %c0_i32 : i32, i32
  }
  func.func @transform_3(%arg0: i32) -> (i32, i32, i32) {
    %c0_i32 = arith.constant 0 : i32
    %c0_i32_0 = arith.constant 0 : i32
    %c0_i32_1 = arith.constant 0 : i32
    return %arg0, %c0_i32, %c0_i32_0 : i32, i32, i32
  }
}

module attributes {stable_mosaic.version = 11 : i64} {
  func.func @_stats3_kernel(%arg0: i32, %arg1: memref<128x4xf32, #tpu.memory_space<vmem>>, %arg2: memref<1x4xf32, #tpu.memory_space<vmem>>, %arg3: memref<1x4xf32, #tpu.memory_space<vmem>>, %arg4: memref<4x16xf32, #tpu.memory_space<vmem>>, %arg5: memref<1x2x16xf32, #tpu.memory_space<vmem>>) attributes {dimension_semantics = [#tpu.dimension_semantics<parallel>], iteration_bounds = array<i64: 4>, scalar_prefetch = 0 : i64, scratch_operands = 0 : i64, tpu.core_type = #tpu.core_type<tc>, window_params = [{transform_indices = @transform_0, window_bounds = array<i64: 128, 4>}, {pipeline_mode = #tpu.pipeline_mode<synchronous>, transform_indices = @transform_1, window_bounds = array<i64: 1, 4>}, {pipeline_mode = #tpu.pipeline_mode<synchronous>, transform_indices = @transform_2, window_bounds = array<i64: 1, 4>}, {pipeline_mode = #tpu.pipeline_mode<synchronous>, transform_indices = @transform_3, window_bounds = array<i64: 4, 16>}, {transform_indices = @transform_4, window_bounds = array<i64: 1, 2, 16>}]} {
    %c0 = arith.constant 0 : index
    %c0_0 = arith.constant 0 : index
    %0 = vector.load %arg1[%c0, %c0_0] : memref<128x4xf32, #tpu.memory_space<vmem>>, vector<128x4xf32>
    %c0_1 = arith.constant 0 : index
    %c0_2 = arith.constant 0 : index
    %1 = vector.load %arg2[%c0_1, %c0_2] : memref<1x4xf32, #tpu.memory_space<vmem>>, vector<1x4xf32>
    %2 = vector.broadcast %1 : vector<1x4xf32> to vector<128x4xf32>
    %3 = arith.mulf %0, %2 : vector<128x4xf32>
    %c0_3 = arith.constant 0 : index
    %c0_4 = arith.constant 0 : index
    %4 = vector.load %arg3[%c0_3, %c0_4] : memref<1x4xf32, #tpu.memory_space<vmem>>, vector<1x4xf32>
    %5 = vector.broadcast %4 : vector<1x4xf32> to vector<128x4xf32>
    %6 = arith.addf %3, %5 : vector<128x4xf32>
    %cst = arith.constant 0.000000e+00 : f32
    %7 = vector.broadcast %cst : f32 to vector<128x4xf32>
    %8 = arith.maximumf %6, %7 : vector<128x4xf32>
    %c0_5 = arith.constant 0 : index
    %c0_6 = arith.constant 0 : index
    %9 = vector.load %arg4[%c0_5, %c0_6] : memref<4x16xf32, #tpu.memory_space<vmem>>, vector<4x16xf32>
    %cst_7 = arith.constant dense<0.000000e+00> : vector<128x16xf32>
    %10 = tpu.matmul %8, %9, %cst_7 {dimension_numbers = #tpu.dot_dimension_numbers<[1], [0], [0], [1], [0, 0, 1, 1], [], []>} : vector<128x4xf32>, vector<4x16xf32>, vector<128x16xf32> -> vector<128x16xf32>
    %cst_8 = arith.constant dense<0.000000e+00> : vector<16xf32>
    %11 = vector.multi_reduction <add>, %10, %cst_8 [0] : vector<128x16xf32> to vector<16xf32>
    %12 = vector.shape_cast %11 : vector<16xf32> to vector<1x16xf32>
    %13 = arith.mulf %10, %10 : vector<128x16xf32>
    %cst_9 = arith.constant dense<0.000000e+00> : vector<16xf32>
    %14 = vector.multi_reduction <add>, %13, %cst_9 [0] : vector<128x16xf32> to vector<16xf32>
    %15 = vector.shape_cast %14 : vector<16xf32> to vector<1x16xf32>
    %16 = tpu.concatenate %12, %15 in 0 : vector<1x16xf32>, vector<1x16xf32> -> vector<2x16xf32>
    %17 = vector.shape_cast %16 : vector<2x16xf32> to vector<1x2x16xf32>
    %c0_10 = arith.constant 0 : index
    %c0_11 = arith.constant 0 : index
    %c0_12 = arith.constant 0 : index
    %18 = vector.load %arg5[%c0_10, %c0_11, %c0_12] : memref<1x2x16xf32, #tpu.memory_space<vmem>>, vector<1x2x16xf32>
    tpu.vector_store %arg5[%c0_10, %c0_11, %c0_12], %17 {strides = array<i32>} : memref<1x2x16xf32, #tpu.memory_space<vmem>>, vector<1x2x16xf32>,
    return
  }
  func.func @transform_0(%arg0: i32) -> (i32, i32) {
    %c0_i32 = arith.constant 0 : i32
    %c0_i32_0 = arith.constant 0 : i32
    return %arg0, %c0_i32 : i32, i32
  }
  func.func @transform_1(%arg0: i32) -> (i32, i32) {
    %c0_i32 = arith.constant 0 : i32
    %c0_i32_0 = arith.constant 0 : i32
    %c0_i32_1 = arith.constant 0 : i32
    return %c0_i32, %c0_i32_0 : i32, i32
  }
  func.func @transform_2(%arg0: i32) -> (i32, i32) {
    %c0_i32 = arith.constant 0 : i32
    %c0_i32_0 = arith.constant 0 : i32
    %c0_i32_1 = arith.constant 0 : i32
    return %c0_i32, %c0_i32_0 : i32, i32
  }
  func.func @transform_3(%arg0: i32) -> (i32, i32) {
    %c0_i32 = arith.constant 0 : i32
    %c0_i32_0 = arith.constant 0 : i32
    %c0_i32_1 = arith.constant 0 : i32
    return %c0_i32, %c0_i32_0 : i32, i32
  }
  func.func @transform_4(%arg0: i32) -> (i32, i32, i32) {
    %c0_i32 = arith.constant 0 : i32
    %c0_i32_0 = arith.constant 0 : i32
    %c0_i32_1 = arith.constant 0 : i32
    return %arg0, %c0_i32, %c0_i32_0 : i32, i32, i32
  }
}

module attributes {stable_mosaic.version = 11 : i64} {
  func.func @_apply_kernel(%arg0: i32, %arg1: memref<128x4xf32, #tpu.memory_space<vmem>>, %arg2: memref<128x16xf32, #tpu.memory_space<vmem>>, %arg3: memref<1x4xf32, #tpu.memory_space<vmem>>, %arg4: memref<1x4xf32, #tpu.memory_space<vmem>>, %arg5: memref<4x16xf32, #tpu.memory_space<vmem>>, %arg6: memref<1x16xf32, #tpu.memory_space<vmem>>, %arg7: memref<1x16xf32, #tpu.memory_space<vmem>>, %arg8: memref<128x16xf32, #tpu.memory_space<vmem>>) attributes {dimension_semantics = [#tpu.dimension_semantics<parallel>], iteration_bounds = array<i64: 4>, scalar_prefetch = 0 : i64, scratch_operands = 0 : i64, tpu.core_type = #tpu.core_type<tc>, window_params = [{transform_indices = @transform_0, window_bounds = array<i64: 128, 4>}, {transform_indices = @transform_1, window_bounds = array<i64: 128, 16>}, {pipeline_mode = #tpu.pipeline_mode<synchronous>, transform_indices = @transform_2, window_bounds = array<i64: 1, 4>}, {pipeline_mode = #tpu.pipeline_mode<synchronous>, transform_indices = @transform_3, window_bounds = array<i64: 1, 4>}, {pipeline_mode = #tpu.pipeline_mode<synchronous>, transform_indices = @transform_4, window_bounds = array<i64: 4, 16>}, {pipeline_mode = #tpu.pipeline_mode<synchronous>, transform_indices = @transform_5, window_bounds = array<i64: 1, 16>}, {pipeline_mode = #tpu.pipeline_mode<synchronous>, transform_indices = @transform_6, window_bounds = array<i64: 1, 16>}, {transform_indices = @transform_7, window_bounds = array<i64: 128, 16>}]} {
    %c0 = arith.constant 0 : index
    %c0_0 = arith.constant 0 : index
    %0 = vector.load %arg1[%c0, %c0_0] : memref<128x4xf32, #tpu.memory_space<vmem>>, vector<128x4xf32>
    %c0_1 = arith.constant 0 : index
    %c0_2 = arith.constant 0 : index
    %1 = vector.load %arg3[%c0_1, %c0_2] : memref<1x4xf32, #tpu.memory_space<vmem>>, vector<1x4xf32>
    %2 = vector.broadcast %1 : vector<1x4xf32> to vector<128x4xf32>
    %3 = arith.mulf %0, %2 : vector<128x4xf32>
    %c0_3 = arith.constant 0 : index
    %c0_4 = arith.constant 0 : index
    %4 = vector.load %arg4[%c0_3, %c0_4] : memref<1x4xf32, #tpu.memory_space<vmem>>, vector<1x4xf32>
    %5 = vector.broadcast %4 : vector<1x4xf32> to vector<128x4xf32>
    %6 = arith.addf %3, %5 : vector<128x4xf32>
    %cst = arith.constant 0.000000e+00 : f32
    %7 = vector.broadcast %cst : f32 to vector<128x4xf32>
    %8 = arith.maximumf %6, %7 : vector<128x4xf32>
    %c0_5 = arith.constant 0 : index
    %c0_6 = arith.constant 0 : index
    %9 = vector.load %arg5[%c0_5, %c0_6] : memref<4x16xf32, #tpu.memory_space<vmem>>, vector<4x16xf32>
    %cst_7 = arith.constant dense<0.000000e+00> : vector<128x16xf32>
    %10 = tpu.matmul %8, %9, %cst_7 {dimension_numbers = #tpu.dot_dimension_numbers<[1], [0], [0], [1], [0, 0, 1, 1], [], []>} : vector<128x4xf32>, vector<4x16xf32>, vector<128x16xf32> -> vector<128x16xf32>
    %c0_8 = arith.constant 0 : index
    %c0_9 = arith.constant 0 : index
    %11 = vector.load %arg6[%c0_8, %c0_9] : memref<1x16xf32, #tpu.memory_space<vmem>>, vector<1x16xf32>
    %12 = vector.broadcast %11 : vector<1x16xf32> to vector<128x16xf32>
    %13 = arith.mulf %10, %12 : vector<128x16xf32>
    %c0_10 = arith.constant 0 : index
    %c0_11 = arith.constant 0 : index
    %14 = vector.load %arg7[%c0_10, %c0_11] : memref<1x16xf32, #tpu.memory_space<vmem>>, vector<1x16xf32>
    %15 = vector.broadcast %14 : vector<1x16xf32> to vector<128x16xf32>
    %16 = arith.addf %13, %15 : vector<128x16xf32>
    %c0_12 = arith.constant 0 : index
    %c0_13 = arith.constant 0 : index
    %17 = vector.load %arg2[%c0_12, %c0_13] : memref<128x16xf32, #tpu.memory_space<vmem>>, vector<128x16xf32>
    %18 = arith.addf %16, %17 : vector<128x16xf32>
    %cst_14 = arith.constant 0.000000e+00 : f32
    %19 = vector.broadcast %cst_14 : f32 to vector<128x16xf32>
    %20 = arith.maximumf %18, %19 : vector<128x16xf32>
    %c0_15 = arith.constant 0 : index
    %c0_16 = arith.constant 0 : index
    %21 = vector.load %arg8[%c0_15, %c0_16] : memref<128x16xf32, #tpu.memory_space<vmem>>, vector<128x16xf32>
    tpu.vector_store %arg8[%c0_15, %c0_16], %20 {strides = array<i32>} : memref<128x16xf32, #tpu.memory_space<vmem>>, vector<128x16xf32>,
    return
  }
  func.func @transform_0(%arg0: i32) -> (i32, i32) {
    %c0_i32 = arith.constant 0 : i32
    %c0_i32_0 = arith.constant 0 : i32
    return %arg0, %c0_i32 : i32, i32
  }
  func.func @transform_1(%arg0: i32) -> (i32, i32) {
    %c0_i32 = arith.constant 0 : i32
    %c0_i32_0 = arith.constant 0 : i32
    return %arg0, %c0_i32 : i32, i32
  }
  func.func @transform_2(%arg0: i32) -> (i32, i32) {
    %c0_i32 = arith.constant 0 : i32
    %c0_i32_0 = arith.constant 0 : i32
    %c0_i32_1 = arith.constant 0 : i32
    return %c0_i32, %c0_i32_0 : i32, i32
  }
  func.func @transform_3(%arg0: i32) -> (i32, i32) {
    %c0_i32 = arith.constant 0 : i32
    %c0_i32_0 = arith.constant 0 : i32
    %c0_i32_1 = arith.constant 0 : i32
    return %c0_i32, %c0_i32_0 : i32, i32
  }
  func.func @transform_4(%arg0: i32) -> (i32, i32) {
    %c0_i32 = arith.constant 0 : i32
    %c0_i32_0 = arith.constant 0 : i32
    %c0_i32_1 = arith.constant 0 : i32
    return %c0_i32, %c0_i32_0 : i32, i32
  }
  func.func @transform_5(%arg0: i32) -> (i32, i32) {
    %c0_i32 = arith.constant 0 : i32
    %c0_i32_0 = arith.constant 0 : i32
    %c0_i32_1 = arith.constant 0 : i32
    return %c0_i32, %c0_i32_0 : i32, i32
  }
  func.func @transform_6(%arg0: i32) -> (i32, i32) {
    %c0_i32 = arith.constant 0 : i32
    %c0_i32_0 = arith.constant 0 : i32
    %c0_i32_1 = arith.constant 0 : i32
    return %c0_i32, %c0_i32_0 : i32, i32
  }
  func.func @transform_7(%arg0: i32) -> (i32, i32) {
    %c0_i32 = arith.constant 0 : i32
    %c0_i32_0 = arith.constant 0 : i32
    return %arg0, %c0_i32 : i32, i32
  }
}

</mosaic_0001>

<llo_original>
// kernel: bottleneck_forward.6
$region0: #{bottleneck_forward.6}
  #allocation0 [shape = 'u32[]', space=smem, size = 0x4, offset = 0x4, fixed_abs, tag = 'smem constant byte address 0x4 - core index']
  #allocation1 [shape = 'u32[144,128]{1,0:T(1,128)}', space=vmem, size = 0x12000, scoped, tag = 'internal scratch']
  %s0 = inlined_call_operand.vmem [shape: f32[512,4], index: 0, kind: input, shape index: {}]
  %s1 = inlined_call_operand.vmem [shape: f32[1,4], index: 1, kind: input, shape index: {}]
  %s2 = inlined_call_operand.vmem [shape: f32[1,4], index: 2, kind: input, shape index: {}]
  %s3 = inlined_call_operand.vmem [shape: f32[4,16], index: 3, kind: input, shape index: {}]
  %s4 = inlined_call_operand.vmem [shape: f32[4,2,16], index: 4, kind: output, shape index: {}]
  %s5 = sld [smem:[#allocation0]]
  $region49: #{bottleneck_forward.6} parent=0
    _
  %s7 = ssub.s32 1, %s5
  %s8 = scalar_select 0, %s7, %s5
  loop: start=0, step=1, limit=6
  $region2: #{bottleneck_forward.6} parent=0 // loop_pre_header
    _
  $region3: #{bottleneck_forward.6} parent=0 // loop_header
    %s10 = sphi 0, %s14
    %p11 = scmp.ge.s32.totalorder %s10, 6
    %s20 = sphi 0, %s22
    %s23 = sphi 0, %s20
    %s24 = sphi 0, %s23
    %s40 = sphi 0, %s24
    %s44 = sphi 0, %s44
    %s46 = sphi 0, %s44
    %s47 = sphi 0, %s46
    %s61 = sphi 0, %s47
    %s65 = sphi 0, %s65
    %s67 = sphi 0, %s65
    %s68 = sphi 0, %s67
    %s82 = sphi 0, %s68
    %s86 = sphi 0, %s86
    %s88 = sphi 0, %s86
    %s89 = sphi 0, %s88
    %s103 = sphi 0, %s89
    %s109 = sphi 0, %s111
    %s112 = sphi 0, %s109
    %s113 = sphi 0, %s112
    %s129 = sphi 0, %s113
  $region4: #{bottleneck_forward.6} parent=0 // loop_header_branch
    %13 = sbr.rel (%p11) target = $region8
  $region5: #{bottleneck_forward.6} parent=0 // loop_body
    %s15 = ssub.s32 %s10, 1
    %s16 = ssub.s32 %s10, 2
    %s17 = sadd.s32 %s10, 1
    %s18 = ssub.s32 %s10, %s17
    %p19 = scmp.eq.s32.totalorder %s18, 0
    %s21 = sadd.s32 %s20, 1
    %s22 = scalar_select %p19, %s20, %s21
    %p25 = pneg %p19
    %p26 = scmp.eq.s32.totalorder %s10, 3
    %p27 = por %p25, %p26
    %p28 = scmp.ne.s32.totalorder %s20, %s23
    %p29 = scmp.eq.s32.totalorder %s10, 0
    %p30 = por %p28, %p29
    %p31 = scmp.ne.s32.totalorder %s20, %s23
    %p32 = scmp.eq.s32.totalorder %s15, 3
    %p33 = por %p31, %p32
    %p34 = scmp.ne.s32.totalorder %s23, %s24
    %p35 = scmp.eq.s32.totalorder %s15, 0
    %p36 = por %p34, %p35
    %p37 = scmp.ne.s32.totalorder %s23, %s24
    %p38 = scmp.eq.s32.totalorder %s16, 3
    %p39 = por %p37, %p38
    %p41 = scmp.ne.s32.totalorder %s24, %s40
    %p42 = scmp.eq.s32.totalorder %s16, 0
    %p43 = por %p41, %p42
    %s45 = sadd.s32 %s44, 1
    %p48 = scmp.eq.s32.totalorder %s10, 3
    %p49 = scmp.ne.s32.totalorder %s44, %s46
    %p50 = scmp.eq.s32.totalorder %s10, 0
    %p51 = por %p49, %p50
    %p52 = scmp.ne.s32.totalorder %s44, %s46
    %p53 = scmp.eq.s32.totalorder %s15, 3
    %p54 = por %p52, %p53
    %p55 = scmp.ne.s32.totalorder %s46, %s47
    %p56 = scmp.eq.s32.totalorder %s15, 0
    %p57 = por %p55, %p56
    %p58 = scmp.ne.s32.totalorder %s46, %s47
    %p59 = scmp.eq.s32.totalorder %s16, 3
    %p60 = por %p58, %p59
    %p62 = scmp.ne.s32.totalorder %s47, %s61
    %p63 = scmp.eq.s32.totalorder %s16, 0
    %p64 = por %p62, %p63
    %s66 = sadd.s32 %s65, 1
    %p69 = scmp.eq.s32.totalorder %s10, 3
    %p70 = scmp.ne.s32.totalorder %s65, %s67
    %p71 = scmp.eq.s32.totalorder %s10, 0
    %p72 = por %p70, %p71
    %p73 = scmp.ne.s32.totalorder %s65, %s67
    %p74 = scmp.eq.s32.totalorder %s15, 3
    %p75 = por %p73, %p74
    %p76 = scmp.ne.s32.totalorder %s67, %s68
    %p77 = scmp.eq.s32.totalorder %s15, 0
    %p78 = por %p76, %p77
    %p79 = scmp.ne.s32.totalorder %s67, %s68
    %p80 = scmp.eq.s32.totalorder %s16, 3
    %p81 = por %p79, %p80
    %p83 = scmp.ne.s32.totalorder %s68, %s82
    %p84 = scmp.eq.s32.totalorder %s16, 0
    %p85 = por %p83, %p84
    %s87 = sadd.s32 %s86, 1
    %p90 = scmp.eq.s32.totalorder %s10, 3
    %p91 = scmp.ne.s32.totalorder %s86, %s88
    %p92 = scmp.eq.s32.totalorder %s10, 0
    %p93 = por %p91, %p92
    %p94 = scmp.ne.s32.totalorder %s86, %s88
    %p95 = scmp.eq.s32.totalorder %s15, 3
    %p96 = por %p94, %p95
    %p97 = scmp.ne.s32.totalorder %s88, %s89
    %p98 = scmp.eq.s32.totalorder %s15, 0
    %p99 = por %p97, %p98
    %p100 = scmp.ne.s32.totalorder %s88, %s89
    %p101 = scmp.eq.s32.totalorder %s16, 3
    %p102 = por %p100, %p101
    %p104 = scmp.ne.s32.totalorder %s89, %s103
    %p105 = scmp.eq.s32.totalorder %s16, 0
    %p106 = por %p104, %p105
    %s107 = ssub.s32 %s10, %s17
    %p108 = scmp.eq.s32.totalorder %s107, 0
    %s110 = sadd.s32 %s109, 1
    %s111 = scalar_select %p108, %s109, %s110
    %p114 = pneg %p108
    %p115 = scmp.eq.s32.totalorder %s10, 3
    %p116 = por %p114, %p115
    %p117 = scmp.ne.s32.totalorder %s109, %s112
    %p118 = scmp.eq.s32.totalorder %s10, 0
    %p119 = por %p117, %p118
    %p120 = scmp.ne.s32.totalorder %s109, %s112
    %p121 = scmp.eq.s32.totalorder %s15, 3
    %p122 = por %p120, %p121
    %p123 = scmp.ne.s32.totalorder %s112, %s113
    %p124 = scmp.eq.s32.totalorder %s15, 0
    %p125 = por %p123, %p124
    %p126 = scmp.ne.s32.totalorder %s112, %s113
    %p127 = scmp.eq.s32.totalorder %s16, 3
    %p128 = por %p126, %p127
    %p130 = scmp.ne.s32.totalorder %s113, %s129
    %p131 = scmp.eq.s32.totalorder %s16, 0
    %p132 = por %p130, %p131
    %p133 = scmp.le.s32.totalorder 1, %s10
    %p134 = scmp.lt.s32.totalorder %s10, 5
    %p135 = pnand %p133, %p134
    %p136 = pneg %p135
    // Predicated region
    $region9: #{bottleneck_forward.6} parent=5 // pred_check
      _
    $region10: #{bottleneck_forward.6} parent=5 // pred_check_branch
      %138 = sbr.rel (%p135) target = $region12
    $region11: #{bottleneck_forward.6} parent=5 // pred_region
      %s139 = ssub.s32 %s10, 1
      // Predicated region
      $region13: #{bottleneck_forward.6} parent=11 // pred_check
        %p140 = pneg %p57
      $region14: #{bottleneck_forward.6} parent=11 // pred_check_branch
        %142 = sbr.rel (%p140) target = $region16
      $region15: #{bottleneck_forward.6} parent=11 // pred_region
        _
      $region16: #{bottleneck_forward.6} parent=11 // pred_fallthru
        _
      // Predicated region
      $region17: #{bottleneck_forward.6} parent=11 // pred_check
        %p143 = pneg %p78
      $region18: #{bottleneck_forward.6} parent=11 // pred_check_branch
        %145 = sbr.rel (%p143) target = $region20
      $region19: #{bottleneck_forward.6} parent=11 // pred_region
        _
      $region20: #{bottleneck_forward.6} parent=11 // pred_fallthru
        _
      // Predicated region
      $region21: #{bottleneck_forward.6} parent=11 // pred_check
        %p146 = pneg %p99
      $region22: #{bottleneck_forward.6} parent=11 // pred_check_branch
        %148 = sbr.rel (%p146) target = $region24
      $region23: #{bottleneck_forward.6} parent=11 // pred_region
        _
      $region24: #{bottleneck_forward.6} parent=11 // pred_fallthru
        _
    $region12: #{bottleneck_forward.6} parent=5 // pred_fallthru
      _
    %p149 = scmp.lt.s32.totalorder %s10, 4
    // Predicated region
    $region25: #{bottleneck_forward.6} parent=5 // pred_check
      %p150 = pneg %p149
    $region26: #{bottleneck_forward.6} parent=5 // pred_check_branch
      %152 = sbr.rel (%p150) target = $region28
    $region27: #{bottleneck_forward.6} parent=5 // pred_region
      // Predicated region
      $region29: #{bottleneck_forward.6} parent=27 // pred_check
        %p153 = pneg %p30
      $region30: #{bottleneck_forward.6} parent=27 // pred_check_branch
        %155 = sbr.rel (%p153) target = $region32
      $region31: #{bottleneck_forward.6} parent=27 // pred_region
        %s156 = smul.u32 16, %s10
        %p157 = scmp.lt.s32.totalorder %s156, 63
        %s158 = scalar_select %p157, %s156, 63
        %s159 = smul.addr %s158, 8
        %s160 = scalar_lea.vmem %s0, %s159
        %s161 = smul.u32 16, %s10
      $region32: #{bottleneck_forward.6} parent=27 // pred_fallthru
        _
    $region28: #{bottleneck_forward.6} parent=5 // pred_fallthru
      _
    %p162 = scmp.le.s32.totalorder 1, %s10
    %p163 = scmp.lt.s32.totalorder %s10, 5
    %p164 = pnand %p162, %p163
    %p165 = pneg %p164
    // Predicated region
    $region33: #{bottleneck_forward.6} parent=5 // pred_check
      _
    $region34: #{bottleneck_forward.6} parent=5 // pred_check_branch
      %167 = sbr.rel (%p164) target = $region36
    $region35: #{bottleneck_forward.6} parent=5 // pred_region
      %s168 = ssub.s32 %s10, 1
      %s169 = smul.u32 16, %s15
      %p170 = scmp.lt.s32.totalorder %s169, 63
      %s171 = scalar_select %p170, %s169, 63
      %s172 = smul.addr %s171, 8
      %s173 = scalar_lea.vmem %s0, %s172
      %p174 = pneg %p36
      %p175 = pneg %p33
      %p176 = pneg %p57
      %p177 = pneg %p54
      %p178 = pneg %p78
      %p179 = pneg %p75
      %p180 = pneg %p99
      %p181 = pneg %p96
      %p182 = pneg %p125
      %p183 = pneg %p122
      %p184 = scmp.lt.s32.totalorder %s15, 3
      %s185 = scalar_select %p184, %s15, 3
      %s186 = smul.addr %s185, 2
      %s187 = scalar_lea.vmem %s4, %s186
      %s188 = smul.u32 16, %s15
      %p189 = scmp.lt.s32.totalorder %s188, 63
      %s190 = scalar_select %p189, %s188, 63
      %s191 = smul.addr %s190, 8
      %s192 = scalar_lea.vmem %s0, %s191
      %s193 = smul.u32 16, %s15
      %p194 = scmp.lt.s32.totalorder %s15, 3
      %s195 = scalar_select %p194, %s15, 3
      %s196 = smul.addr %s195, 2
      %s197 = scalar_lea.vmem %s4, %s196
      %v198 = vld [vmem:[%s192] sm:$0xff]
      %v199 = vld [vmem:[%s192 + $0x8] sm:$0xff]
      %v200 = vld [vmem:[%s192 + $0x10] sm:$0xff]
      %v201 = vld [vmem:[%s192 + $0x18] sm:$0xff]
      %v202 = vld [vmem:[%s192 + $0x20] sm:$0xff]
      %v203 = vld [vmem:[%s192 + $0x28] sm:$0xff]
      %v204 = vld [vmem:[%s192 + $0x30] sm:$0xff]
      %v205 = vld [vmem:[%s192 + $0x38] sm:$0xff]
      %v206 = vld [vmem:[%s192 + $0x40] sm:$0xff]
      %v207 = vld [vmem:[%s192 + $0x48] sm:$0xff]
      %v208 = vld [vmem:[%s192 + $0x50] sm:$0xff]
      %v209 = vld [vmem:[%s192 + $0x58] sm:$0xff]
      %v210 = vld [vmem:[%s192 + $0x60] sm:$0xff]
      %v211 = vld [vmem:[%s192 + $0x68] sm:$0xff]
      %v212 = vld [vmem:[%s192 + $0x70] sm:$0xff]
      %v213 = vld [vmem:[%s192 + $0x78] sm:$0xff]
      %v214 = vld [vmem:[%s1] sm:$0x1]
      %v216 = vlaneseq
      %v217 = vshrl.u32 %v216, 7
      %v218 = vsub.s32 0, %v217
      %v219 = vrot.slane %v214, %v218
      %v221 = vmul.f32 %v198, %v219
      %v222 = vmul.f32 %v199, %v219
      %v223 = vmul.f32 %v200, %v219
      %v224 = vmul.f32 %v201, %v219
      %v225 = vmul.f32 %v202, %v219
      %v226 = vmul.f32 %v203, %v219
      %v227 = vmul.f32 %v204, %v219
      %v228 = vmul.f32 %v205, %v219
      %v229 = vmul.f32 %v206, %v219
      %v230 = vmul.f32 %v207, %v219
      %v231 = vmul.f32 %v208, %v219
      %v232 = vmul.f32 %v209, %v219
      %v233 = vmul.f32 %v210, %v219
      %v234 = vmul.f32 %v211, %v219
      %v235 = vmul.f32 %v212, %v219
      %v236 = vmul.f32 %v213, %v219
      %v237 = vld [vmem:[%s2] sm:$0x1]
      %v239 = vlaneseq
      %v240 = vshrl.u32 %v239, 7
      %v241 = vsub.s32 0, %v240
      %v242 = vrot.slane %v237, %v241
      %v244 = vadd.f32 %v221, %v242
      %v245 = vadd.f32 %v222, %v242
      %v246 = vadd.f32 %v223, %v242
      %v247 = vadd.f32 %v224, %v242
      %v248 = vadd.f32 %v225, %v242
      %v249 = vadd.f32 %v226, %v242
      %v250 = vadd.f32 %v227, %v242
      %v251 = vadd.f32 %v228, %v242
      %v252 = vadd.f32 %v229, %v242
      %v253 = vadd.f32 %v230, %v242
      %v254 = vadd.f32 %v231, %v242
      %v255 = vadd.f32 %v232, %v242
      %v256 = vadd.f32 %v233, %v242
      %v257 = vadd.f32 %v234, %v242
      %v258 = vadd.f32 %v235, %v242
      %v259 = vadd.f32 %v236, %v242
      %v260 = vmax.f32 %v244, 0.0
      %v261 = vmax.f32 %v245, 0.0
      %v262 = vmax.f32 %v246, 0.0
      %v263 = vmax.f32 %v247, 0.0
      %v264 = vmax.f32 %v248, 0.0
      %v265 = vmax.f32 %v249, 0.0
      %v266 = vmax.f32 %v250, 0.0
      %v267 = vmax.f32 %v251, 0.0
      %v268 = vmax.f32 %v252, 0.0
      %v269 = vmax.f32 %v253, 0.0
      %v270 = vmax.f32 %v254, 0.0
      %v271 = vmax.f32 %v255, 0.0
      %v272 = vmax.f32 %v256, 0.0
      %v273 = vmax.f32 %v257, 0.0
      %v274 = vmax.f32 %v258, 0.0
      %v275 = vmax.f32 %v259, 0.0
      %v276 = vld [vmem:[%s3] sm:$0xf]
      %vm277 = vcmask 31744
      %v279 = vsel %vm277, %v260, 0
      %v282 = vsel %vm277, %v261, 0
      %v285 = vsel %vm277, %v262, 0
      %v288 = vsel %vm277, %v263, 0
      %v291 = vsel %vm277, %v264, 0
      %v294 = vsel %vm277, %v265, 0
      %v297 = vsel %vm277, %v266, 0
      %v300 = vsel %vm277, %v267, 0
      %v303 = vsel %vm277, %v268, 0
      %v306 = vsel %vm277, %v269, 0
      %v309 = vsel %vm277, %v270, 0
      %v312 = vsel %vm277, %v271, 0
      %v315 = vsel %vm277, %v272, 0
      %v318 = vsel %vm277, %v273, 0
      %v321 = vsel %vm277, %v274, 0
      %v324 = vsel %vm277, %v275, 0
      %vm326 = vcmask 1043456
      %v328 = vsel %vm326, %v276, 0
      %330 = vmatprep.subr.mxu0 0.0
      %331 = vmatpush1.msra.mxu0 %v328
      %332 = vmatprep.subr.mxu0 0.0
      %333 = vmatpush1.msra.mxu0 0.0
      %334 = vmatprep.subr.mxu0 0.0
      %335 = vmatpush1.msra.mxu0 0.0
      %336 = vmatprep.subr.mxu0 0.0
      %337 = vmatpush1.msra.mxu0 0.0
      %338 = vmatprep.subr.mxu0 0.0
      %339 = vmatpush1.msra.mxu0 0.0
      %340 = vmatprep.subr.mxu0 0.0
      %341 = vmatpush1.msra.mxu0 0.0
      %342 = vmatprep.subr.mxu0 0.0
      %343 = vmatpush1.msra.mxu0 0.0
      %344 = vmatprep.subr.mxu0 0.0
      %345 = vmatpush1.msra.mxu0 0.0
      %346 = vmatprep.subr.mxu0 0.0
      %347 = vmatpush1.msra.mxu0 0.0
      %348 = vmatprep.subr.mxu0 0.0
      %349 = vmatpush1.msra.mxu0 0.0
      %350 = vmatprep.subr.mxu0 0.0
      %351 = vmatpush1.msra.mxu0 0.0
      %352 = vmatprep.subr.mxu0 0.0
      %353 = vmatpush1.msra.mxu0 0.0
      %354 = vmatprep.subr.mxu0 0.0
      %355 = vmatpush1.msra.mxu0 0.0
      %356 = vmatprep.subr.mxu0 0.0
      %357 = vmatpush1.msra.mxu0 0.0
      %358 = vmatprep.subr.mxu0 0.0
      %359 = vmatpush1.msra.mxu0 0.0
      %360 = vmatprep.subr.mxu0 0.0
      %361 = vmatpush1.msra.mxu0 0.0
      %362 = vmatprep.subr.mxu0 0.0
      %363 = vmatpush1.msra.mxu0 0.0
      %364 = vmatprep.subr.mxu0 0.0
      %365 = vmatpush1.msra.mxu0 0.0
      %366 = vmatprep.subr.mxu0 0.0
      %367 = vmatpush1.msra.mxu0 0.0
      %368 = vmatprep.subr.mxu0 0.0
      %369 = vmatpush1.msra.mxu0 0.0
      %370 = vmatprep.subr.mxu0 0.0
      %371 = vmatpush1.msra.mxu0 0.0
      %372 = vmatprep.subr.mxu0 0.0
      %373 = vmatpush1.msra.mxu0 0.0
      %374 = vmatprep.subr.mxu0 0.0
      %375 = vmatpush1.msra.mxu0 0.0
      %376 = vmatprep.subr.mxu0 0.0
      %377 = vmatpush1.msra.mxu0 0.0
      %378 = vmatprep.subr.mxu0 0.0
      %379 = vmatpush1.msra.mxu0 0.0
      %380 = vmatprep.subr.mxu0 0.0
      %381 = vmatpush1.msra.mxu0 0.0
      %382 = vmatprep.subr.mxu0 0.0
      %383 = vmatpush1.msra.mxu0 0.0
      %384 = vmatprep.subr.mxu0 0.0
      %385 = vmatpush1.msra.mxu0 0.0
      %386 = vmatprep.subr.mxu0 0.0
      %387 = vmatpush1.msra.mxu0 0.0
      %388 = vmatprep.subr.mxu0 0.0
      %389 = vmatpush1.msra.mxu0 0.0
      %390 = vmatprep.subr.mxu0 0.0
      %391 = vmatpush1.msra.mxu0 0.0
      %392 = vmatprep.subr.mxu0 0.0
      %393 = vmatpush1.msra.mxu0 0.0
      %394 = vmatprep.mubr.f32.mxu0 0.0
      %395 = vmatmul.mubr.f32.gmra.mrb[0].mxu0 %v279
      %v396 = vpop.f32.mrb[0].mxu0
      %v397 = vadd.f32 0.0, %v396
      %v398 = vpop.f32.mrb[0].mxu0
      %399 = vmatprep.mubr.f32.mxu0 0.0
      %400 = vmatmul.mubr.f32.gmra.mrb[0].mxu0 %v282
      %v401 = vpop.f32.mrb[0].mxu0
      %v402 = vadd.f32 0.0, %v401
      %v403 = vpop.f32.mrb[0].mxu0
      %404 = vmatprep.mubr.f32.mxu0 0.0
      %405 = vmatmul.mubr.f32.gmra.mrb[0].mxu0 %v285
      %v406 = vpop.f32.mrb[0].mxu0
      %v407 = vadd.f32 0.0, %v406
      %v408 = vpop.f32.mrb[0].mxu0
      %409 = vmatprep.mubr.f32.mxu0 0.0
      %410 = vmatmul.mubr.f32.gmra.mrb[0].mxu0 %v288
      %v411 = vpop.f32.mrb[0].mxu0
      %v412 = vadd.f32 0.0, %v411
      %v413 = vpop.f32.mrb[0].mxu0
      %414 = vmatprep.mubr.f32.mxu0 0.0
      %415 = vmatmul.mubr.f32.gmra.mrb[0].mxu0 %v291
      %v416 = vpop.f32.mrb[0].mxu0
      %v417 = vadd.f32 0.0, %v416
      %v418 = vpop.f32.mrb[0].mxu0
      %419 = vmatprep.mubr.f32.mxu0 0.0
      %420 = vmatmul.mubr.f32.gmra.mrb[0].mxu0 %v294
      %v421 = vpop.f32.mrb[0].mxu0
      %v422 = vadd.f32 0.0, %v421
      %v423 = vpop.f32.mrb[0].mxu0
      %424 = vmatprep.mubr.f32.mxu0 0.0
      %425 = vmatmul.mubr.f32.gmra.mrb[0].mxu0 %v297
      %v426 = vpop.f32.mrb[0].mxu0
      %v427 = vadd.f32 0.0, %v426
      %v428 = vpop.f32.mrb[0].mxu0
      %429 = vmatprep.mubr.f32.mxu0 0.0
      %430 = vmatmul.mubr.f32.gmra.mrb[0].mxu0 %v300
      %v431 = vpop.f32.mrb[0].mxu0
      %v432 = vadd.f32 0.0, %v431
      %v433 = vpop.f32.mrb[0].mxu0
      %434 = vmatprep.mubr.f32.mxu0 0.0
      %435 = vmatmul.mubr.f32.gmra.mrb[0].mxu0 %v303
      %v436 = vpop.f32.mrb[0].mxu0
      %v437 = vadd.f32 0.0, %v436
      %v438 = vpop.f32.mrb[0].mxu0
      %439 = vmatprep.mubr.f32.mxu0 0.0
      %440 = vmatmul.mubr.f32.gmra.mrb[0].mxu0 %v306
      %v441 = vpop.f32.mrb[0].mxu0
      %v442 = vadd.f32 0.0, %v441
      %v443 = vpop.f32.mrb[0].mxu0
      %444 = vmatprep.mubr.f32.mxu0 0.0
      %445 = vmatmul.mubr.f32.gmra.mrb[0].mxu0 %v309
      %v446 = vpop.f32.mrb[0].mxu0
      %v447 = vadd.f32 0.0, %v446
      %v448 = vpop.f32.mrb[0].mxu0
      %449 = vmatprep.mubr.f32.mxu0 0.0
      %450 = vmatmul.mubr.f32.gmra.mrb[0].mxu0 %v312
      %v451 = vpop.f32.mrb[0].mxu0
      %v452 = vadd.f32 0.0, %v451
      %v453 = vpop.f32.mrb[0].mxu0
      %454 = vmatprep.mubr.f32.mxu0 0.0
      %455 = vmatmul.mubr.f32.gmra.mrb[0].mxu0 %v315
      %v456 = vpop.f32.mrb[0].mxu0
      %v457 = vadd.f32 0.0, %v456
      %v458 = vpop.f32.mrb[0].mxu0
      %459 = vmatprep.mubr.f32.mxu0 0.0
      %460 = vmatmul.mubr.f32.gmra.mrb[0].mxu0 %v318
      %v461 = vpop.f32.mrb[0].mxu0
      %v462 = vadd.f32 0.0, %v461
      %v463 = vpop.f32.mrb[0].mxu0
      %464 = vmatprep.mubr.f32.mxu0 0.0
      %465 = vmatmul.mubr.f32.gmra.mrb[0].mxu0 %v321
      %v466 = vpop.f32.mrb[0].mxu0
      %v467 = vadd.f32 0.0, %v466
      %v468 = vpop.f32.mrb[0].mxu0
      %469 = vmatprep.mubr.f32.mxu0 0.0
      %470 = vmatmul.mubr.f32.gmra.mrb[0].mxu0 %v324
      %v471 = vpop.f32.mrb[0].mxu0
      %v472 = vadd.f32 0.0, %v471
      %v473 = vpop.f32.mrb[0].mxu0
      %474 = vdwg.mxu0
      %vm475 = vcmask 130048
      %v476 = vsel %vm475, %v397, 0.0
      %v477 = vsel %vm475, %v402, 0.0
      %v478 = vadd.f32 %v476, %v477
      %v479 = vsel %vm475, %v407, 0.0
      %v480 = vadd.f32 %v478, %v479
      %v481 = vsel %vm475, %v412, 0.0
      %v482 = vadd.f32 %v480, %v481
      %v483 = vsel %vm475, %v417, 0.0
      %v484 = vadd.f32 %v482, %v483
      %v485 = vsel %vm475, %v422, 0.0
      %v486 = vadd.f32 %v484, %v485
      %v487 = vsel %vm475, %v427, 0.0
      %v488 = vadd.f32 %v486, %v487
      %v489 = vsel %vm475, %v432, 0.0
      %v490 = vadd.f32 %v488, %v489
      %v491 = vsel %vm475, %v437, 0.0
      %v492 = vadd.f32 %v490, %v491
      %v493 = vsel %vm475, %v442, 0.0
      %v494 = vadd.f32 %v492, %v493
      %v495 = vsel %vm475, %v447, 0.0
      %v496 = vadd.f32 %v494, %v495
      %v497 = vsel %vm475, %v452, 0.0
      %v498 = vadd.f32 %v496, %v497
      %v499 = vsel %vm475, %v457, 0.0
      %v500 = vadd.f32 %v498, %v499
      %v501 = vsel %vm475, %v462, 0.0
      %v502 = vadd.f32 %v500, %v501
      %v503 = vsel %vm475, %v467, 0.0
      %v504 = vadd.f32 %v502, %v503
      %v505 = vsel %vm475, %v472, 0.0
      %v506 = vadd.f32 %v504, %v505
      %v507 = vrot.slane %v506, 4
      %v508 = vadd.f32 %v506, %v507
      %v509 = vrot.slane %v508, 2
      %v510 = vadd.f32 %v508, %v509
      %v511 = vrot.slane %v510, 1
      %v512 = vadd.f32 %v510, %v511
      %v513 = vmul.f32 %v397, %v397
      %v514 = vmul.f32 %v402, %v402
      %v515 = vmul.f32 %v407, %v407
      %v516 = vmul.f32 %v412, %v412
      %v517 = vmul.f32 %v417, %v417
      %v518 = vmul.f32 %v422, %v422
      %v519 = vmul.f32 %v427, %v427
      %v520 = vmul.f32 %v432, %v432
      %v521 = vmul.f32 %v437, %v437
      %v522 = vmul.f32 %v442, %v442
      %v523 = vmul.f32 %v447, %v447
      %v524 = vmul.f32 %v452, %v452
      %v525 = vmul.f32 %v457, %v457
      %v526 = vmul.f32 %v462, %v462
      %v527 = vmul.f32 %v467, %v467
      %v528 = vmul.f32 %v472, %v472
      %v529 = vsel %vm475, %v513, 0.0
      %v530 = vsel %vm475, %v514, 0.0
      %v531 = vadd.f32 %v529, %v530
      %v532 = vsel %vm475, %v515, 0.0
      %v533 = vadd.f32 %v531, %v532
      %v534 = vsel %vm475, %v516, 0.0
      %v535 = vadd.f32 %v533, %v534
      %v536 = vsel %vm475, %v517, 0.0
      %v537 = vadd.f32 %v535, %v536
      %v538 = vsel %vm475, %v518, 0.0
      %v539 = vadd.f32 %v537, %v538
      %v540 = vsel %vm475, %v519, 0.0
      %v541 = vadd.f32 %v539, %v540
      %v542 = vsel %vm475, %v520, 0.0
      %v543 = vadd.f32 %v541, %v542
      %v544 = vsel %vm475, %v521, 0.0
      %v545 = vadd.f32 %v543, %v544
      %v546 = vsel %vm475, %v522, 0.0
      %v547 = vadd.f32 %v545, %v546
      %v548 = vsel %vm475, %v523, 0.0
      %v549 = vadd.f32 %v547, %v548
      %v550 = vsel %vm475, %v524, 0.0
      %v551 = vadd.f32 %v549, %v550
      %v552 = vsel %vm475, %v525, 0.0
      %v553 = vadd.f32 %v551, %v552
      %v554 = vsel %vm475, %v526, 0.0
      %v555 = vadd.f32 %v553, %v554
      %v556 = vsel %vm475, %v527, 0.0
      %v557 = vadd.f32 %v555, %v556
      %v558 = vsel %vm475, %v528, 0.0
      %v559 = vadd.f32 %v557, %v558
      %v560 = vrot.slane %v559, 4
      %v561 = vadd.f32 %v559, %v560
      %v562 = vrot.slane %v561, 2
      %v563 = vadd.f32 %v561, %v562
      %v564 = vrot.slane %v563, 1
      %v565 = vadd.f32 %v563, %v564
      %vm566 = vcmask 1040384
      %v567 = vsel %vm566, %v512, %v565
      %vm568 = vcmask 123904
      %569 = vst.msk [vmem:[%s197] sm:$0x3] %vm568, %v567
      %p570 = scmp.lt.s32.totalorder %s15, 3
      %s571 = scalar_select %p570, %s15, 3
      %s572 = smul.addr %s571, 2
      %s573 = scalar_lea.vmem %s4, %s572
      // Predicated region
      $region37: #{bottleneck_forward.6} parent=35 // pred_check
        %p574 = pneg %p122
      $region38: #{bottleneck_forward.6} parent=35 // pred_check_branch
        %576 = sbr.rel (%p574) target = $region40
      $region39: #{bottleneck_forward.6} parent=35 // pred_region
        _
      $region40: #{bottleneck_forward.6} parent=35 // pred_fallthru
        _
    $region36: #{bottleneck_forward.6} parent=5 // pred_fallthru
      _
    %p577 = scmp.le.s32.totalorder 2, %s10
    // Predicated region
    $region41: #{bottleneck_forward.6} parent=5 // pred_check
      %p578 = pneg %p577
    $region42: #{bottleneck_forward.6} parent=5 // pred_check_branch
      %580 = sbr.rel (%p578) target = $region44
    $region43: #{bottleneck_forward.6} parent=5 // pred_region
      %s581 = ssub.s32 %s10, 2
      // Predicated region
      $region45: #{bottleneck_forward.6} parent=43 // pred_check
        %p582 = pneg %p128
      $region46: #{bottleneck_forward.6} parent=43 // pred_check_branch
        %584 = sbr.rel (%p582) target = $region48
      $region47: #{bottleneck_forward.6} parent=43 // pred_region
        %p585 = scmp.lt.s32.totalorder %s16, 3
        %s586 = scalar_select %p585, %s16, 3
        %s587 = smul.addr %s586, 2
        %s588 = scalar_lea.vmem %s4, %s587
      $region48: #{bottleneck_forward.6} parent=43 // pred_fallthru
        _
    $region44: #{bottleneck_forward.6} parent=5 // pred_fallthru
      _
  $region6: #{bottleneck_forward.6} parent=0 // loop_footer
    %s14 = sadd.s32 1, %s10
  $region7: #{bottleneck_forward.6} parent=0 // loop_footer_branch
    %9 = sbr.rel target = $region3
  $region8: #{bottleneck_forward.6} parent=0 // loop_exit
    _

// kernel: bottleneck_forward.4
$region0: #{bottleneck_forward.4}
  #allocation0 [shape = 'u32[]', space=smem, size = 0x4, offset = 0x4, fixed_abs, tag = 'smem constant byte address 0x4 - core index']
  #allocation1 [shape = 'u32[144,128]{1,0:T(1,128)}', space=vmem, size = 0x12000, scoped, tag = 'internal scratch']
  %s0 = inlined_call_operand.hbm [shape: f32[512,16], index: 0, kind: input, shape index: {}]
  %s1 = inlined_call_operand.vmem [shape: f32[16,4], index: 1, kind: input, shape index: {}]
  %s2 = inlined_call_operand.vmem [shape: f32[512,4], index: 2, kind: output, shape index: {0}]
  %s3 = inlined_call_operand.vmem [shape: f32[4,2,4], index: 3, kind: output, shape index: {1}]
  %4 = xla_tuple %s2, %s3
  %s5 = sld [smem:[#allocation0]]
  $region53: #{bottleneck_forward.4} parent=0
    _
  %s7 = ssub.s32 1, %s5
  %s8 = scalar_select 0, %s7, %s5
  $region1: #{bottleneck_forward.4} parent=0
    #allocation2 [shape = 'u8[131072]{0}', space=vmem, size = 0x20000, scoped, tag = 'input window, operand 0']
    #allocation3 [shape = 's32[2]{0}', space=sflag, size = 0x8, scoped, tag = 'scoped memory for bottleneck_forward.4']
    %9 = vsyncpa [#allocation3], 0
    %s10 = scalar_lea.sflag [#allocation3], 1
    %11 = vsyncpa %s10, 0
    loop: start=0, step=1, limit=6
    $region2: #{bottleneck_forward.4} parent=1 // loop_pre_header
      _
    $region3: #{bottleneck_forward.4} parent=1 // loop_header
      %s13 = sphi 0, %s17
      %p14 = scmp.ge.s32.totalorder %s13, 6
      %s23 = sphi 0, %s25
      %s26 = sphi 0, %s23
      %s27 = sphi 0, %s26
      %s43 = sphi 0, %s27
      %s47 = sphi 0, %s47
      %s49 = sphi 0, %s47
      %s50 = sphi 0, %s49
      %s64 = sphi 0, %s50
      %s70 = sphi 0, %s72
      %s73 = sphi 0, %s70
      %s74 = sphi 0, %s73
      %s90 = sphi 0, %s74
      %s96 = sphi 0, %s98
      %s99 = sphi 0, %s96
      %s100 = sphi 0, %s99
      %s116 = sphi 0, %s100
    $region4: #{bottleneck_forward.4} parent=1 // loop_header_branch
      %16 = sbr.rel (%p14) target = $region8
    $region5: #{bottleneck_forward.4} parent=1 // loop_body
      %s18 = ssub.s32 %s13, 1
      %s19 = ssub.s32 %s13, 2
      %s20 = sadd.s32 %s13, 1
      %s21 = ssub.s32 %s13, %s20
      %p22 = scmp.eq.s32.totalorder %s21, 0
      %s24 = sadd.s32 %s23, 1
      %s25 = scalar_select %p22, %s23, %s24
      %p28 = pneg %p22
      %p29 = scmp.eq.s32.totalorder %s13, 3
      %p30 = por %p28, %p29
      %p31 = scmp.ne.s32.totalorder %s23, %s26
      %p32 = scmp.eq.s32.totalorder %s13, 0
      %p33 = por %p31, %p32
      %p34 = scmp.ne.s32.totalorder %s23, %s26
      %p35 = scmp.eq.s32.totalorder %s18, 3
      %p36 = por %p34, %p35
      %p37 = scmp.ne.s32.totalorder %s26, %s27
      %p38 = scmp.eq.s32.totalorder %s18, 0
      %p39 = por %p37, %p38
      %p40 = scmp.ne.s32.totalorder %s26, %s27
      %p41 = scmp.eq.s32.totalorder %s19, 3
      %p42 = por %p40, %p41
      %p44 = scmp.ne.s32.totalorder %s27, %s43
      %p45 = scmp.eq.s32.totalorder %s19, 0
      %p46 = por %p44, %p45
      %s48 = sadd.s32 %s47, 1
      %p51 = scmp.eq.s32.totalorder %s13, 3
      %p52 = scmp.ne.s32.totalorder %s47, %s49
      %p53 = scmp.eq.s32.totalorder %s13, 0
      %p54 = por %p52, %p53
      %p55 = scmp.ne.s32.totalorder %s47, %s49
      %p56 = scmp.eq.s32.totalorder %s18, 3
      %p57 = por %p55, %p56
      %p58 = scmp.ne.s32.totalorder %s49, %s50
      %p59 = scmp.eq.s32.totalorder %s18, 0
      %p60 = por %p58, %p59
      %p61 = scmp.ne.s32.totalorder %s49, %s50
      %p62 = scmp.eq.s32.totalorder %s19, 3
      %p63 = por %p61, %p62
      %p65 = scmp.ne.s32.totalorder %s50, %s64
      %p66 = scmp.eq.s32.totalorder %s19, 0
      %p67 = por %p65, %p66
      %s68 = ssub.s32 %s13, %s20
      %p69 = scmp.eq.s32.totalorder %s68, 0
      %s71 = sadd.s32 %s70, 1
      %s72 = scalar_select %p69, %s70, %s71
      %p75 = pneg %p69
      %p76 = scmp.eq.s32.totalorder %s13, 3
      %p77 = por %p75, %p76
      %p78 = scmp.ne.s32.totalorder %s70, %s73
      %p79 = scmp.eq.s32.totalorder %s13, 0
      %p80 = por %p78, %p79
      %p81 = scmp.ne.s32.totalorder %s70, %s73
      %p82 = scmp.eq.s32.totalorder %s18, 3
      %p83 = por %p81, %p82
      %p84 = scmp.ne.s32.totalorder %s73, %s74
      %p85 = scmp.eq.s32.totalorder %s18, 0
      %p86 = por %p84, %p85
      %p87 = scmp.ne.s32.totalorder %s73, %s74
      %p88 = scmp.eq.s32.totalorder %s19, 3
      %p89 = por %p87, %p88
      %p91 = scmp.ne.s32.totalorder %s74, %s90
      %p92 = scmp.eq.s32.totalorder %s19, 0
      %p93 = por %p91, %p92
      %s94 = ssub.s32 %s13, %s20
      %p95 = scmp.eq.s32.totalorder %s94, 0
      %s97 = sadd.s32 %s96, 1
      %s98 = scalar_select %p95, %s96, %s97
      %p101 = pneg %p95
      %p102 = scmp.eq.s32.totalorder %s13, 3
      %p103 = por %p101, %p102
      %p104 = scmp.ne.s32.totalorder %s96, %s99
      %p105 = scmp.eq.s32.totalorder %s13, 0
      %p106 = por %p104, %p105
      %p107 = scmp.ne.s32.totalorder %s96, %s99
      %p108 = scmp.eq.s32.totalorder %s18, 3
      %p109 = por %p107, %p108
      %p110 = scmp.ne.s32.totalorder %s99, %s100
      %p111 = scmp.eq.s32.totalorder %s18, 0
      %p112 = por %p110, %p111
      %p113 = scmp.ne.s32.totalorder %s99, %s100
      %p114 = scmp.eq.s32.totalorder %s19, 3
      %p115 = por %p113, %p114
      %p117 = scmp.ne.s32.totalorder %s100, %s116
      %p118 = scmp.eq.s32.totalorder %s19, 0
      %p119 = por %p117, %p118
      %p120 = scmp.le.s32.totalorder 1, %s13
      %p121 = scmp.lt.s32.totalorder %s13, 5
      %p122 = pnand %p120, %p121
      %p123 = pneg %p122
      // Predicated region
      $region9: #{bottleneck_forward.4} parent=5 // pred_check
        _
      $region10: #{bottleneck_forward.4} parent=5 // pred_check_branch
        %125 = sbr.rel (%p122) target = $region12
      $region11: #{bottleneck_forward.4} parent=5 // pred_region
        %s126 = ssub.s32 %s13, 1
        // Predicated region
        $region13: #{bottleneck_forward.4} parent=11 // pred_check
          %p127 = pneg %p60
        $region14: #{bottleneck_forward.4} parent=11 // pred_check_branch
          %129 = sbr.rel (%p127) target = $region16
        $region15: #{bottleneck_forward.4} parent=11 // pred_region
          _
        $region16: #{bottleneck_forward.4} parent=11 // pred_fallthru
          _
      $region12: #{bottleneck_forward.4} parent=5 // pred_fallthru
        _
      %p130 = scmp.lt.s32.totalorder %s13, 4
      // Predicated region
      $region17: #{bottleneck_forward.4} parent=5 // pred_check
        %p131 = pneg %p130
      $region18: #{bottleneck_forward.4} parent=5 // pred_check_branch
        %133 = sbr.rel (%p131) target = $region20
      $region19: #{bottleneck_forward.4} parent=5 // pred_region
        // Predicated region
        $region21: #{bottleneck_forward.4} parent=19 // pred_check
          %p134 = pneg %p33
        $region22: #{bottleneck_forward.4} parent=19 // pred_check_branch
          %136 = sbr.rel (%p134) target = $region24
        $region23: #{bottleneck_forward.4} parent=19 // pred_region
          %s137 = sand.u32 %s23, 1
          %s138 = scalar_lea.sflag [#allocation3], %s137
          %s139 = sand.u32 %s23, 1
          %s140 = smul.addr %s139, 128
          %s141 = scalar_lea.vmem [#allocation2], %s140
          %s142 = smul.u32 16, %s13
          %s144 = ssub.s32 2048, 2048
          %145 = vsyncadd %s138, %s144
          %s146 = smul.addr %s142, 128
          %s147 = scalar_lea.hbm %s0, %s146
          %s148 = sshll.u32 %s141, 4
          %s149 = int_to_ptr.vmem [resolvable:$true] %s148
          %154 = dma.hbm_to_vmem [thread:$0]  %s147, 2048, %s149, %s138, 128, 128, 8
        $region24: #{bottleneck_forward.4} parent=19 // pred_fallthru
          _
      $region20: #{bottleneck_forward.4} parent=5 // pred_fallthru
        _
      %p155 = scmp.le.s32.totalorder 1, %s13
      %p156 = scmp.lt.s32.totalorder %s13, 5
      %p157 = pnand %p155, %p156
      %p158 = pneg %p157
      // Predicated region
      $region25: #{bottleneck_forward.4} parent=5 // pred_check
        _
      $region26: #{bottleneck_forward.4} parent=5 // pred_check_branch
        %160 = sbr.rel (%p157) target = $region28
      $region27: #{bottleneck_forward.4} parent=5 // pred_region
        %s161 = ssub.s32 %s13, 1
        %s162 = sand.u32 %s26, 1
        %s163 = scalar_lea.sflag [#allocation3], %s162
        %s164 = sand.u32 %s26, 1
        %s165 = smul.addr %s164, 128
        %s166 = scalar_lea.vmem [#allocation2], %s165
        // Predicated region
        $region29: #{bottleneck_forward.4} parent=27 // pred_check
          %p167 = pneg %p39
        $region30: #{bottleneck_forward.4} parent=27 // pred_check_branch
          %169 = sbr.rel (%p167) target = $region32
        $region31: #{bottleneck_forward.4} parent=27 // pred_region
          %170 = dma.done %s163, 2048
        $region32: #{bottleneck_forward.4} parent=27 // pred_fallthru
          _
        %s171 = sand.u32 %s26, 1
        %s172 = scalar_lea.sflag [#allocation3], %s171
        %s173 = sand.u32 %s26, 1
        %s174 = smul.addr %s173, 128
        %s175 = scalar_lea.vmem [#allocation2], %s174
        %p176 = pneg %p39
        %p177 = pneg %p36
        %p178 = pneg %p60
        %p179 = pneg %p57
        %p180 = pneg %p86
        %p181 = pneg %p83
        %s182 = smul.u32 16, %s18
        %p183 = scmp.lt.s32.totalorder %s182, 63
        %s184 = scalar_select %p183, %s182, 63
        %s185 = smul.addr %s184, 8
        %s186 = scalar_lea.vmem %s2, %s185
        %p187 = pneg %p112
        %p188 = pneg %p109
        %p189 = scmp.lt.s32.totalorder %s18, 3
        %s190 = scalar_select %p189, %s18, 3
        %s191 = smul.addr %s190, 2
        %s192 = scalar_lea.vmem %s3, %s191
        %s193 = smul.u32 16, %s18
        %s194 = smul.u32 16, %s18
        %p195 = scmp.lt.s32.totalorder %s194, 63
        %s196 = scalar_select %p195, %s194, 63
        %s197 = smul.addr %s196, 8
        %s198 = scalar_lea.vmem %s2, %s197
        %s199 = smul.u32 16, %s18
        %p200 = scmp.lt.s32.totalorder %s18, 3
        %s201 = scalar_select %p200, %s18, 3
        %s202 = smul.addr %s201, 2
        %s203 = scalar_lea.vmem %s3, %s202
        %v204 = vld [vmem:[%s166] sm:$0xff]
        %v205 = vld [vmem:[%s166 + $0x8] sm:$0xff]
        %v206 = vld [vmem:[%s166 + $0x10] sm:$0xff]
        %v207 = vld [vmem:[%s166 + $0x18] sm:$0xff]
        %v208 = vld [vmem:[%s166 + $0x20] sm:$0xff]
        %v209 = vld [vmem:[%s166 + $0x28] sm:$0xff]
        %v210 = vld [vmem:[%s166 + $0x30] sm:$0xff]
        %v211 = vld [vmem:[%s166 + $0x38] sm:$0xff]
        %v212 = vld [vmem:[%s166 + $0x40] sm:$0xff]
        %v213 = vld [vmem:[%s166 + $0x48] sm:$0xff]
        %v214 = vld [vmem:[%s166 + $0x50] sm:$0xff]
        %v215 = vld [vmem:[%s166 + $0x58] sm:$0xff]
        %v216 = vld [vmem:[%s166 + $0x60] sm:$0xff]
        %v217 = vld [vmem:[%s166 + $0x68] sm:$0xff]
        %v218 = vld [vmem:[%s166 + $0x70] sm:$0xff]
        %v219 = vld [vmem:[%s166 + $0x78] sm:$0xff]
        %v220 = vld [vmem:[%s1] sm:$0xff]
        %v221 = vld [vmem:[%s1 + $0x8] sm:$0xff]
        %vm222 = vcmask 130048
        %v224 = vsel %vm222, %v204, 0
        %v227 = vsel %vm222, %v205, 0
        %v230 = vsel %vm222, %v206, 0
        %v233 = vsel %vm222, %v207, 0
        %v236 = vsel %vm222, %v208, 0
        %v239 = vsel %vm222, %v209, 0
        %v242 = vsel %vm222, %v210, 0
        %v245 = vsel %vm222, %v211, 0
        %v248 = vsel %vm222, %v212, 0
        %v251 = vsel %vm222, %v213, 0
        %v254 = vsel %vm222, %v214, 0
        %v257 = vsel %vm222, %v215, 0
        %v260 = vsel %vm222, %v216, 0
        %v263 = vsel %vm222, %v217, 0
        %v266 = vsel %vm222, %v218, 0
        %v269 = vsel %vm222, %v219, 0
        %271 = vmatprep.subr.mxu0 0.0
        %272 = vmatpush1.msra.mxu0 %v220
        %273 = vmatprep.subr.mxu0 0.0
        %274 = vmatpush1.msra.mxu0 %v221
        %275 = vmatprep.subr.mxu0 0.0
        %276 = vmatpush1.msra.mxu0 0.0
        %277 = vmatprep.subr.mxu0 0.0
        %278 = vmatpush1.msra.mxu0 0.0
        %279 = vmatprep.subr.mxu0 0.0
        %280 = vmatpush1.msra.mxu0 0.0
        %281 = vmatprep.subr.mxu0 0.0
        %282 = vmatpush1.msra.mxu0 0.0
        %283 = vmatprep.subr.mxu0 0.0
        %284 = vmatpush1.msra.mxu0 0.0
        %285 = vmatprep.subr.mxu0 0.0
        %286 = vmatpush1.msra.mxu0 0.0
        %287 = vmatprep.subr.mxu0 0.0
        %288 = vmatpush1.msra.mxu0 0.0
        %289 = vmatprep.subr.mxu0 0.0
        %290 = vmatpush1.msra.mxu0 0.0
        %291 = vmatprep.subr.mxu0 0.0
        %292 = vmatpush1.msra.mxu0 0.0
        %293 = vmatprep.subr.mxu0 0.0
        %294 = vmatpush1.msra.mxu0 0.0
        %295 = vmatprep.subr.mxu0 0.0
        %296 = vmatpush1.msra.mxu0 0.0
        %297 = vmatprep.subr.mxu0 0.0
        %298 = vmatpush1.msra.mxu0 0.0
        %299 = vmatprep.subr.mxu0 0.0
        %300 = vmatpush1.msra.mxu0 0.0
        %301 = vmatprep.subr.mxu0 0.0
        %302 = vmatpush1.msra.mxu0 0.0
        %303 = vmatprep.subr.mxu0 0.0
        %304 = vmatpush1.msra.mxu0 0.0
        %305 = vmatprep.subr.mxu0 0.0
        %306 = vmatpush1.msra.mxu0 0.0
        %307 = vmatprep.subr.mxu0 0.0
        %308 = vmatpush1.msra.mxu0 0.0
        %309 = vmatprep.subr.mxu0 0.0
        %310 = vmatpush1.msra.mxu0 0.0
        %311 = vmatprep.subr.mxu0 0.0
        %312 = vmatpush1.msra.mxu0 0.0
        %313 = vmatprep.subr.mxu0 0.0
        %314 = vmatpush1.msra.mxu0 0.0
        %315 = vmatprep.subr.mxu0 0.0
        %316 = vmatpush1.msra.mxu0 0.0
        %317 = vmatprep.subr.mxu0 0.0
        %318 = vmatpush1.msra.mxu0 0.0
        %319 = vmatprep.subr.mxu0 0.0
        %320 = vmatpush1.msra.mxu0 0.0
        %321 = vmatprep.subr.mxu0 0.0
        %322 = vmatpush1.msra.mxu0 0.0
        %323 = vmatprep.subr.mxu0 0.0
        %324 = vmatpush1.msra.mxu0 0.0
        %325 = vmatprep.subr.mxu0 0.0
        %326 = vmatpush1.msra.mxu0 0.0
        %327 = vmatprep.subr.mxu0 0.0
        %328 = vmatpush1.msra.mxu0 0.0
        %329 = vmatprep.subr.mxu0 0.0
        %330 = vmatpush1.msra.mxu0 0.0
        %331 = vmatprep.subr.mxu0 0.0
        %332 = vmatpush1.msra.mxu0 0.0
        %333 = vmatprep.subr.mxu0 0.0
        %334 = vmatpush1.msra.mxu0 0.0
        %335 = vmatprep.mubr.f32.mxu0 0.0
        %336 = vmatmul.mubr.f32.gmra.mrb[0].mxu0 %v224
        %v337 = vpop.f32.mrb[0].mxu0
        %v338 = vadd.f32 0.0, %v337
        %v339 = vpop.f32.mrb[0].mxu0
        %340 = vmatprep.mubr.f32.mxu0 0.0
        %341 = vmatmul.mubr.f32.gmra.mrb[0].mxu0 %v227
        %v342 = vpop.f32.mrb[0].mxu0
        %v343 = vadd.f32 0.0, %v342
        %v344 = vpop.f32.mrb[0].mxu0
        %345 = vmatprep.mubr.f32.mxu0 0.0
        %346 = vmatmul.mubr.f32.gmra.mrb[0].mxu0 %v230
        %v347 = vpop.f32.mrb[0].mxu0
        %v348 = vadd.f32 0.0, %v347
        %v349 = vpop.f32.mrb[0].mxu0
        %350 = vmatprep.mubr.f32.mxu0 0.0
        %351 = vmatmul.mubr.f32.gmra.mrb[0].mxu0 %v233
        %v352 = vpop.f32.mrb[0].mxu0
        %v353 = vadd.f32 0.0, %v352
        %v354 = vpop.f32.mrb[0].mxu0
        %355 = vmatprep.mubr.f32.mxu0 0.0
        %356 = vmatmul.mubr.f32.gmra.mrb[0].mxu0 %v236
        %v357 = vpop.f32.mrb[0].mxu0
        %v358 = vadd.f32 0.0, %v357
        %v359 = vpop.f32.mrb[0].mxu0
        %360 = vmatprep.mubr.f32.mxu0 0.0
        %361 = vmatmul.mubr.f32.gmra.mrb[0].mxu0 %v239
        %v362 = vpop.f32.mrb[0].mxu0
        %v363 = vadd.f32 0.0, %v362
        %v364 = vpop.f32.mrb[0].mxu0
        %365 = vmatprep.mubr.f32.mxu0 0.0
        %366 = vmatmul.mubr.f32.gmra.mrb[0].mxu0 %v242
        %v367 = vpop.f32.mrb[0].mxu0
        %v368 = vadd.f32 0.0, %v367
        %v369 = vpop.f32.mrb[0].mxu0
        %370 = vmatprep.mubr.f32.mxu0 0.0
        %371 = vmatmul.mubr.f32.gmra.mrb[0].mxu0 %v245
        %v372 = vpop.f32.mrb[0].mxu0
        %v373 = vadd.f32 0.0, %v372
        %v374 = vpop.f32.mrb[0].mxu0
        %375 = vmatprep.mubr.f32.mxu0 0.0
        %376 = vmatmul.mubr.f32.gmra.mrb[0].mxu0 %v248
        %v377 = vpop.f32.mrb[0].mxu0
        %v378 = vadd.f32 0.0, %v377
        %v379 = vpop.f32.mrb[0].mxu0
        %380 = vmatprep.mubr.f32.mxu0 0.0
        %381 = vmatmul.mubr.f32.gmra.mrb[0].mxu0 %v251
        %v382 = vpop.f32.mrb[0].mxu0
        %v383 = vadd.f32 0.0, %v382
        %v384 = vpop.f32.mrb[0].mxu0
        %385 = vmatprep.mubr.f32.mxu0 0.0
        %386 = vmatmul.mubr.f32.gmra.mrb[0].mxu0 %v254
        %v387 = vpop.f32.mrb[0].mxu0
        %v388 = vadd.f32 0.0, %v387
        %v389 = vpop.f32.mrb[0].mxu0
        %390 = vmatprep.mubr.f32.mxu0 0.0
        %391 = vmatmul.mubr.f32.gmra.mrb[0].mxu0 %v257
        %v392 = vpop.f32.mrb[0].mxu0
        %v393 = vadd.f32 0.0, %v392
        %v394 = vpop.f32.mrb[0].mxu0
        %395 = vmatprep.mubr.f32.mxu0 0.0
        %396 = vmatmul.mubr.f32.gmra.mrb[0].mxu0 %v260
        %v397 = vpop.f32.mrb[0].mxu0
        %v398 = vadd.f32 0.0, %v397
        %v399 = vpop.f32.mrb[0].mxu0
        %400 = vmatprep.mubr.f32.mxu0 0.0
        %401 = vmatmul.mubr.f32.gmra.mrb[0].mxu0 %v263
        %v402 = vpop.f32.mrb[0].mxu0
        %v403 = vadd.f32 0.0, %v402
        %v404 = vpop.f32.mrb[0].mxu0
        %405 = vmatprep.mubr.f32.mxu0 0.0
        %406 = vmatmul.mubr.f32.gmra.mrb[0].mxu0 %v266
        %v407 = vpop.f32.mrb[0].mxu0
        %v408 = vadd.f32 0.0, %v407
        %v409 = vpop.f32.mrb[0].mxu0
        %410 = vmatprep.mubr.f32.mxu0 0.0
        %411 = vmatmul.mubr.f32.gmra.mrb[0].mxu0 %v269
        %v412 = vpop.f32.mrb[0].mxu0
        %v413 = vadd.f32 0.0, %v412
        %v414 = vpop.f32.mrb[0].mxu0
        %415 = vdwg.mxu0
        %vm416 = vcmask 31744
        %417 = vst.msk [vmem:[%s198] sm:$0xff] %vm416, %v338
        %418 = vst.msk [vmem:[%s198 + $0x8] sm:$0xff] %vm416, %v343
        %419 = vst.msk [vmem:[%s198 + $0x10] sm:$0xff] %vm416, %v348
        %420 = vst.msk [vmem:[%s198 + $0x18] sm:$0xff] %vm416, %v353
        %421 = vst.msk [vmem:[%s198 + $0x20] sm:$0xff] %vm416, %v358
        %422 = vst.msk [vmem:[%s198 + $0x28] sm:$0xff] %vm416, %v363
        %423 = vst.msk [vmem:[%s198 + $0x30] sm:$0xff] %vm416, %v368
        %424 = vst.msk [vmem:[%s198 + $0x38] sm:$0xff] %vm416, %v373
        %425 = vst.msk [vmem:[%s198 + $0x40] sm:$0xff] %vm416, %v378
        %426 = vst.msk [vmem:[%s198 + $0x48] sm:$0xff] %vm416, %v383
        %427 = vst.msk [vmem:[%s198 + $0x50] sm:$0xff] %vm416, %v388
        %428 = vst.msk [vmem:[%s198 + $0x58] sm:$0xff] %vm416, %v393
        %429 = vst.msk [vmem:[%s198 + $0x60] sm:$0xff] %vm416, %v398
        %430 = vst.msk [vmem:[%s198 + $0x68] sm:$0xff] %vm416, %v403
        %431 = vst.msk [vmem:[%s198 + $0x70] sm:$0xff] %vm416, %v408
        %432 = vst.msk [vmem:[%s198 + $0x78] sm:$0xff] %vm416, %v413
        %v433 = vsel %vm416, %v338, 0.0
        %v434 = vsel %vm416, %v343, 0.0
        %v435 = vadd.f32 %v433, %v434
        %v436 = vsel %vm416, %v348, 0.0
        %v437 = vadd.f32 %v435, %v436
        %v438 = vsel %vm416, %v353, 0.0
        %v439 = vadd.f32 %v437, %v438
        %v440 = vsel %vm416, %v358, 0.0
        %v441 = vadd.f32 %v439, %v440
        %v442 = vsel %vm416, %v363, 0.0
        %v443 = vadd.f32 %v441, %v442
        %v444 = vsel %vm416, %v368, 0.0
        %v445 = vadd.f32 %v443, %v444
        %v446 = vsel %vm416, %v373, 0.0
        %v447 = vadd.f32 %v445, %v446
        %v448 = vsel %vm416, %v378, 0.0
        %v449 = vadd.f32 %v447, %v448
        %v450 = vsel %vm416, %v383, 0.0
        %v451 = vadd.f32 %v449, %v450
        %v452 = vsel %vm416, %v388, 0.0
        %v453 = vadd.f32 %v451, %v452
        %v454 = vsel %vm416, %v393, 0.0
        %v455 = vadd.f32 %v453, %v454
        %v456 = vsel %vm416, %v398, 0.0
        %v457 = vadd.f32 %v455, %v456
        %v458 = vsel %vm416, %v403, 0.0
        %v459 = vadd.f32 %v457, %v458
        %v460 = vsel %vm416, %v408, 0.0
        %v461 = vadd.f32 %v459, %v460
        %v462 = vsel %vm416, %v413, 0.0
        %v463 = vadd.f32 %v461, %v462
        %v464 = vrot.slane %v463, 4
        %v465 = vadd.f32 %v463, %v464
        %v466 = vrot.slane %v465, 2
        %v467 = vadd.f32 %v465, %v466
        %v468 = vrot.slane %v467, 1
        %v469 = vadd.f32 %v467, %v468
        %v470 = vmul.f32 %v338, %v338
        %v471 = vmul.f32 %v343, %v343
        %v472 = vmul.f32 %v348, %v348
        %v473 = vmul.f32 %v353, %v353
        %v474 = vmul.f32 %v358, %v358
        %v475 = vmul.f32 %v363, %v363
        %v476 = vmul.f32 %v368, %v368
        %v477 = vmul.f32 %v373, %v373
        %v478 = vmul.f32 %v378, %v378
        %v479 = vmul.f32 %v383, %v383
        %v480 = vmul.f32 %v388, %v388
        %v481 = vmul.f32 %v393, %v393
        %v482 = vmul.f32 %v398, %v398
        %v483 = vmul.f32 %v403, %v403
        %v484 = vmul.f32 %v408, %v408
        %v485 = vmul.f32 %v413, %v413
        %v486 = vsel %vm416, %v470, 0.0
        %v487 = vsel %vm416, %v471, 0.0
        %v488 = vadd.f32 %v486, %v487
        %v489 = vsel %vm416, %v472, 0.0
        %v490 = vadd.f32 %v488, %v489
        %v491 = vsel %vm416, %v473, 0.0
        %v492 = vadd.f32 %v490, %v491
        %v493 = vsel %vm416, %v474, 0.0
        %v494 = vadd.f32 %v492, %v493
        %v495 = vsel %vm416, %v475, 0.0
        %v496 = vadd.f32 %v494, %v495
        %v497 = vsel %vm416, %v476, 0.0
        %v498 = vadd.f32 %v496, %v497
        %v499 = vsel %vm416, %v477, 0.0
        %v500 = vadd.f32 %v498, %v499
        %v501 = vsel %vm416, %v478, 0.0
        %v502 = vadd.f32 %v500, %v501
        %v503 = vsel %vm416, %v479, 0.0
        %v504 = vadd.f32 %v502, %v503
        %v505 = vsel %vm416, %v480, 0.0
        %v506 = vadd.f32 %v504, %v505
        %v507 = vsel %vm416, %v481, 0.0
        %v508 = vadd.f32 %v506, %v507
        %v509 = vsel %vm416, %v482, 0.0
        %v510 = vadd.f32 %v508, %v509
        %v511 = vsel %vm416, %v483, 0.0
        %v512 = vadd.f32 %v510, %v511
        %v513 = vsel %vm416, %v484, 0.0
        %v514 = vadd.f32 %v512, %v513
        %v515 = vsel %vm416, %v485, 0.0
        %v516 = vadd.f32 %v514, %v515
        %v517 = vrot.slane %v516, 4
        %v518 = vadd.f32 %v516, %v517
        %v519 = vrot.slane %v518, 2
        %v520 = vadd.f32 %v518, %v519
        %v521 = vrot.slane %v520, 1
        %v522 = vadd.f32 %v520, %v521
        %vm523 = vcmask 1040384
        %v524 = vsel %vm523, %v469, %v522
        %vm525 = vcmask 25600
        %526 = vst.msk [vmem:[%s203] sm:$0x3] %vm525, %v524
        %s527 = smul.u32 16, %s18
        %p528 = scmp.lt.s32.totalorder %s527, 63
        %s529 = scalar_select %p528, %s527, 63
        %s530 = smul.addr %s529, 8
        %s531 = scalar_lea.vmem %s2, %s530
        %p532 = scmp.lt.s32.totalorder %s18, 3
        %s533 = scalar_select %p532, %s18, 3
        %s534 = smul.addr %s533, 2
        %s535 = scalar_lea.vmem %s3, %s534
        // Predicated region
        $region33: #{bottleneck_forward.4} parent=27 // pred_check
          %p536 = pneg %p83
        $region34: #{bottleneck_forward.4} parent=27 // pred_check_branch
          %538 = sbr.rel (%p536) target = $region36
        $region35: #{bottleneck_forward.4} parent=27 // pred_region
          %s539 = smul.u32 16, %s18
        $region36: #{bottleneck_forward.4} parent=27 // pred_fallthru
          _
        // Predicated region
        $region37: #{bottleneck_forward.4} parent=27 // pred_check
          %p540 = pneg %p109
        $region38: #{bottleneck_forward.4} parent=27 // pred_check_branch
          %542 = sbr.rel (%p540) target = $region40
        $region39: #{bottleneck_forward.4} parent=27 // pred_region
          _
        $region40: #{bottleneck_forward.4} parent=27 // pred_fallthru
          _
      $region28: #{bottleneck_forward.4} parent=5 // pred_fallthru
        _
      %p543 = scmp.le.s32.totalorder 2, %s13
      // Predicated region
      $region41: #{bottleneck_forward.4} parent=5 // pred_check
        %p544 = pneg %p543
      $region42: #{bottleneck_forward.4} parent=5 // pred_check_branch
        %546 = sbr.rel (%p544) target = $region44
      $region43: #{bottleneck_forward.4} parent=5 // pred_region
        %s547 = ssub.s32 %s13, 2
        // Predicated region
        $region45: #{bottleneck_forward.4} parent=43 // pred_check
          %p548 = pneg %p89
        $region46: #{bottleneck_forward.4} parent=43 // pred_check_branch
          %550 = sbr.rel (%p548) target = $region48
        $region47: #{bottleneck_forward.4} parent=43 // pred_region
          %s551 = smul.u32 16, %s19
          %p552 = scmp.lt.s32.totalorder %s551, 63
          %s553 = scalar_select %p552, %s551, 63
          %s554 = smul.addr %s553, 8
          %s555 = scalar_lea.vmem %s2, %s554
        $region48: #{bottleneck_forward.4} parent=43 // pred_fallthru
          _
        // Predicated region
        $region49: #{bottleneck_forward.4} parent=43 // pred_check
          %p556 = pneg %p115
        $region50: #{bottleneck_forward.4} parent=43 // pred_check_branch
          %558 = sbr.rel (%p556) target = $region52
        $region51: #{bottleneck_forward.4} parent=43 // pred_region
          %p559 = scmp.lt.s32.totalorder %s19, 3
          %s560 = scalar_select %p559, %s19, 3
          %s561 = smul.addr %s560, 2
          %s562 = scalar_lea.vmem %s3, %s561
        $region52: #{bottleneck_forward.4} parent=43 // pred_fallthru
          _
      $region44: #{bottleneck_forward.4} parent=5 // pred_fallthru
        _
    $region6: #{bottleneck_forward.4} parent=1 // loop_footer
      %s17 = sadd.s32 1, %s13
    $region7: #{bottleneck_forward.4} parent=1 // loop_footer_branch
      %12 = sbr.rel target = $region3
    $region8: #{bottleneck_forward.4} parent=1 // loop_exit
      _
    %563 = vsyncpa [#allocation3], 1
    %s564 = scalar_lea.sflag [#allocation3], 1
    %565 = vsyncpa %s564, 1

// kernel: bottleneck_forward.7
$region0: #{bottleneck_forward.7}
  #allocation0 [shape = 'u32[]', space=smem, size = 0x4, offset = 0x4, fixed_abs, tag = 'smem constant byte address 0x4 - core index']
  #allocation1 [shape = 'u32[144,128]{1,0:T(1,128)}', space=vmem, size = 0x12000, scoped, tag = 'internal scratch']
  %s0 = inlined_call_operand.vmem [shape: f32[512,4], index: 0, kind: input, shape index: {}]
  %s1 = inlined_call_operand.vmem [shape: f32[512,16], index: 1, kind: input, shape index: {}]
  %s2 = inlined_call_operand.vmem [shape: f32[1,4], index: 2, kind: input, shape index: {}]
  %s3 = inlined_call_operand.vmem [shape: f32[1,4], index: 3, kind: input, shape index: {}]
  %s4 = inlined_call_operand.vmem [shape: f32[4,16], index: 4, kind: input, shape index: {}]
  %s5 = inlined_call_operand.vmem [shape: f32[1,16], index: 5, kind: input, shape index: {}]
  %s6 = inlined_call_operand.vmem [shape: f32[1,16], index: 6, kind: input, shape index: {}]
  %s7 = inlined_call_operand.hbm [shape: f32[512,16], index: 7, kind: output, shape index: {}]
  %s8 = sld [smem:[#allocation0]]
  $region61: #{bottleneck_forward.7} parent=0
    _
  %s10 = ssub.s32 1, %s8
  %s11 = scalar_select 0, %s10, %s8
  $region1: #{bottleneck_forward.7} parent=0
    #allocation2 [shape = 'u8[131072]{0}', space=vmem, size = 0x20000, scoped, tag = 'output window, operand 0']
    #allocation3 [shape = 's32[2]{0}', space=sflag, size = 0x8, scoped, tag = 'scoped memory for bottleneck_forward.7']
    %12 = vsyncpa [#allocation3], 0
    %s13 = scalar_lea.sflag [#allocation3], 1
    %14 = vsyncpa %s13, 0
    loop: start=0, step=1, limit=6
    $region2: #{bottleneck_forward.7} parent=1 // loop_pre_header
      _
    $region3: #{bottleneck_forward.7} parent=1 // loop_header
      %s16 = sphi 0, %s20
      %p17 = scmp.ge.s32.totalorder %s16, 6
      %s26 = sphi 0, %s28
      %s29 = sphi 0, %s26
      %s30 = sphi 0, %s29
      %s46 = sphi 0, %s30
      %s52 = sphi 0, %s54
      %s55 = sphi 0, %s52
      %s56 = sphi 0, %s55
      %s72 = sphi 0, %s56
      %s76 = sphi 0, %s76
      %s78 = sphi 0, %s76
      %s79 = sphi 0, %s78
      %s93 = sphi 0, %s79
      %s97 = sphi 0, %s97
      %s99 = sphi 0, %s97
      %s100 = sphi 0, %s99
      %s114 = sphi 0, %s100
      %s118 = sphi 0, %s118
      %s120 = sphi 0, %s118
      %s121 = sphi 0, %s120
      %s135 = sphi 0, %s121
      %s139 = sphi 0, %s139
      %s141 = sphi 0, %s139
      %s142 = sphi 0, %s141
      %s156 = sphi 0, %s142
      %s160 = sphi 0, %s160
      %s162 = sphi 0, %s160
      %s163 = sphi 0, %s162
      %s177 = sphi 0, %s163
      %s183 = sphi 0, %s185
      %s186 = sphi 0, %s183
      %s187 = sphi 0, %s186
      %s203 = sphi 0, %s187
    $region4: #{bottleneck_forward.7} parent=1 // loop_header_branch
      %19 = sbr.rel (%p17) target = $region8
    $region5: #{bottleneck_forward.7} parent=1 // loop_body
      %s21 = ssub.s32 %s16, 1
      %s22 = ssub.s32 %s16, 2
      %s23 = sadd.s32 %s16, 1
      %s24 = ssub.s32 %s16, %s23
      %p25 = scmp.eq.s32.totalorder %s24, 0
      %s27 = sadd.s32 %s26, 1
      %s28 = scalar_select %p25, %s26, %s27
      %p31 = pneg %p25
      %p32 = scmp.eq.s32.totalorder %s16, 3
      %p33 = por %p31, %p32
      %p34 = scmp.ne.s32.totalorder %s26, %s29
      %p35 = scmp.eq.s32.totalorder %s16, 0
      %p36 = por %p34, %p35
      %p37 = scmp.ne.s32.totalorder %s26, %s29
      %p38 = scmp.eq.s32.totalorder %s21, 3
      %p39 = por %p37, %p38
      %p40 = scmp.ne.s32.totalorder %s29, %s30
      %p41 = scmp.eq.s32.totalorder %s21, 0
      %p42 = por %p40, %p41
      %p43 = scmp.ne.s32.totalorder %s29, %s30
      %p44 = scmp.eq.s32.totalorder %s22, 3
      %p45 = por %p43, %p44
      %p47 = scmp.ne.s32.totalorder %s30, %s46
      %p48 = scmp.eq.s32.totalorder %s22, 0
      %p49 = por %p47, %p48
      %s50 = ssub.s32 %s16, %s23
      %p51 = scmp.eq.s32.totalorder %s50, 0
      %s53 = sadd.s32 %s52, 1
      %s54 = scalar_select %p51, %s52, %s53
      %p57 = pneg %p51
      %p58 = scmp.eq.s32.totalorder %s16, 3
      %p59 = por %p57, %p58
      %p60 = scmp.ne.s32.totalorder %s52, %s55
      %p61 = scmp.eq.s32.totalorder %s16, 0
      %p62 = por %p60, %p61
      %p63 = scmp.ne.s32.totalorder %s52, %s55
      %p64 = scmp.eq.s32.totalorder %s21, 3
      %p65 = por %p63, %p64
      %p66 = scmp.ne.s32.totalorder %s55, %s56
      %p67 = scmp.eq.s32.totalorder %s21, 0
      %p68 = por %p66, %p67
      %p69 = scmp.ne.s32.totalorder %s55, %s56
      %p70 = scmp.eq.s32.totalorder %s22, 3
      %p71 = por %p69, %p70
      %p73 = scmp.ne.s32.totalorder %s56, %s72
      %p74 = scmp.eq.s32.totalorder %s22, 0
      %p75 = por %p73, %p74
      %s77 = sadd.s32 %s76, 1
      %p80 = scmp.eq.s32.totalorder %s16, 3
      %p81 = scmp.ne.s32.totalorder %s76, %s78
      %p82 = scmp.eq.s32.totalorder %s16, 0
      %p83 = por %p81, %p82
      %p84 = scmp.ne.s32.totalorder %s76, %s78
      %p85 = scmp.eq.s32.totalorder %s21, 3
      %p86 = por %p84, %p85
      %p87 = scmp.ne.s32.totalorder %s78, %s79
      %p88 = scmp.eq.s32.totalorder %s21, 0
      %p89 = por %p87, %p88
      %p90 = scmp.ne.s32.totalorder %s78, %s79
      %p91 = scmp.eq.s32.totalorder %s22, 3
      %p92 = por %p90, %p91
      %p94 = scmp.ne.s32.totalorder %s79, %s93
      %p95 = scmp.eq.s32.totalorder %s22, 0
      %p96 = por %p94, %p95
      %s98 = sadd.s32 %s97, 1
      %p101 = scmp.eq.s32.totalorder %s16, 3
      %p102 = scmp.ne.s32.totalorder %s97, %s99
      %p103 = scmp.eq.s32.totalorder %s16, 0
      %p104 = por %p102, %p103
      %p105 = scmp.ne.s32.totalorder %s97, %s99
      %p106 = scmp.eq.s32.totalorder %s21, 3
      %p107 = por %p105, %p106
      %p108 = scmp.ne.s32.totalorder %s99, %s100
      %p109 = scmp.eq.s32.totalorder %s21, 0
      %p110 = por %p108, %p109
      %p111 = scmp.ne.s32.totalorder %s99, %s100
      %p112 = scmp.eq.s32.totalorder %s22, 3
      %p113 = por %p111, %p112
      %p115 = scmp.ne.s32.totalorder %s100, %s114
      %p116 = scmp.eq.s32.totalorder %s22, 0
      %p117 = por %p115, %p116
      %s119 = sadd.s32 %s118, 1
      %p122 = scmp.eq.s32.totalorder %s16, 3
      %p123 = scmp.ne.s32.totalorder %s118, %s120
      %p124 = scmp.eq.s32.totalorder %s16, 0
      %p125 = por %p123, %p124
      %p126 = scmp.ne.s32.totalorder %s118, %s120
      %p127 = scmp.eq.s32.totalorder %s21, 3
      %p128 = por %p126, %p127
      %p129 = scmp.ne.s32.totalorder %s120, %s121
      %p130 = scmp.eq.s32.totalorder %s21, 0
      %p131 = por %p129, %p130
      %p132 = scmp.ne.s32.totalorder %s120, %s121
      %p133 = scmp.eq.s32.totalorder %s22, 3
      %p134 = por %p132, %p133
      %p136 = scmp.ne.s32.totalorder %s121, %s135
      %p137 = scmp.eq.s32.totalorder %s22, 0
      %p138 = por %p136, %p137
      %s140 = sadd.s32 %s139, 1
      %p143 = scmp.eq.s32.totalorder %s16, 3
      %p144 = scmp.ne.s32.totalorder %s139, %s141
      %p145 = scmp.eq.s32.totalorder %s16, 0
      %p146 = por %p144, %p145
      %p147 = scmp.ne.s32.totalorder %s139, %s141
      %p148 = scmp.eq.s32.totalorder %s21, 3
      %p149 = por %p147, %p148
      %p150 = scmp.ne.s32.totalorder %s141, %s142
      %p151 = scmp.eq.s32.totalorder %s21, 0
      %p152 = por %p150, %p151
      %p153 = scmp.ne.s32.totalorder %s141, %s142
      %p154 = scmp.eq.s32.totalorder %s22, 3
      %p155 = por %p153, %p154
      %p157 = scmp.ne.s32.totalorder %s142, %s156
      %p158 = scmp.eq.s32.totalorder %s22, 0
      %p159 = por %p157, %p158
      %s161 = sadd.s32 %s160, 1
      %p164 = scmp.eq.s32.totalorder %s16, 3
      %p165 = scmp.ne.s32.totalorder %s160, %s162
      %p166 = scmp.eq.s32.totalorder %s16, 0
      %p167 = por %p165, %p166
      %p168 = scmp.ne.s32.totalorder %s160, %s162
      %p169 = scmp.eq.s32.totalorder %s21, 3
      %p170 = por %p168, %p169
      %p171 = scmp.ne.s32.totalorder %s162, %s163
      %p172 = scmp.eq.s32.totalorder %s21, 0
      %p173 = por %p171, %p172
      %p174 = scmp.ne.s32.totalorder %s162, %s163
      %p175 = scmp.eq.s32.totalorder %s22, 3
      %p176 = por %p174, %p175
      %p178 = scmp.ne.s32.totalorder %s163, %s177
      %p179 = scmp.eq.s32.totalorder %s22, 0
      %p180 = por %p178, %p179
      %s181 = ssub.s32 %s16, %s23
      %p182 = scmp.eq.s32.totalorder %s181, 0
      %s184 = sadd.s32 %s183, 1
      %s185 = scalar_select %p182, %s183, %s184
      %p188 = pneg %p182
      %p189 = scmp.eq.s32.totalorder %s16, 3
      %p190 = por %p188, %p189
      %p191 = scmp.ne.s32.totalorder %s183, %s186
      %p192 = scmp.eq.s32.totalorder %s16, 0
      %p193 = por %p191, %p192
      %p194 = scmp.ne.s32.totalorder %s183, %s186
      %p195 = scmp.eq.s32.totalorder %s21, 3
      %p196 = por %p194, %p195
      %p197 = scmp.ne.s32.totalorder %s186, %s187
      %p198 = scmp.eq.s32.totalorder %s21, 0
      %p199 = por %p197, %p198
      %p200 = scmp.ne.s32.totalorder %s186, %s187
      %p201 = scmp.eq.s32.totalorder %s22, 3
      %p202 = por %p200, %p201
      %p204 = scmp.ne.s32.totalorder %s187, %s203
      %p205 = scmp.eq.s32.totalorder %s22, 0
      %p206 = por %p204, %p205
      %p207 = scmp.le.s32.totalorder 1, %s16
      %p208 = scmp.lt.s32.totalorder %s16, 5
      %p209 = pnand %p207, %p208
      %p210 = pneg %p209
      // Predicated region
      $region9: #{bottleneck_forward.7} parent=5 // pred_check
        _
      $region10: #{bottleneck_forward.7} parent=5 // pred_check_branch
        %212 = sbr.rel (%p209) target = $region12
      $region11: #{bottleneck_forward.7} parent=5 // pred_region
        %s213 = ssub.s32 %s16, 1
        // Predicated region
        $region13: #{bottleneck_forward.7} parent=11 // pred_check
          %p214 = pneg %p89
        $region14: #{bottleneck_forward.7} parent=11 // pred_check_branch
          %216 = sbr.rel (%p214) target = $region16
        $region15: #{bottleneck_forward.7} parent=11 // pred_region
          _
        $region16: #{bottleneck_forward.7} parent=11 // pred_fallthru
          _
        // Predicated region
        $region17: #{bottleneck_forward.7} parent=11 // pred_check
          %p217 = pneg %p110
        $region18: #{bottleneck_forward.7} parent=11 // pred_check_branch
          %219 = sbr.rel (%p217) target = $region20
        $region19: #{bottleneck_forward.7} parent=11 // pred_region
          _
        $region20: #{bottleneck_forward.7} parent=11 // pred_fallthru
          _
        // Predicated region
        $region21: #{bottleneck_forward.7} parent=11 // pred_check
          %p220 = pneg %p131
        $region22: #{bottleneck_forward.7} parent=11 // pred_check_branch
          %222 = sbr.rel (%p220) target = $region24
        $region23: #{bottleneck_forward.7} parent=11 // pred_region
          _
        $region24: #{bottleneck_forward.7} parent=11 // pred_fallthru
          _
        // Predicated region
        $region25: #{bottleneck_forward.7} parent=11 // pred_check
          %p223 = pneg %p152
        $region26: #{bottleneck_forward.7} parent=11 // pred_check_branch
          %225 = sbr.rel (%p223) target = $region28
        $region27: #{bottleneck_forward.7} parent=11 // pred_region
          _
        $region28: #{bottleneck_forward.7} parent=11 // pred_fallthru
          _
        // Predicated region
        $region29: #{bottleneck_forward.7} parent=11 // pred_check
          %p226 = pneg %p173
        $region30: #{bottleneck_forward.7} parent=11 // pred_check_branch
          %228 = sbr.rel (%p226) target = $region32
        $region31: #{bottleneck_forward.7} parent=11 // pred_region
          _
        $region32: #{bottleneck_forward.7} parent=11 // pred_fallthru
          _
      $region12: #{bottleneck_forward.7} parent=5 // pred_fallthru
        _
      %p229 = scmp.lt.s32.totalorder %s16, 4
      // Predicated region
      $region33: #{bottleneck_forward.7} parent=5 // pred_check
        %p230 = pneg %p229
      $region34: #{bottleneck_forward.7} parent=5 // pred_check_branch
        %232 = sbr.rel (%p230) target = $region36
      $region35: #{bottleneck_forward.7} parent=5 // pred_region
        // Predicated region
        $region37: #{bottleneck_forward.7} parent=35 // pred_check
          %p233 = pneg %p36
        $region38: #{bottleneck_forward.7} parent=35 // pred_check_branch
          %235 = sbr.rel (%p233) target = $region40
        $region39: #{bottleneck_forward.7} parent=35 // pred_region
          %s236 = smul.u32 16, %s16
          %p237 = scmp.lt.s32.totalorder %s236, 63
          %s238 = scalar_select %p237, %s236, 63
          %s239 = smul.addr %s238, 8
          %s240 = scalar_lea.vmem %s0, %s239
          %s241 = smul.u32 16, %s16
        $region40: #{bottleneck_forward.7} parent=35 // pred_fallthru
          _
        // Predicated region
        $region41: #{bottleneck_forward.7} parent=35 // pred_check
          %p242 = pneg %p62
        $region42: #{bottleneck_forward.7} parent=35 // pred_check_branch
          %244 = sbr.rel (%p242) target = $region44
        $region43: #{bottleneck_forward.7} parent=35 // pred_region
          %s245 = smul.u32 16, %s16
          %p246 = scmp.lt.s32.totalorder %s245, 63
          %s247 = scalar_select %p246, %s245, 63
          %s248 = smul.addr %s247, 8
          %s249 = scalar_lea.vmem %s1, %s248
          %s250 = smul.u32 16, %s16
        $region44: #{bottleneck_forward.7} parent=35 // pred_fallthru
          _
      $region36: #{bottleneck_forward.7} parent=5 // pred_fallthru
        _
      %p251 = scmp.le.s32.totalorder 1, %s16
      %p252 = scmp.lt.s32.totalorder %s16, 5
      %p253 = pnand %p251, %p252
      %p254 = pneg %p253
      // Predicated region
      $region45: #{bottleneck_forward.7} parent=5 // pred_check
        _
      $region46: #{bottleneck_forward.7} parent=5 // pred_check_branch
        %256 = sbr.rel (%p253) target = $region48
      $region47: #{bottleneck_forward.7} parent=5 // pred_region
        %s257 = ssub.s32 %s16, 1
        %s258 = smul.u32 16, %s21
        %p259 = scmp.lt.s32.totalorder %s258, 63
        %s260 = scalar_select %p259, %s258, 63
        %s261 = smul.addr %s260, 8
        %s262 = scalar_lea.vmem %s0, %s261
        %p263 = pneg %p42
        %p264 = pneg %p39
        %s265 = smul.u32 16, %s21
        %p266 = scmp.lt.s32.totalorder %s265, 63
        %s267 = scalar_select %p266, %s265, 63
        %s268 = smul.addr %s267, 8
        %s269 = scalar_lea.vmem %s1, %s268
        %p270 = pneg %p68
        %p271 = pneg %p65
        %p272 = pneg %p89
        %p273 = pneg %p86
        %p274 = pneg %p110
        %p275 = pneg %p107
        %p276 = pneg %p131
        %p277 = pneg %p128
        %p278 = pneg %p152
        %p279 = pneg %p149
        %p280 = pneg %p173
        %p281 = pneg %p170
        %p282 = pneg %p199
        %p283 = pneg %p196
        %s284 = sand.u32 %s186, 1
        %s285 = scalar_lea.sflag [#allocation3], %s284
        %s286 = sand.u32 %s186, 1
        %s287 = smul.addr %s286, 128
        %s288 = scalar_lea.vmem [#allocation2], %s287
        %s289 = smul.u32 16, %s21
        %p290 = scmp.lt.s32.totalorder %s289, 63
        %s291 = scalar_select %p290, %s289, 63
        %s292 = smul.addr %s291, 8
        %s293 = scalar_lea.vmem %s0, %s292
        %s294 = smul.u32 16, %s21
        %s295 = smul.u32 16, %s21
        %p296 = scmp.lt.s32.totalorder %s295, 63
        %s297 = scalar_select %p296, %s295, 63
        %s298 = smul.addr %s297, 8
        %s299 = scalar_lea.vmem %s1, %s298
        %s300 = smul.u32 16, %s21
        %s301 = smul.u32 16, %s21
        %v302 = vld [vmem:[%s293] sm:$0xff]
        %v303 = vld [vmem:[%s293 + $0x8] sm:$0xff]
        %v304 = vld [vmem:[%s293 + $0x10] sm:$0xff]
        %v305 = vld [vmem:[%s293 + $0x18] sm:$0xff]
        %v306 = vld [vmem:[%s293 + $0x20] sm:$0xff]
        %v307 = vld [vmem:[%s293 + $0x28] sm:$0xff]
        %v308 = vld [vmem:[%s293 + $0x30] sm:$0xff]
        %v309 = vld [vmem:[%s293 + $0x38] sm:$0xff]
        %v310 = vld [vmem:[%s293 + $0x40] sm:$0xff]
        %v311 = vld [vmem:[%s293 + $0x48] sm:$0xff]
        %v312 = vld [vmem:[%s293 + $0x50] sm:$0xff]
        %v313 = vld [vmem:[%s293 + $0x58] sm:$0xff]
        %v314 = vld [vmem:[%s293 + $0x60] sm:$0xff]
        %v315 = vld [vmem:[%s293 + $0x68] sm:$0xff]
        %v316 = vld [vmem:[%s293 + $0x70] sm:$0xff]
        %v317 = vld [vmem:[%s293 + $0x78] sm:$0xff]
        %v318 = vld [vmem:[%s2] sm:$0x1]
        %v320 = vlaneseq
        %v321 = vshrl.u32 %v320, 7
        %v322 = vsub.s32 0, %v321
        %v323 = vrot.slane %v318, %v322
        %v325 = vmul.f32 %v302, %v323
        %v326 = vmul.f32 %v303, %v323
        %v327 = vmul.f32 %v304, %v323
        %v328 = vmul.f32 %v305, %v323
        %v329 = vmul.f32 %v306, %v323
        %v330 = vmul.f32 %v307, %v323
        %v331 = vmul.f32 %v308, %v323
        %v332 = vmul.f32 %v309, %v323
        %v333 = vmul.f32 %v310, %v323
        %v334 = vmul.f32 %v311, %v323
        %v335 = vmul.f32 %v312, %v323
        %v336 = vmul.f32 %v313, %v323
        %v337 = vmul.f32 %v314, %v323
        %v338 = vmul.f32 %v315, %v323
        %v339 = vmul.f32 %v316, %v323
        %v340 = vmul.f32 %v317, %v323
        %v341 = vld [vmem:[%s3] sm:$0x1]
        %v343 = vlaneseq
        %v344 = vshrl.u32 %v343, 7
        %v345 = vsub.s32 0, %v344
        %v346 = vrot.slane %v341, %v345
        %v348 = vadd.f32 %v325, %v346
        %v349 = vadd.f32 %v326, %v346
        %v350 = vadd.f32 %v327, %v346
        %v351 = vadd.f32 %v328, %v346
        %v352 = vadd.f32 %v329, %v346
        %v353 = vadd.f32 %v330, %v346
        %v354 = vadd.f32 %v331, %v346
        %v355 = vadd.f32 %v332, %v346
        %v356 = vadd.f32 %v333, %v346
        %v357 = vadd.f32 %v334, %v346
        %v358 = vadd.f32 %v335, %v346
        %v359 = vadd.f32 %v336, %v346
        %v360 = vadd.f32 %v337, %v346
        %v361 = vadd.f32 %v338, %v346
        %v362 = vadd.f32 %v339, %v346
        %v363 = vadd.f32 %v340, %v346
        %v364 = vmax.f32 %v348, 0.0
        %v365 = vmax.f32 %v349, 0.0
        %v366 = vmax.f32 %v350, 0.0
        %v367 = vmax.f32 %v351, 0.0
        %v368 = vmax.f32 %v352, 0.0
        %v369 = vmax.f32 %v353, 0.0
        %v370 = vmax.f32 %v354, 0.0
        %v371 = vmax.f32 %v355, 0.0
        %v372 = vmax.f32 %v356, 0.0
        %v373 = vmax.f32 %v357, 0.0
        %v374 = vmax.f32 %v358, 0.0
        %v375 = vmax.f32 %v359, 0.0
        %v376 = vmax.f32 %v360, 0.0
        %v377 = vmax.f32 %v361, 0.0
        %v378 = vmax.f32 %v362, 0.0
        %v379 = vmax.f32 %v363, 0.0
        %v380 = vld [vmem:[%s4] sm:$0xf]
        %vm381 = vcmask 31744
        %v383 = vsel %vm381, %v364, 0
        %v386 = vsel %vm381, %v365, 0
        %v389 = vsel %vm381, %v366, 0
        %v392 = vsel %vm381, %v367, 0
        %v395 = vsel %vm381, %v368, 0
        %v398 = vsel %vm381, %v369, 0
        %v401 = vsel %vm381, %v370, 0
        %v404 = vsel %vm381, %v371, 0
        %v407 = vsel %vm381, %v372, 0
        %v410 = vsel %vm381, %v373, 0
        %v413 = vsel %vm381, %v374, 0
        %v416 = vsel %vm381, %v375, 0
        %v419 = vsel %vm381, %v376, 0
        %v422 = vsel %vm381, %v377, 0
        %v425 = vsel %vm381, %v378, 0
        %v428 = vsel %vm381, %v379, 0
        %vm430 = vcmask 1043456
        %v432 = vsel %vm430, %v380, 0
        %434 = vmatprep.subr.mxu0 0.0
        %435 = vmatpush1.msra.mxu0 %v432
        %436 = vmatprep.subr.mxu0 0.0
        %437 = vmatpush1.msra.mxu0 0.0
        %438 = vmatprep.subr.mxu0 0.0
        %439 = vmatpush1.msra.mxu0 0.0
        %440 = vmatprep.subr.mxu0 0.0
        %441 = vmatpush1.msra.mxu0 0.0
        %442 = vmatprep.subr.mxu0 0.0
        %443 = vmatpush1.msra.mxu0 0.0
        %444 = vmatprep.subr.mxu0 0.0
        %445 = vmatpush1.msra.mxu0 0.0
        %446 = vmatprep.subr.mxu0 0.0
        %447 = vmatpush1.msra.mxu0 0.0
        %448 = vmatprep.subr.mxu0 0.0
        %449 = vmatpush1.msra.mxu0 0.0
        %450 = vmatprep.subr.mxu0 0.0
        %451 = vmatpush1.msra.mxu0 0.0
        %452 = vmatprep.subr.mxu0 0.0
        %453 = vmatpush1.msra.mxu0 0.0
        %454 = vmatprep.subr.mxu0 0.0
        %455 = vmatpush1.msra.mxu0 0.0
        %456 = vmatprep.subr.mxu0 0.0
        %457 = vmatpush1.msra.mxu0 0.0
        %458 = vmatprep.subr.mxu0 0.0
        %459 = vmatpush1.msra.mxu0 0.0
        %460 = vmatprep.subr.mxu0 0.0
        %461 = vmatpush1.msra.mxu0 0.0
        %462 = vmatprep.subr.mxu0 0.0
        %463 = vmatpush1.msra.mxu0 0.0
        %464 = vmatprep.subr.mxu0 0.0
        %465 = vmatpush1.msra.mxu0 0.0
        %466 = vmatprep.subr.mxu0 0.0
        %467 = vmatpush1.msra.mxu0 0.0
        %468 = vmatprep.subr.mxu0 0.0
        %469 = vmatpush1.msra.mxu0 0.0
        %470 = vmatprep.subr.mxu0 0.0
        %471 = vmatpush1.msra.mxu0 0.0
        %472 = vmatprep.subr.mxu0 0.0
        %473 = vmatpush1.msra.mxu0 0.0
        %474 = vmatprep.subr.mxu0 0.0
        %475 = vmatpush1.msra.mxu0 0.0
        %476 = vmatprep.subr.mxu0 0.0
        %477 = vmatpush1.msra.mxu0 0.0
        %478 = vmatprep.subr.mxu0 0.0
        %479 = vmatpush1.msra.mxu0 0.0
        %480 = vmatprep.subr.mxu0 0.0
        %481 = vmatpush1.msra.mxu0 0.0
        %482 = vmatprep.subr.mxu0 0.0
        %483 = vmatpush1.msra.mxu0 0.0
        %484 = vmatprep.subr.mxu0 0.0
        %485 = vmatpush1.msra.mxu0 0.0
        %486 = vmatprep.subr.mxu0 0.0
        %487 = vmatpush1.msra.mxu0 0.0
        %488 = vmatprep.subr.mxu0 0.0
        %489 = vmatpush1.msra.mxu0 0.0
        %490 = vmatprep.subr.mxu0 0.0
        %491 = vmatpush1.msra.mxu0 0.0
        %492 = vmatprep.subr.mxu0 0.0
        %493 = vmatpush1.msra.mxu0 0.0
        %494 = vmatprep.subr.mxu0 0.0
        %495 = vmatpush1.msra.mxu0 0.0
        %496 = vmatprep.subr.mxu0 0.0
        %497 = vmatpush1.msra.mxu0 0.0
        %498 = vmatprep.mubr.f32.mxu0 0.0
        %499 = vmatmul.mubr.f32.gmra.mrb[0].mxu0 %v383
        %v500 = vpop.f32.mrb[0].mxu0
        %v501 = vadd.f32 0.0, %v500
        %v502 = vpop.f32.mrb[0].mxu0
        %503 = vmatprep.mubr.f32.mxu0 0.0
        %504 = vmatmul.mubr.f32.gmra.mrb[0].mxu0 %v386
        %v505 = vpop.f32.mrb[0].mxu0
        %v506 = vadd.f32 0.0, %v505
        %v507 = vpop.f32.mrb[0].mxu0
        %508 = vmatprep.mubr.f32.mxu0 0.0
        %509 = vmatmul.mubr.f32.gmra.mrb[0].mxu0 %v389
        %v510 = vpop.f32.mrb[0].mxu0
        %v511 = vadd.f32 0.0, %v510
        %v512 = vpop.f32.mrb[0].mxu0
        %513 = vmatprep.mubr.f32.mxu0 0.0
        %514 = vmatmul.mubr.f32.gmra.mrb[0].mxu0 %v392
        %v515 = vpop.f32.mrb[0].mxu0
        %v516 = vadd.f32 0.0, %v515
        %v517 = vpop.f32.mrb[0].mxu0
        %518 = vmatprep.mubr.f32.mxu0 0.0
        %519 = vmatmul.mubr.f32.gmra.mrb[0].mxu0 %v395
        %v520 = vpop.f32.mrb[0].mxu0
        %v521 = vadd.f32 0.0, %v520
        %v522 = vpop.f32.mrb[0].mxu0
        %523 = vmatprep.mubr.f32.mxu0 0.0
        %524 = vmatmul.mubr.f32.gmra.mrb[0].mxu0 %v398
        %v525 = vpop.f32.mrb[0].mxu0
        %v526 = vadd.f32 0.0, %v525
        %v527 = vpop.f32.mrb[0].mxu0
        %528 = vmatprep.mubr.f32.mxu0 0.0
        %529 = vmatmul.mubr.f32.gmra.mrb[0].mxu0 %v401
        %v530 = vpop.f32.mrb[0].mxu0
        %v531 = vadd.f32 0.0, %v530
        %v532 = vpop.f32.mrb[0].mxu0
        %533 = vmatprep.mubr.f32.mxu0 0.0
        %534 = vmatmul.mubr.f32.gmra.mrb[0].mxu0 %v404
        %v535 = vpop.f32.mrb[0].mxu0
        %v536 = vadd.f32 0.0, %v535
        %v537 = vpop.f32.mrb[0].mxu0
        %538 = vmatprep.mubr.f32.mxu0 0.0
        %539 = vmatmul.mubr.f32.gmra.mrb[0].mxu0 %v407
        %v540 = vpop.f32.mrb[0].mxu0
        %v541 = vadd.f32 0.0, %v540
        %v542 = vpop.f32.mrb[0].mxu0
        %543 = vmatprep.mubr.f32.mxu0 0.0
        %544 = vmatmul.mubr.f32.gmra.mrb[0].mxu0 %v410
        %v545 = vpop.f32.mrb[0].mxu0
        %v546 = vadd.f32 0.0, %v545
        %v547 = vpop.f32.mrb[0].mxu0
        %548 = vmatprep.mubr.f32.mxu0 0.0
        %549 = vmatmul.mubr.f32.gmra.mrb[0].mxu0 %v413
        %v550 = vpop.f32.mrb[0].mxu0
        %v551 = vadd.f32 0.0, %v550
        %v552 = vpop.f32.mrb[0].mxu0
        %553 = vmatprep.mubr.f32.mxu0 0.0
        %554 = vmatmul.mubr.f32.gmra.mrb[0].mxu0 %v416
        %v555 = vpop.f32.mrb[0].mxu0
        %v556 = vadd.f32 0.0, %v555
        %v557 = vpop.f32.mrb[0].mxu0
        %558 = vmatprep.mubr.f32.mxu0 0.0
        %559 = vmatmul.mubr.f32.gmra.mrb[0].mxu0 %v419
        %v560 = vpop.f32.mrb[0].mxu0
        %v561 = vadd.f32 0.0, %v560
        %v562 = vpop.f32.mrb[0].mxu0
        %563 = vmatprep.mubr.f32.mxu0 0.0
        %564 = vmatmul.mubr.f32.gmra.mrb[0].mxu0 %v422
        %v565 = vpop.f32.mrb[0].mxu0
        %v566 = vadd.f32 0.0, %v565
        %v567 = vpop.f32.mrb[0].mxu0
        %568 = vmatprep.mubr.f32.mxu0 0.0
        %569 = vmatmul.mubr.f32.gmra.mrb[0].mxu0 %v425
        %v570 = vpop.f32.mrb[0].mxu0
        %v571 = vadd.f32 0.0, %v570
        %v572 = vpop.f32.mrb[0].mxu0
        %573 = vmatprep.mubr.f32.mxu0 0.0
        %574 = vmatmul.mubr.f32.gmra.mrb[0].mxu0 %v428
        %v575 = vpop.f32.mrb[0].mxu0
        %v576 = vadd.f32 0.0, %v575
        %v577 = vpop.f32.mrb[0].mxu0
        %578 = vdwg.mxu0
        %v579 = vld [vmem:[%s5] sm:$0x1]
        %v581 = vlaneseq
        %v582 = vshrl.u32 %v581, 7
        %v583 = vsub.s32 0, %v582
        %v584 = vrot.slane %v579, %v583
        %v586 = vmul.f32 %v501, %v584
        %v587 = vmul.f32 %v506, %v584
        %v588 = vmul.f32 %v511, %v584
        %v589 = vmul.f32 %v516, %v584
        %v590 = vmul.f32 %v521, %v584
        %v591 = vmul.f32 %v526, %v584
        %v592 = vmul.f32 %v531, %v584
        %v593 = vmul.f32 %v536, %v584
        %v594 = vmul.f32 %v541, %v584
        %v595 = vmul.f32 %v546, %v584
        %v596 = vmul.f32 %v551, %v584
        %v597 = vmul.f32 %v556, %v584
        %v598 = vmul.f32 %v561, %v584
        %v599 = vmul.f32 %v566, %v584
        %v600 = vmul.f32 %v571, %v584
        %v601 = vmul.f32 %v576, %v584
        %v602 = vld [vmem:[%s6] sm:$0x1]
        %v604 = vlaneseq
        %v605 = vshrl.u32 %v604, 7
        %v606 = vsub.s32 0, %v605
        %v607 = vrot.slane %v602, %v606
        %v609 = vadd.f32 %v586, %v607
        %v610 = vadd.f32 %v587, %v607
        %v611 = vadd.f32 %v588, %v607
        %v612 = vadd.f32 %v589, %v607
        %v613 = vadd.f32 %v590, %v607
        %v614 = vadd.f32 %v591, %v607
        %v615 = vadd.f32 %v592, %v607
        %v616 = vadd.f32 %v593, %v607
        %v617 = vadd.f32 %v594, %v607
        %v618 = vadd.f32 %v595, %v607
        %v619 = vadd.f32 %v596, %v607
        %v620 = vadd.f32 %v597, %v607
        %v621 = vadd.f32 %v598, %v607
        %v622 = vadd.f32 %v599, %v607
        %v623 = vadd.f32 %v600, %v607
        %v624 = vadd.f32 %v601, %v607
        %v625 = vld [vmem:[%s299] sm:$0xff]
        %v626 = vld [vmem:[%s299 + $0x8] sm:$0xff]
        %v627 = vld [vmem:[%s299 + $0x10] sm:$0xff]
        %v628 = vld [vmem:[%s299 + $0x18] sm:$0xff]
        %v629 = vld [vmem:[%s299 + $0x20] sm:$0xff]
        %v630 = vld [vmem:[%s299 + $0x28] sm:$0xff]
        %v631 = vld [vmem:[%s299 + $0x30] sm:$0xff]
        %v632 = vld [vmem:[%s299 + $0x38] sm:$0xff]
        %v633 = vld [vmem:[%s299 + $0x40] sm:$0xff]
        %v634 = vld [vmem:[%s299 + $0x48] sm:$0xff]
        %v635 = vld [vmem:[%s299 + $0x50] sm:$0xff]
        %v636 = vld [vmem:[%s299 + $0x58] sm:$0xff]
        %v637 = vld [vmem:[%s299 + $0x60] sm:$0xff]
        %v638 = vld [vmem:[%s299 + $0x68] sm:$0xff]
        %v639 = vld [vmem:[%s299 + $0x70] sm:$0xff]
        %v640 = vld [vmem:[%s299 + $0x78] sm:$0xff]
        %v641 = vadd.f32 %v609, %v625
        %v642 = vadd.f32 %v610, %v626
        %v643 = vadd.f32 %v611, %v627
        %v644 = vadd.f32 %v612, %v628
        %v645 = vadd.f32 %v613, %v629
        %v646 = vadd.f32 %v614, %v630
        %v647 = vadd.f32 %v615, %v631
        %v648 = vadd.f32 %v616, %v632
        %v649 = vadd.f32 %v617, %v633
        %v650 = vadd.f32 %v618, %v634
        %v651 = vadd.f32 %v619, %v635
        %v652 = vadd.f32 %v620, %v636
        %v653 = vadd.f32 %v621, %v637
        %v654 = vadd.f32 %v622, %v638
        %v655 = vadd.f32 %v623, %v639
        %v656 = vadd.f32 %v624, %v640
        %v657 = vmax.f32 %v641, 0.0
        %v658 = vmax.f32 %v642, 0.0
        %v659 = vmax.f32 %v643, 0.0
        %v660 = vmax.f32 %v644, 0.0
        %v661 = vmax.f32 %v645, 0.0
        %v662 = vmax.f32 %v646, 0.0
        %v663 = vmax.f32 %v647, 0.0
        %v664 = vmax.f32 %v648, 0.0
        %v665 = vmax.f32 %v649, 0.0
        %v666 = vmax.f32 %v650, 0.0
        %v667 = vmax.f32 %v651, 0.0
        %v668 = vmax.f32 %v652, 0.0
        %v669 = vmax.f32 %v653, 0.0
        %v670 = vmax.f32 %v654, 0.0
        %v671 = vmax.f32 %v655, 0.0
        %v672 = vmax.f32 %v656, 0.0
        %vm673 = vcmask 130048
        %674 = vst.msk [vmem:[%s288] sm:$0xff] %vm673, %v657
        %675 = vst.msk [vmem:[%s288 + $0x8] sm:$0xff] %vm673, %v658
        %676 = vst.msk [vmem:[%s288 + $0x10] sm:$0xff] %vm673, %v659
        %677 = vst.msk [vmem:[%s288 + $0x18] sm:$0xff] %vm673, %v660
        %678 = vst.msk [vmem:[%s288 + $0x20] sm:$0xff] %vm673, %v661
        %679 = vst.msk [vmem:[%s288 + $0x28] sm:$0xff] %vm673, %v662
        %680 = vst.msk [vmem:[%s288 + $0x30] sm:$0xff] %vm673, %v663
        %681 = vst.msk [vmem:[%s288 + $0x38] sm:$0xff] %vm673, %v664
        %682 = vst.msk [vmem:[%s288 + $0x40] sm:$0xff] %vm673, %v665
        %683 = vst.msk [vmem:[%s288 + $0x48] sm:$0xff] %vm673, %v666
        %684 = vst.msk [vmem:[%s288 + $0x50] sm:$0xff] %vm673, %v667
        %685 = vst.msk [vmem:[%s288 + $0x58] sm:$0xff] %vm673, %v668
        %686 = vst.msk [vmem:[%s288 + $0x60] sm:$0xff] %vm673, %v669
        %687 = vst.msk [vmem:[%s288 + $0x68] sm:$0xff] %vm673, %v670
        %688 = vst.msk [vmem:[%s288 + $0x70] sm:$0xff] %vm673, %v671
        %689 = vst.msk [vmem:[%s288 + $0x78] sm:$0xff] %vm673, %v672
        %s690 = sand.u32 %s186, 1
        %s691 = scalar_lea.sflag [#allocation3], %s690
        %s692 = sand.u32 %s186, 1
        %s693 = smul.addr %s692, 128
        %s694 = scalar_lea.vmem [#allocation2], %s693
        // Predicated region
        $region49: #{bottleneck_forward.7} parent=47 // pred_check
          %p695 = pneg %p196
        $region50: #{bottleneck_forward.7} parent=47 // pred_check_branch
          %697 = sbr.rel (%p695) target = $region52
        $region51: #{bottleneck_forward.7} parent=47 // pred_region
          %s698 = smul.u32 16, %s21
          %s700 = ssub.s32 2048, 2048
          %701 = vsyncadd %s691, %s700
          %s702 = smul.addr %s698, 128
          %s703 = scalar_lea.hbm %s7, %s702
          %s704 = sshll.u32 %s694, 4
          %s705 = int_to_ptr.vmem [resolvable:$true] %s704
          %710 = dma.vmem_to_hbm [thread:$0]  %s705, 2048, %s703, %s691, 128, 128, 8
        $region52: #{bottleneck_forward.7} parent=47 // pred_fallthru
          _
      $region48: #{bottleneck_forward.7} parent=5 // pred_fallthru
        _
      %p711 = scmp.le.s32.totalorder 2, %s16
      // Predicated region
      $region53: #{bottleneck_forward.7} parent=5 // pred_check
        %p712 = pneg %p711
      $region54: #{bottleneck_forward.7} parent=5 // pred_check_branch
        %714 = sbr.rel (%p712) target = $region56
      $region55: #{bottleneck_forward.7} parent=5 // pred_region
        %s715 = ssub.s32 %s16, 2
        // Predicated region
        $region57: #{bottleneck_forward.7} parent=55 // pred_check
          %p716 = pneg %p202
        $region58: #{bottleneck_forward.7} parent=55 // pred_check_branch
          %718 = sbr.rel (%p716) target = $region60
        $region59: #{bottleneck_forward.7} parent=55 // pred_region
          %s719 = sand.u32 %s187, 1
          %s720 = scalar_lea.sflag [#allocation3], %s719
          %s721 = sand.u32 %s187, 1
          %s722 = smul.addr %s721, 128
          %s723 = scalar_lea.vmem [#allocation2], %s722
          %724 = dma.done %s720, 2048
        $region60: #{bottleneck_forward.7} parent=55 // pred_fallthru
          _
      $region56: #{bottleneck_forward.7} parent=5 // pred_fallthru
        _
    $region6: #{bottleneck_forward.7} parent=1 // loop_footer
      %s20 = sadd.s32 1, %s16
    $region7: #{bottleneck_forward.7} parent=1 // loop_footer_branch
      %15 = sbr.rel target = $region3
    $region8: #{bottleneck_forward.7} parent=1 // loop_exit
      _
    %725 = vsyncpa [#allocation3], 1
    %s726 = scalar_lea.sflag [#allocation3], 1
    %727 = vsyncpa %s726, 1

// kernel: bottleneck_forward.5
$region0: #{bottleneck_forward.5}
  #allocation0 [shape = 'u32[]', space=smem, size = 0x4, offset = 0x4, fixed_abs, tag = 'smem constant byte address 0x4 - core index']
  #allocation1 [shape = 'u32[144,128]{1,0:T(1,128)}', space=vmem, size = 0x12000, scoped, tag = 'internal scratch']
  #allocation2 [shape = 'f32[304,4]{1,0:T(8,128)}', space=vmem, size = 0x26000, scoped, tag = 'scratch operand']
  %s0 = inlined_call_operand.vmem [shape: f32[512,4], index: 0, kind: input, shape index: {}]
  %s1 = inlined_call_operand.vmem [shape: f32[1,4], index: 1, kind: input, shape index: {}]
  %s2 = inlined_call_operand.vmem [shape: f32[1,4], index: 2, kind: input, shape index: {}]
  %s3 = inlined_call_operand.vmem [shape: f32[3,12,4], index: 3, kind: input, shape index: {}]
  %s4 = inlined_call_operand.vmem [shape: f32[512,4], index: 4, kind: output, shape index: {0}]
  %s5 = inlined_call_operand.vmem [shape: f32[2,2,4], index: 5, kind: output, shape index: {1}]
  %6 = xla_tuple %s4, %s5
  %s7 = sld [smem:[#allocation0]]
  $region57: #{bottleneck_forward.5} parent=0
    _
  %s9 = ssub.s32 1, %s7
  %s10 = scalar_select 0, %s9, %s7
  loop: start=0, step=1, limit=4
  $region2: #{bottleneck_forward.5} parent=0 // loop_pre_header
    _
  $region3: #{bottleneck_forward.5} parent=0 // loop_header
    %s12 = sphi 0, %s16
    %p13 = scmp.ge.s32.totalorder %s12, 4
    %s22 = sphi 0, %s24
    %s25 = sphi 0, %s22
    %s26 = sphi 0, %s25
    %s42 = sphi 0, %s26
    %s46 = sphi 0, %s46
    %s48 = sphi 0, %s46
    %s49 = sphi 0, %s48
    %s63 = sphi 0, %s49
    %s67 = sphi 0, %s67
    %s69 = sphi 0, %s67
    %s70 = sphi 0, %s69
    %s84 = sphi 0, %s70
    %s88 = sphi 0, %s88
    %s90 = sphi 0, %s88
    %s91 = sphi 0, %s90
    %s105 = sphi 0, %s91
    %s111 = sphi 0, %s113
    %s114 = sphi 0, %s111
    %s115 = sphi 0, %s114
    %s131 = sphi 0, %s115
    %s137 = sphi 0, %s139
    %s140 = sphi 0, %s137
    %s141 = sphi 0, %s140
    %s157 = sphi 0, %s141
  $region4: #{bottleneck_forward.5} parent=0 // loop_header_branch
    %15 = sbr.rel (%p13) target = $region8
  $region5: #{bottleneck_forward.5} parent=0 // loop_body
    %s17 = ssub.s32 %s12, 1
    %s18 = ssub.s32 %s12, 2
    %s19 = sadd.s32 %s12, 1
    %s20 = ssub.s32 %s12, %s19
    %p21 = scmp.eq.s32.totalorder %s20, 0
    %s23 = sadd.s32 %s22, 1
    %s24 = scalar_select %p21, %s22, %s23
    %p27 = pneg %p21
    %p28 = scmp.eq.s32.totalorder %s12, 1
    %p29 = por %p27, %p28
    %p30 = scmp.ne.s32.totalorder %s22, %s25
    %p31 = scmp.eq.s32.totalorder %s12, 0
    %p32 = por %p30, %p31
    %p33 = scmp.ne.s32.totalorder %s22, %s25
    %p34 = scmp.eq.s32.totalorder %s17, 1
    %p35 = por %p33, %p34
    %p36 = scmp.ne.s32.totalorder %s25, %s26
    %p37 = scmp.eq.s32.totalorder %s17, 0
    %p38 = por %p36, %p37
    %p39 = scmp.ne.s32.totalorder %s25, %s26
    %p40 = scmp.eq.s32.totalorder %s18, 1
    %p41 = por %p39, %p40
    %p43 = scmp.ne.s32.totalorder %s26, %s42
    %p44 = scmp.eq.s32.totalorder %s18, 0
    %p45 = por %p43, %p44
    %s47 = sadd.s32 %s46, 1
    %p50 = scmp.eq.s32.totalorder %s12, 1
    %p51 = scmp.ne.s32.totalorder %s46, %s48
    %p52 = scmp.eq.s32.totalorder %s12, 0
    %p53 = por %p51, %p52
    %p54 = scmp.ne.s32.totalorder %s46, %s48
    %p55 = scmp.eq.s32.totalorder %s17, 1
    %p56 = por %p54, %p55
    %p57 = scmp.ne.s32.totalorder %s48, %s49
    %p58 = scmp.eq.s32.totalorder %s17, 0
    %p59 = por %p57, %p58
    %p60 = scmp.ne.s32.totalorder %s48, %s49
    %p61 = scmp.eq.s32.totalorder %s18, 1
    %p62 = por %p60, %p61
    %p64 = scmp.ne.s32.totalorder %s49, %s63
    %p65 = scmp.eq.s32.totalorder %s18, 0
    %p66 = por %p64, %p65
    %s68 = sadd.s32 %s67, 1
    %p71 = scmp.eq.s32.totalorder %s12, 1
    %p72 = scmp.ne.s32.totalorder %s67, %s69
    %p73 = scmp.eq.s32.totalorder %s12, 0
    %p74 = por %p72, %p73
    %p75 = scmp.ne.s32.totalorder %s67, %s69
    %p76 = scmp.eq.s32.totalorder %s17, 1
    %p77 = por %p75, %p76
    %p78 = scmp.ne.s32.totalorder %s69, %s70
    %p79 = scmp.eq.s32.totalorder %s17, 0
    %p80 = por %p78, %p79
    %p81 = scmp.ne.s32.totalorder %s69, %s70
    %p82 = scmp.eq.s32.totalorder %s18, 1
    %p83 = por %p81, %p82
    %p85 = scmp.ne.s32.totalorder %s70, %s84
    %p86 = scmp.eq.s32.totalorder %s18, 0
    %p87 = por %p85, %p86
    %s89 = sadd.s32 %s88, 1
    %p92 = scmp.eq.s32.totalorder %s12, 1
    %p93 = scmp.ne.s32.totalorder %s88, %s90
    %p94 = scmp.eq.s32.totalorder %s12, 0
    %p95 = por %p93, %p94
    %p96 = scmp.ne.s32.totalorder %s88, %s90
    %p97 = scmp.eq.s32.totalorder %s17, 1
    %p98 = por %p96, %p97
    %p99 = scmp.ne.s32.totalorder %s90, %s91
    %p100 = scmp.eq.s32.totalorder %s17, 0
    %p101 = por %p99, %p100
    %p102 = scmp.ne.s32.totalorder %s90, %s91
    %p103 = scmp.eq.s32.totalorder %s18, 1
    %p104 = por %p102, %p103
    %p106 = scmp.ne.s32.totalorder %s91, %s105
    %p107 = scmp.eq.s32.totalorder %s18, 0
    %p108 = por %p106, %p107
    %s109 = ssub.s32 %s12, %s19
    %p110 = scmp.eq.s32.totalorder %s109, 0
    %s112 = sadd.s32 %s111, 1
    %s113 = scalar_select %p110, %s111, %s112
    %p116 = pneg %p110
    %p117 = scmp.eq.s32.totalorder %s12, 1
    %p118 = por %p116, %p117
    %p119 = scmp.ne.s32.totalorder %s111, %s114
    %p120 = scmp.eq.s32.totalorder %s12, 0
    %p121 = por %p119, %p120
    %p122 = scmp.ne.s32.totalorder %s111, %s114
    %p123 = scmp.eq.s32.totalorder %s17, 1
    %p124 = por %p122, %p123
    %p125 = scmp.ne.s32.totalorder %s114, %s115
    %p126 = scmp.eq.s32.totalorder %s17, 0
    %p127 = por %p125, %p126
    %p128 = scmp.ne.s32.totalorder %s114, %s115
    %p129 = scmp.eq.s32.totalorder %s18, 1
    %p130 = por %p128, %p129
    %p132 = scmp.ne.s32.totalorder %s115, %s131
    %p133 = scmp.eq.s32.totalorder %s18, 0
    %p134 = por %p132, %p133
    %s135 = ssub.s32 %s12, %s19
    %p136 = scmp.eq.s32.totalorder %s135, 0
    %s138 = sadd.s32 %s137, 1
    %s139 = scalar_select %p136, %s137, %s138
    %p142 = pneg %p136
    %p143 = scmp.eq.s32.totalorder %s12, 1
    %p144 = por %p142, %p143
    %p145 = scmp.ne.s32.totalorder %s137, %s140
    %p146 = scmp.eq.s32.totalorder %s12, 0
    %p147 = por %p145, %p146
    %p148 = scmp.ne.s32.totalorder %s137, %s140
    %p149 = scmp.eq.s32.totalorder %s17, 1
    %p150 = por %p148, %p149
    %p151 = scmp.ne.s32.totalorder %s140, %s141
    %p152 = scmp.eq.s32.totalorder %s17, 0
    %p153 = por %p151, %p152
    %p154 = scmp.ne.s32.totalorder %s140, %s141
    %p155 = scmp.eq.s32.totalorder %s18, 1
    %p156 = por %p154, %p155
    %p158 = scmp.ne.s32.totalorder %s141, %s157
    %p159 = scmp.eq.s32.totalorder %s18, 0
    %p160 = por %p158, %p159
    %p161 = scmp.le.s32.totalorder 1, %s12
    %p162 = scmp.lt.s32.totalorder %s12, 3
    %p163 = pnand %p161, %p162
    %p164 = pneg %p163
    // Predicated region
    $region9: #{bottleneck_forward.5} parent=5 // pred_check
      _
    $region10: #{bottleneck_forward.5} parent=5 // pred_check_branch
      %166 = sbr.rel (%p163) target = $region12
    $region11: #{bottleneck_forward.5} parent=5 // pred_region
      %s167 = ssub.s32 %s12, 1
      // Predicated region
      $region13: #{bottleneck_forward.5} parent=11 // pred_check
        %p168 = pneg %p59
      $region14: #{bottleneck_forward.5} parent=11 // pred_check_branch
        %170 = sbr.rel (%p168) target = $region16
      $region15: #{bottleneck_forward.5} parent=11 // pred_region
        _
      $region16: #{bottleneck_forward.5} parent=11 // pred_fallthru
        _
      // Predicated region
      $region17: #{bottleneck_forward.5} parent=11 // pred_check
        %p171 = pneg %p80
      $region18: #{bottleneck_forward.5} parent=11 // pred_check_branch
        %173 = sbr.rel (%p171) target = $region20
      $region19: #{bottleneck_forward.5} parent=11 // pred_region
        _
      $region20: #{bottleneck_forward.5} parent=11 // pred_fallthru
        _
      // Predicated region
      $region21: #{bottleneck_forward.5} parent=11 // pred_check
        %p174 = pneg %p101
      $region22: #{bottleneck_forward.5} parent=11 // pred_check_branch
        %176 = sbr.rel (%p174) target = $region24
      $region23: #{bottleneck_forward.5} parent=11 // pred_region
        _
      $region24: #{bottleneck_forward.5} parent=11 // pred_fallthru
        _
    $region12: #{bottleneck_forward.5} parent=5 // pred_fallthru
      _
    %p177 = scmp.lt.s32.totalorder %s12, 2
    // Predicated region
    $region25: #{bottleneck_forward.5} parent=5 // pred_check
      %p178 = pneg %p177
    $region26: #{bottleneck_forward.5} parent=5 // pred_check_branch
      %180 = sbr.rel (%p178) target = $region28
    $region27: #{bottleneck_forward.5} parent=5 // pred_region
      // Predicated region
      $region29: #{bottleneck_forward.5} parent=27 // pred_check
        %p181 = pneg %p32
      $region30: #{bottleneck_forward.5} parent=27 // pred_check_branch
        %183 = sbr.rel (%p181) target = $region32
      $region31: #{bottleneck_forward.5} parent=27 // pred_region
        %s184 = smul.u32 32, %s12
        %p185 = scmp.lt.s32.totalorder %s184, 63
        %s186 = scalar_select %p185, %s184, 63
        %s187 = smul.addr %s186, 8
        %s188 = scalar_lea.vmem %s0, %s187
        %s189 = smul.u32 32, %s12
      $region32: #{bottleneck_forward.5} parent=27 // pred_fallthru
        _
    $region28: #{bottleneck_forward.5} parent=5 // pred_fallthru
      _
    %p190 = scmp.le.s32.totalorder 1, %s12
    %p191 = scmp.lt.s32.totalorder %s12, 3
    %p192 = pnand %p190, %p191
    %p193 = pneg %p192
    // Predicated region
    $region33: #{bottleneck_forward.5} parent=5 // pred_check
      _
    $region34: #{bottleneck_forward.5} parent=5 // pred_check_branch
      %195 = sbr.rel (%p192) target = $region36
    $region35: #{bottleneck_forward.5} parent=5 // pred_region
      %s196 = ssub.s32 %s12, 1
      %s197 = smul.u32 32, %s17
      %p198 = scmp.lt.s32.totalorder %s197, 63
      %s199 = scalar_select %p198, %s197, 63
      %s200 = smul.addr %s199, 8
      %s201 = scalar_lea.vmem %s0, %s200
      %p202 = pneg %p38
      %p203 = pneg %p35
      %p204 = pneg %p59
      %p205 = pneg %p56
      %p206 = pneg %p80
      %p207 = pneg %p77
      %p208 = pneg %p101
      %p209 = pneg %p98
      %p210 = pneg %p127
      %p211 = pneg %p124
      %s212 = smul.u32 32, %s17
      %p213 = scmp.lt.s32.totalorder %s212, 63
      %s214 = scalar_select %p213, %s212, 63
      %s215 = smul.addr %s214, 8
      %s216 = scalar_lea.vmem %s4, %s215
      %p217 = pneg %p153
      %p218 = pneg %p150
      %p219 = scmp.lt.s32.totalorder %s17, 1
      %s220 = scalar_select %p219, %s17, 1
      %s221 = smul.addr %s220, 2
      %s222 = scalar_lea.vmem %s5, %s221
      %s223 = smul.u32 32, %s17
      %p224 = scmp.lt.s32.totalorder %s223, 63
      %s225 = scalar_select %p224, %s223, 63
      %s226 = smul.addr %s225, 8
      %s227 = scalar_lea.vmem %s0, %s226
      %s228 = smul.u32 32, %s17
      %s229 = smul.u32 32, %s17
      %p230 = scmp.lt.s32.totalorder %s229, 63
      %s231 = scalar_select %p230, %s229, 63
      %s232 = smul.addr %s231, 8
      %s233 = scalar_lea.vmem %s4, %s232
      %s234 = smul.u32 32, %s17
      %p235 = scmp.lt.s32.totalorder %s17, 1
      %s236 = scalar_select %p235, %s17, 1
      %s237 = smul.addr %s236, 2
      %s238 = scalar_lea.vmem %s5, %s237
      %v239 = vld [vmem:[%s227] sm:$0xff]
      %v240 = vld [vmem:[%s227 + $0x8] sm:$0xff]
      %v241 = vld [vmem:[%s227 + $0x10] sm:$0xff]
      %v242 = vld [vmem:[%s227 + $0x18] sm:$0xff]
      %v243 = vld [vmem:[%s227 + $0x20] sm:$0xff]
      %v244 = vld [vmem:[%s227 + $0x28] sm:$0xff]
      %v245 = vld [vmem:[%s227 + $0x30] sm:$0xff]
      %v246 = vld [vmem:[%s227 + $0x38] sm:$0xff]
      %v247 = vld [vmem:[%s227 + $0x40] sm:$0xff]
      %v248 = vld [vmem:[%s227 + $0x48] sm:$0xff]
      %v249 = vld [vmem:[%s227 + $0x50] sm:$0xff]
      %v250 = vld [vmem:[%s227 + $0x58] sm:$0xff]
      %v251 = vld [vmem:[%s227 + $0x60] sm:$0xff]
      %v252 = vld [vmem:[%s227 + $0x68] sm:$0xff]
      %v253 = vld [vmem:[%s227 + $0x70] sm:$0xff]
      %v254 = vld [vmem:[%s227 + $0x78] sm:$0xff]
      %v255 = vld [vmem:[%s227 + $0x80] sm:$0xff]
      %v256 = vld [vmem:[%s227 + $0x88] sm:$0xff]
      %v257 = vld [vmem:[%s227 + $0x90] sm:$0xff]
      %v258 = vld [vmem:[%s227 + $0x98] sm:$0xff]
      %v259 = vld [vmem:[%s227 + $0xa0] sm:$0xff]
      %v260 = vld [vmem:[%s227 + $0xa8] sm:$0xff]
      %v261 = vld [vmem:[%s227 + $0xb0] sm:$0xff]
      %v262 = vld [vmem:[%s227 + $0xb8] sm:$0xff]
      %v263 = vld [vmem:[%s227 + $0xc0] sm:$0xff]
      %v264 = vld [vmem:[%s227 + $0xc8] sm:$0xff]
      %v265 = vld [vmem:[%s227 + $0xd0] sm:$0xff]
      %v266 = vld [vmem:[%s227 + $0xd8] sm:$0xff]
      %v267 = vld [vmem:[%s227 + $0xe0] sm:$0xff]
      %v268 = vld [vmem:[%s227 + $0xe8] sm:$0xff]
      %v269 = vld [vmem:[%s227 + $0xf0] sm:$0xff]
      %v270 = vld [vmem:[%s227 + $0xf8] sm:$0xff]
      %v271 = vld [vmem:[%s1] sm:$0x1]
      %v273 = vlaneseq
      %v274 = vshrl.u32 %v273, 7
      %v275 = vsub.s32 0, %v274
      %v276 = vrot.slane %v271, %v275
      %v278 = vmul.f32 %v239, %v276
      %v279 = vmul.f32 %v240, %v276
      %v280 = vmul.f32 %v241, %v276
      %v281 = vmul.f32 %v242, %v276
      %v282 = vmul.f32 %v243, %v276
      %v283 = vmul.f32 %v244, %v276
      %v284 = vmul.f32 %v245, %v276
      %v285 = vmul.f32 %v246, %v276
      %v286 = vmul.f32 %v247, %v276
      %v287 = vmul.f32 %v248, %v276
      %v288 = vmul.f32 %v249, %v276
      %v289 = vmul.f32 %v250, %v276
      %v290 = vmul.f32 %v251, %v276
      %v291 = vmul.f32 %v252, %v276
      %v292 = vmul.f32 %v253, %v276
      %v293 = vmul.f32 %v254, %v276
      %v294 = vmul.f32 %v255, %v276
      %v295 = vmul.f32 %v256, %v276
      %v296 = vmul.f32 %v257, %v276
      %v297 = vmul.f32 %v258, %v276
      %v298 = vmul.f32 %v259, %v276
      %v299 = vmul.f32 %v260, %v276
      %v300 = vmul.f32 %v261, %v276
      %v301 = vmul.f32 %v262, %v276
      %v302 = vmul.f32 %v263, %v276
      %v303 = vmul.f32 %v264, %v276
      %v304 = vmul.f32 %v265, %v276
      %v305 = vmul.f32 %v266, %v276
      %v306 = vmul.f32 %v267, %v276
      %v307 = vmul.f32 %v268, %v276
      %v308 = vmul.f32 %v269, %v276
      %v309 = vmul.f32 %v270, %v276
      %v310 = vld [vmem:[%s2] sm:$0x1]
      %v312 = vlaneseq
      %v313 = vshrl.u32 %v312, 7
      %v314 = vsub.s32 0, %v313
      %v315 = vrot.slane %v310, %v314
      %v317 = vadd.f32 %v278, %v315
      %v318 = vadd.f32 %v279, %v315
      %v319 = vadd.f32 %v280, %v315
      %v320 = vadd.f32 %v281, %v315
      %v321 = vadd.f32 %v282, %v315
      %v322 = vadd.f32 %v283, %v315
      %v323 = vadd.f32 %v284, %v315
      %v324 = vadd.f32 %v285, %v315
      %v325 = vadd.f32 %v286, %v315
      %v326 = vadd.f32 %v287, %v315
      %v327 = vadd.f32 %v288, %v315
      %v328 = vadd.f32 %v289, %v315
      %v329 = vadd.f32 %v290, %v315
      %v330 = vadd.f32 %v291, %v315
      %v331 = vadd.f32 %v292, %v315
      %v332 = vadd.f32 %v293, %v315
      %v333 = vadd.f32 %v294, %v315
      %v334 = vadd.f32 %v295, %v315
      %v335 = vadd.f32 %v296, %v315
      %v336 = vadd.f32 %v297, %v315
      %v337 = vadd.f32 %v298, %v315
      %v338 = vadd.f32 %v299, %v315
      %v339 = vadd.f32 %v300, %v315
      %v340 = vadd.f32 %v301, %v315
      %v341 = vadd.f32 %v302, %v315
      %v342 = vadd.f32 %v303, %v315
      %v343 = vadd.f32 %v304, %v315
      %v344 = vadd.f32 %v305, %v315
      %v345 = vadd.f32 %v306, %v315
      %v346 = vadd.f32 %v307, %v315
      %v347 = vadd.f32 %v308, %v315
      %v348 = vadd.f32 %v309, %v315
      %v349 = vmax.f32 %v317, 0.0
      %v350 = vmax.f32 %v318, 0.0
      %v351 = vmax.f32 %v319, 0.0
      %v352 = vmax.f32 %v320, 0.0
      %v353 = vmax.f32 %v321, 0.0
      %v354 = vmax.f32 %v322, 0.0
      %v355 = vmax.f32 %v323, 0.0
      %v356 = vmax.f32 %v324, 0.0
      %v357 = vmax.f32 %v325, 0.0
      %v358 = vmax.f32 %v326, 0.0
      %v359 = vmax.f32 %v327, 0.0
      %v360 = vmax.f32 %v328, 0.0
      %v361 = vmax.f32 %v329, 0.0
      %v362 = vmax.f32 %v330, 0.0
      %v363 = vmax.f32 %v331, 0.0
      %v364 = vmax.f32 %v332, 0.0
      %v365 = vmax.f32 %v333, 0.0
      %v366 = vmax.f32 %v334, 0.0
      %v367 = vmax.f32 %v335, 0.0
      %v368 = vmax.f32 %v336, 0.0
      %v369 = vmax.f32 %v337, 0.0
      %v370 = vmax.f32 %v338, 0.0
      %v371 = vmax.f32 %v339, 0.0
      %v372 = vmax.f32 %v340, 0.0
      %v373 = vmax.f32 %v341, 0.0
      %v374 = vmax.f32 %v342, 0.0
      %v375 = vmax.f32 %v343, 0.0
      %v376 = vmax.f32 %v344, 0.0
      %v377 = vmax.f32 %v345, 0.0
      %v378 = vmax.f32 %v346, 0.0
      %v379 = vmax.f32 %v347, 0.0
      %v380 = vmax.f32 %v348, 0.0
      %vm381 = vcmask 31744
      %382 = vst.msk [vmem:[#allocation2] sm:$0xff] %vm381, 0.0
      %383 = vst.msk [vmem:[#allocation2 + $0x8] sm:$0xff] %vm381, 0.0
      %384 = vst.msk [vmem:[#allocation2 + $0x10] sm:$0xff] %vm381, 0.0
      %385 = vst.msk [vmem:[#allocation2 + $0x118] sm:$0xff] %vm381, 0.0
      %386 = vst.msk [vmem:[#allocation2 + $0x120] sm:$0xff] %vm381, 0.0
      %387 = vst.msk [vmem:[#allocation2 + $0x128] sm:$0xff] %vm381, 0.0
      %388 = vst.msk [vmem:[#allocation2 + $0x18] sm:$0xff] %vm381, %v349
      %389 = vst.msk [vmem:[#allocation2 + $0x20] sm:$0xff] %vm381, %v350
      %390 = vst.msk [vmem:[#allocation2 + $0x28] sm:$0xff] %vm381, %v351
      %391 = vst.msk [vmem:[#allocation2 + $0x30] sm:$0xff] %vm381, %v352
      %392 = vst.msk [vmem:[#allocation2 + $0x38] sm:$0xff] %vm381, %v353
      %393 = vst.msk [vmem:[#allocation2 + $0x40] sm:$0xff] %vm381, %v354
      %394 = vst.msk [vmem:[#allocation2 + $0x48] sm:$0xff] %vm381, %v355
      %395 = vst.msk [vmem:[#allocation2 + $0x50] sm:$0xff] %vm381, %v356
      %396 = vst.msk [vmem:[#allocation2 + $0x58] sm:$0xff] %vm381, %v357
      %397 = vst.msk [vmem:[#allocation2 + $0x60] sm:$0xff] %vm381, %v358
      %398 = vst.msk [vmem:[#allocation2 + $0x68] sm:$0xff] %vm381, %v359
      %399 = vst.msk [vmem:[#allocation2 + $0x70] sm:$0xff] %vm381, %v360
      %400 = vst.msk [vmem:[#allocation2 + $0x78] sm:$0xff] %vm381, %v361
      %401 = vst.msk [vmem:[#allocation2 + $0x80] sm:$0xff] %vm381, %v362
      %402 = vst.msk [vmem:[#allocation2 + $0x88] sm:$0xff] %vm381, %v363
      %403 = vst.msk [vmem:[#allocation2 + $0x90] sm:$0xff] %vm381, %v364
      %404 = vst.msk [vmem:[#allocation2 + $0x98] sm:$0xff] %vm381, %v365
      %405 = vst.msk [vmem:[#allocation2 + $0xa0] sm:$0xff] %vm381, %v366
      %406 = vst.msk [vmem:[#allocation2 + $0xa8] sm:$0xff] %vm381, %v367
      %407 = vst.msk [vmem:[#allocation2 + $0xb0] sm:$0xff] %vm381, %v368
      %408 = vst.msk [vmem:[#allocation2 + $0xb8] sm:$0xff] %vm381, %v369
      %409 = vst.msk [vmem:[#allocation2 + $0xc0] sm:$0xff] %vm381, %v370
      %410 = vst.msk [vmem:[#allocation2 + $0xc8] sm:$0xff] %vm381, %v371
      %411 = vst.msk [vmem:[#allocation2 + $0xd0] sm:$0xff] %vm381, %v372
      %412 = vst.msk [vmem:[#allocation2 + $0xd8] sm:$0xff] %vm381, %v373
      %413 = vst.msk [vmem:[#allocation2 + $0xe0] sm:$0xff] %vm381, %v374
      %414 = vst.msk [vmem:[#allocation2 + $0xe8] sm:$0xff] %vm381, %v375
      %415 = vst.msk [vmem:[#allocation2 + $0xf0] sm:$0xff] %vm381, %v376
      %416 = vst.msk [vmem:[#allocation2 + $0xf8] sm:$0xff] %vm381, %v377
      %417 = vst.msk [vmem:[#allocation2 + $0x100] sm:$0xff] %vm381, %v378
      %418 = vst.msk [vmem:[#allocation2 + $0x108] sm:$0xff] %vm381, %v379
      %419 = vst.msk [vmem:[#allocation2 + $0x110] sm:$0xff] %vm381, %v380
      %v420 = vlaneseq
      %v421 = vshrl.u32 %v420, 7
      %v422 = vadd.s32 %v421, 8
      %v423 = vadd.s32 %v421, 16
      %v424 = vadd.s32 %v421, 24
      %v425 = vadd.s32 %v421, 32
      %v426 = vadd.s32 %v421, 40
      %v427 = vadd.s32 %v421, 48
      %v428 = vadd.s32 %v421, 56
      %v429 = vadd.s32 %v421, 64
      %v430 = vadd.s32 %v421, 72
      %v431 = vadd.s32 %v421, 80
      %v432 = vadd.s32 %v421, 88
      %v433 = vadd.s32 %v421, 96
      %v434 = vadd.s32 %v421, 104
      %v435 = vadd.s32 %v421, 112
      %v436 = vadd.s32 %v421, 120
      %v437 = vadd.s32 %v421, 128
      %v438 = vadd.s32 %v421, 136
      %v439 = vadd.s32 %v421, 144
      %v440 = vadd.s32 %v421, 152
      %v441 = vadd.s32 %v421, 160
      %v442 = vadd.s32 %v421, 168
      %v443 = vadd.s32 %v421, 176
      %v444 = vadd.s32 %v421, 184
      %v445 = vadd.s32 %v421, 192
      %v446 = vadd.s32 %v421, 200
      %v447 = vadd.s32 %v421, 208
      %v448 = vadd.s32 %v421, 216
      %v449 = vadd.s32 %v421, 224
      %v450 = vadd.s32 %v421, 232
      %v451 = vadd.s32 %v421, 240
      %v452 = vadd.s32 %v421, 248
      %vm453 = vcmp.lt.s32.totalorder %v421, 0
      %v454 = vsub.s32 0, %v421
      %v455 = vsel %vm453, %v454, %v421
      %v456 = vshrl.u32 %v455, 4
      %v457 = vand.u32 %v455, 15
      %v458 = vsub.s32 0, %v457
      %v459 = vsel %vm453, %v458, %v457
      %vm460 = vcmp.lt.s32.totalorder %v422, 0
      %v461 = vsub.s32 0, %v422
      %v462 = vsel %vm460, %v461, %v422
      %v463 = vshrl.u32 %v462, 4
      %v464 = vand.u32 %v462, 15
      %v465 = vsub.s32 0, %v464
      %v466 = vsel %vm460, %v465, %v464
      %vm467 = vcmp.lt.s32.totalorder %v423, 0
      %v468 = vsub.s32 0, %v423
      %v469 = vsel %vm467, %v468, %v423
      %v470 = vshrl.u32 %v469, 4
      %v471 = vand.u32 %v469, 15
      %v472 = vsub.s32 0, %v471
      %v473 = vsel %vm467, %v472, %v471
      %vm474 = vcmp.lt.s32.totalorder %v424, 0
      %v475 = vsub.s32 0, %v424
      %v476 = vsel %vm474, %v475, %v424
      %v477 = vshrl.u32 %v476, 4
      %v478 = vand.u32 %v476, 15
      %v479 = vsub.s32 0, %v478
      %v480 = vsel %vm474, %v479, %v478
      %vm481 = vcmp.lt.s32.totalorder %v425, 0
      %v482 = vsub.s32 0, %v425
      %v483 = vsel %vm481, %v482, %v425
      %v484 = vshrl.u32 %v483, 4
      %v485 = vand.u32 %v483, 15
      %v486 = vsub.s32 0, %v485
      %v487 = vsel %vm481, %v486, %v485
      %vm488 = vcmp.lt.s32.totalorder %v426, 0
      %v489 = vsub.s32 0, %v426
      %v490 = vsel %vm488, %v489, %v426
      %v491 = vshrl.u32 %v490, 4
      %v492 = vand.u32 %v490, 15
      %v493 = vsub.s32 0, %v492
      %v494 = vsel %vm488, %v493, %v492
      %vm495 = vcmp.lt.s32.totalorder %v427, 0
      %v496 = vsub.s32 0, %v427
      %v497 = vsel %vm495, %v496, %v427
      %v498 = vshrl.u32 %v497, 4
      %v499 = vand.u32 %v497, 15
      %v500 = vsub.s32 0, %v499
      %v501 = vsel %vm495, %v500, %v499
      %vm502 = vcmp.lt.s32.totalorder %v428, 0
      %v503 = vsub.s32 0, %v428
      %v504 = vsel %vm502, %v503, %v428
      %v505 = vshrl.u32 %v504, 4
      %v506 = vand.u32 %v504, 15
      %v507 = vsub.s32 0, %v506
      %v508 = vsel %vm502, %v507, %v506
      %vm509 = vcmp.lt.s32.totalorder %v429, 0
      %v510 = vsub.s32 0, %v429
      %v511 = vsel %vm509, %v510, %v429
      %v512 = vshrl.u32 %v511, 4
      %v513 = vand.u32 %v511, 15
      %v514 = vsub.s32 0, %v513
      %v515 = vsel %vm509, %v514, %v513
      %vm516 = vcmp.lt.s32.totalorder %v430, 0
      %v517 = vsub.s32 0, %v430
      %v518 = vsel %vm516, %v517, %v430
      %v519 = vshrl.u32 %v518, 4
      %v520 = vand.u32 %v518, 15
      %v521 = vsub.s32 0, %v520
      %v522 = vsel %vm516, %v521, %v520
      %vm523 = vcmp.lt.s32.totalorder %v431, 0
      %v524 = vsub.s32 0, %v431
      %v525 = vsel %vm523, %v524, %v431
      %v526 = vshrl.u32 %v525, 4
      %v527 = vand.u32 %v525, 15
      %v528 = vsub.s32 0, %v527
      %v529 = vsel %vm523, %v528, %v527
      %vm530 = vcmp.lt.s32.totalorder %v432, 0
      %v531 = vsub.s32 0, %v432
      %v532 = vsel %vm530, %v531, %v432
      %v533 = vshrl.u32 %v532, 4
      %v534 = vand.u32 %v532, 15
      %v535 = vsub.s32 0, %v534
      %v536 = vsel %vm530, %v535, %v534
      %vm537 = vcmp.lt.s32.totalorder %v433, 0
      %v538 = vsub.s32 0, %v433
      %v539 = vsel %vm537, %v538, %v433
      %v540 = vshrl.u32 %v539, 4
      %v541 = vand.u32 %v539, 15
      %v542 = vsub.s32 0, %v541
      %v543 = vsel %vm537, %v542, %v541
      %vm544 = vcmp.lt.s32.totalorder %v434, 0
      %v545 = vsub.s32 0, %v434
      %v546 = vsel %vm544, %v545, %v434
      %v547 = vshrl.u32 %v546, 4
      %v548 = vand.u32 %v546, 15
      %v549 = vsub.s32 0, %v548
      %v550 = vsel %vm544, %v549, %v548
      %vm551 = vcmp.lt.s32.totalorder %v435, 0
      %v552 = vsub.s32 0, %v435
      %v553 = vsel %vm551, %v552, %v435
      %v554 = vshrl.u32 %v553, 4
      %v555 = vand.u32 %v553, 15
      %v556 = vsub.s32 0, %v555
      %v557 = vsel %vm551, %v556, %v555
      %vm558 = vcmp.lt.s32.totalorder %v436, 0
      %v559 = vsub.s32 0, %v436
      %v560 = vsel %vm558, %v559, %v436
      %v561 = vshrl.u32 %v560, 4
      %v562 = vand.u32 %v560, 15
      %v563 = vsub.s32 0, %v562
      %v564 = vsel %vm558, %v563, %v562
      %vm565 = vcmp.lt.s32.totalorder %v437, 0
      %v566 = vsub.s32 0, %v437
      %v567 = vsel %vm565, %v566, %v437
      %v568 = vshrl.u32 %v567, 4
      %v569 = vand.u32 %v567, 15
      %v570 = vsub.s32 0, %v569
      %v571 = vsel %vm565, %v570, %v569
      %vm572 = vcmp.lt.s32.totalorder %v438, 0
      %v573 = vsub.s32 0, %v438
      %v574 = vsel %vm572, %v573, %v438
      %v575 = vshrl.u32 %v574, 4
      %v576 = vand.u32 %v574, 15
      %v577 = vsub.s32 0, %v576
      %v578 = vsel %vm572, %v577, %v576
      %vm579 = vcmp.lt.s32.totalorder %v439, 0
      %v580 = vsub.s32 0, %v439
      %v581 = vsel %vm579, %v580, %v439
      %v582 = vshrl.u32 %v581, 4
      %v583 = vand.u32 %v581, 15
      %v584 = vsub.s32 0, %v583
      %v585 = vsel %vm579, %v584, %v583
      %vm586 = vcmp.lt.s32.totalorder %v440, 0
      %v587 = vsub.s32 0, %v440
      %v588 = vsel %vm586, %v587, %v440
      %v589 = vshrl.u32 %v588, 4
      %v590 = vand.u32 %v588, 15
      %v591 = vsub.s32 0, %v590
      %v592 = vsel %vm586, %v591, %v590
      %vm593 = vcmp.lt.s32.totalorder %v441, 0
      %v594 = vsub.s32 0, %v441
      %v595 = vsel %vm593, %v594, %v441
      %v596 = vshrl.u32 %v595, 4
      %v597 = vand.u32 %v595, 15
      %v598 = vsub.s32 0, %v597
      %v599 = vsel %vm593, %v598, %v597
      %vm600 = vcmp.lt.s32.totalorder %v442, 0
      %v601 = vsub.s32 0, %v442
      %v602 = vsel %vm600, %v601, %v442
      %v603 = vshrl.u32 %v602, 4
      %v604 = vand.u32 %v602, 15
      %v605 = vsub.s32 0, %v604
      %v606 = vsel %vm600, %v605, %v604
      %vm607 = vcmp.lt.s32.totalorder %v443, 0
      %v608 = vsub.s32 0, %v443
      %v609 = vsel %vm607, %v608, %v443
      %v610 = vshrl.u32 %v609, 4
      %v611 = vand.u32 %v609, 15
      %v612 = vsub.s32 0, %v611
      %v613 = vsel %vm607, %v612, %v611
      %vm614 = vcmp.lt.s32.totalorder %v444, 0
      %v615 = vsub.s32 0, %v444
      %v616 = vsel %vm614, %v615, %v444
      %v617 = vshrl.u32 %v616, 4
      %v618 = vand.u32 %v616, 15
      %v619 = vsub.s32 0, %v618
      %v620 = vsel %vm614, %v619, %v618
      %vm621 = vcmp.lt.s32.totalorder %v445, 0
      %v622 = vsub.s32 0, %v445
      %v623 = vsel %vm621, %v622, %v445
      %v624 = vshrl.u32 %v623, 4
      %v625 = vand.u32 %v623, 15
      %v626 = vsub.s32 0, %v625
      %v627 = vsel %vm621, %v626, %v625
      %vm628 = vcmp.lt.s32.totalorder %v446, 0
      %v629 = vsub.s32 0, %v446
      %v630 = vsel %vm628, %v629, %v446
      %v631 = vshrl.u32 %v630, 4
      %v632 = vand.u32 %v630, 15
      %v633 = vsub.s32 0, %v632
      %v634 = vsel %vm628, %v633, %v632
      %vm635 = vcmp.lt.s32.totalorder %v447, 0
      %v636 = vsub.s32 0, %v447
      %v637 = vsel %vm635, %v636, %v447
      %v638 = vshrl.u32 %v637, 4
      %v639 = vand.u32 %v637, 15
      %v640 = vsub.s32 0, %v639
      %v641 = vsel %vm635, %v640, %v639
      %vm642 = vcmp.lt.s32.totalorder %v448, 0
      %v643 = vsub.s32 0, %v448
      %v644 = vsel %vm642, %v643, %v448
      %v645 = vshrl.u32 %v644, 4
      %v646 = vand.u32 %v644, 15
      %v647 = vsub.s32 0, %v646
      %v648 = vsel %vm642, %v647, %v646
      %vm649 = vcmp.lt.s32.totalorder %v449, 0
      %v650 = vsub.s32 0, %v449
      %v651 = vsel %vm649, %v650, %v449
      %v652 = vshrl.u32 %v651, 4
      %v653 = vand.u32 %v651, 15
      %v654 = vsub.s32 0, %v653
      %v655 = vsel %vm649, %v654, %v653
      %vm656 = vcmp.lt.s32.totalorder %v450, 0
      %v657 = vsub.s32 0, %v450
      %v658 = vsel %vm656, %v657, %v450
      %v659 = vshrl.u32 %v658, 4
      %v660 = vand.u32 %v658, 15
      %v661 = vsub.s32 0, %v660
      %v662 = vsel %vm656, %v661, %v660
      %vm663 = vcmp.lt.s32.totalorder %v451, 0
      %v664 = vsub.s32 0, %v451
      %v665 = vsel %vm663, %v664, %v451
      %v666 = vshrl.u32 %v665, 4
      %v667 = vand.u32 %v665, 15
      %v668 = vsub.s32 0, %v667
      %v669 = vsel %vm663, %v668, %v667
      %vm670 = vcmp.lt.s32.totalorder %v452, 0
      %v671 = vsub.s32 0, %v452
      %v672 = vsel %vm670, %v671, %v452
      %v673 = vshrl.u32 %v672, 4
      %v674 = vand.u32 %v672, 15
      %v675 = vsub.s32 0, %v674
      %v676 = vsel %vm670, %v675, %v674
      %vm677 = vcmp.ne.s32.totalorder %v459, 0
      %vm678 = vcmp.ne.s32.totalorder %v466, 0
      %vm679 = vcmp.ne.s32.totalorder %v473, 0
      %vm680 = vcmp.ne.s32.totalorder %v480, 0
      %vm681 = vcmp.ne.s32.totalorder %v487, 0
      %vm682 = vcmp.ne.s32.totalorder %v494, 0
      %vm683 = vcmp.ne.s32.totalorder %v501, 0
      %vm684 = vcmp.ne.s32.totalorder %v508, 0
      %vm685 = vcmp.ne.s32.totalorder %v515, 0
      %vm686 = vcmp.ne.s32.totalorder %v522, 0
      %vm687 = vcmp.ne.s32.totalorder %v529, 0
      %vm688 = vcmp.ne.s32.totalorder %v536, 0
      %vm689 = vcmp.ne.s32.totalorder %v543, 0
      %vm690 = vcmp.ne.s32.totalorder %v550, 0
      %vm691 = vcmp.ne.s32.totalorder %v557, 0
      %vm692 = vcmp.ne.s32.totalorder %v564, 0
      %vm693 = vcmp.ne.s32.totalorder %v571, 0
      %vm694 = vcmp.ne.s32.totalorder %v578, 0
      %vm695 = vcmp.ne.s32.totalorder %v585, 0
      %vm696 = vcmp.ne.s32.totalorder %v592, 0
      %vm697 = vcmp.ne.s32.totalorder %v599, 0
      %vm698 = vcmp.ne.s32.totalorder %v606, 0
      %vm699 = vcmp.ne.s32.totalorder %v613, 0
      %vm700 = vcmp.ne.s32.totalorder %v620, 0
      %vm701 = vcmp.ne.s32.totalorder %v627, 0
      %vm702 = vcmp.ne.s32.totalorder %v634, 0
      %vm703 = vcmp.ne.s32.totalorder %v641, 0
      %vm704 = vcmp.ne.s32.totalorder %v648, 0
      %vm705 = vcmp.ne.s32.totalorder %v655, 0
      %vm706 = vcmp.ne.s32.totalorder %v662, 0
      %vm707 = vcmp.ne.s32.totalorder %v669, 0
      %vm708 = vcmp.ne.s32.totalorder %v676, 0
      %vm709 = vcmp.lt.s32.totalorder %v459, 0
      %vm710 = vcmp.lt.s32.totalorder %v466, 0
      %vm711 = vcmp.lt.s32.totalorder %v473, 0
      %vm712 = vcmp.lt.s32.totalorder %v480, 0
      %vm713 = vcmp.lt.s32.totalorder %v487, 0
      %vm714 = vcmp.lt.s32.totalorder %v494, 0
      %vm715 = vcmp.lt.s32.totalorder %v501, 0
      %vm716 = vcmp.lt.s32.totalorder %v508, 0
      %vm717 = vcmp.lt.s32.totalorder %v515, 0
      %vm718 = vcmp.lt.s32.totalorder %v522, 0
      %vm719 = vcmp.lt.s32.totalorder %v529, 0
      %vm720 = vcmp.lt.s32.totalorder %v536, 0
      %vm721 = vcmp.lt.s32.totalorder %v543, 0
      %vm722 = vcmp.lt.s32.totalorder %v550, 0
      %vm723 = vcmp.lt.s32.totalorder %v557, 0
      %vm724 = vcmp.lt.s32.totalorder %v564, 0
      %vm725 = vcmp.lt.s32.totalorder %v571, 0
      %vm726 = vcmp.lt.s32.totalorder %v578, 0
      %vm727 = vcmp.lt.s32.totalorder %v585, 0
      %vm728 = vcmp.lt.s32.totalorder %v592, 0
      %vm729 = vcmp.lt.s32.totalorder %v599, 0
      %vm730 = vcmp.lt.s32.totalorder %v606, 0
      %vm731 = vcmp.lt.s32.totalorder %v613, 0
      %vm732 = vcmp.lt.s32.totalorder %v620, 0
      %vm733 = vcmp.lt.s32.totalorder %v627, 0
      %vm734 = vcmp.lt.s32.totalorder %v634, 0
      %vm735 = vcmp.lt.s32.totalorder %v641, 0
      %vm736 = vcmp.lt.s32.totalorder %v648, 0
      %vm737 = vcmp.lt.s32.totalorder %v655, 0
      %vm738 = vcmp.lt.s32.totalorder %v662, 0
      %vm739 = vcmp.lt.s32.totalorder %v669, 0
      %vm740 = vcmp.lt.s32.totalorder %v676, 0
      %vm741 = vmand %vm709, %vm677
      %vm742 = vmand %vm710, %vm678
      %vm743 = vmand %vm711, %vm679
      %vm744 = vmand %vm712, %vm680
      %vm745 = vmand %vm713, %vm681
      %vm746 = vmand %vm714, %vm682
      %vm747 = vmand %vm715, %vm683
      %vm748 = vmand %vm716, %vm684
      %vm749 = vmand %vm717, %vm685
      %vm750 = vmand %vm718, %vm686
      %vm751 = vmand %vm719, %vm687
      %vm752 = vmand %vm720, %vm688
      %vm753 = vmand %vm721, %vm689
      %vm754 = vmand %vm722, %vm690
      %vm755 = vmand %vm723, %vm691
      %vm756 = vmand %vm724, %vm692
      %vm757 = vmand %vm725, %vm693
      %vm758 = vmand %vm726, %vm694
      %vm759 = vmand %vm727, %vm695
      %vm760 = vmand %vm728, %vm696
      %vm761 = vmand %vm729, %vm697
      %vm762 = vmand %vm730, %vm698
      %vm763 = vmand %vm731, %vm699
      %vm764 = vmand %vm732, %vm700
      %vm765 = vmand %vm733, %vm701
      %vm766 = vmand %vm734, %vm702
      %vm767 = vmand %vm735, %vm703
      %vm768 = vmand %vm736, %vm704
      %vm769 = vmand %vm737, %vm705
      %vm770 = vmand %vm738, %vm706
      %vm771 = vmand %vm739, %vm707
      %vm772 = vmand %vm740, %vm708
      %v773 = vadd.s32 %v459, 16
      %v774 = vadd.s32 %v466, 16
      %v775 = vadd.s32 %v473, 16
      %v776 = vadd.s32 %v480, 16
      %v777 = vadd.s32 %v487, 16
      %v778 = vadd.s32 %v494, 16
      %v779 = vadd.s32 %v501, 16
      %v780 = vadd.s32 %v508, 16
      %v781 = vadd.s32 %v515, 16
      %v782 = vadd.s32 %v522, 16
      %v783 = vadd.s32 %v529, 16
      %v784 = vadd.s32 %v536, 16
      %v785 = vadd.s32 %v543, 16
      %v786 = vadd.s32 %v550, 16
      %v787 = vadd.s32 %v557, 16
      %v788 = vadd.s32 %v564, 16
      %v789 = vadd.s32 %v571, 16
      %v790 = vadd.s32 %v578, 16
      %v791 = vadd.s32 %v585, 16
      %v792 = vadd.s32 %v592, 16
      %v793 = vadd.s32 %v599, 16
      %v794 = vadd.s32 %v606, 16
      %v795 = vadd.s32 %v613, 16
      %v796 = vadd.s32 %v620, 16
      %v797 = vadd.s32 %v627, 16
      %v798 = vadd.s32 %v634, 16
      %v799 = vadd.s32 %v641, 16
      %v800 = vadd.s32 %v648, 16
      %v801 = vadd.s32 %v655, 16
      %v802 = vadd.s32 %v662, 16
      %v803 = vadd.s32 %v669, 16
      %v804 = vadd.s32 %v676, 16
      %v805 = vsel %vm741, %v773, %v459
      %v806 = vsel %vm742, %v774, %v466
      %v807 = vsel %vm743, %v775, %v473
      %v808 = vsel %vm744, %v776, %v480
      %v809 = vsel %vm745, %v777, %v487
      %v810 = vsel %vm746, %v778, %v494
      %v811 = vsel %vm747, %v779, %v501
      %v812 = vsel %vm748, %v780, %v508
      %v813 = vsel %vm749, %v781, %v515
      %v814 = vsel %vm750, %v782, %v522
      %v815 = vsel %vm751, %v783, %v529
      %v816 = vsel %vm752, %v784, %v536
      %v817 = vsel %vm753, %v785, %v543
      %v818 = vsel %vm754, %v786, %v550
      %v819 = vsel %vm755, %v787, %v557
      %v820 = vsel %vm756, %v788, %v564
      %v821 = vsel %vm757, %v789, %v571
      %v822 = vsel %vm758, %v790, %v578
      %v823 = vsel %vm759, %v791, %v585
      %v824 = vsel %vm760, %v792, %v592
      %v825 = vsel %vm761, %v793, %v599
      %v826 = vsel %vm762, %v794, %v606
      %v827 = vsel %vm763, %v795, %v613
      %v828 = vsel %vm764, %v796, %v620
      %v829 = vsel %vm765, %v797, %v627
      %v830 = vsel %vm766, %v798, %v634
      %v831 = vsel %vm767, %v799, %v641
      %v832 = vsel %vm768, %v800, %v648
      %v833 = vsel %vm769, %v801, %v655
      %v834 = vsel %vm770, %v802, %v662
      %v835 = vsel %vm771, %v803, %v669
      %v836 = vsel %vm772, %v804, %v676
      %vm837 = vcmp.ge.s32.totalorder %v805, 1
      %vm838 = vcmp.ge.s32.totalorder %v806, 1
      %vm839 = vcmp.ge.s32.totalorder %v807, 1
      %vm840 = vcmp.ge.s32.totalorder %v808, 1
      %vm841 = vcmp.ge.s32.totalorder %v809, 1
      %vm842 = vcmp.ge.s32.totalorder %v810, 1
      %vm843 = vcmp.ge.s32.totalorder %v811, 1
      %vm844 = vcmp.ge.s32.totalorder %v812, 1
      %vm845 = vcmp.ge.s32.totalorder %v813, 1
      %vm846 = vcmp.ge.s32.totalorder %v814, 1
      %vm847 = vcmp.ge.s32.totalorder %v815, 1
      %vm848 = vcmp.ge.s32.totalorder %v816, 1
      %vm849 = vcmp.ge.s32.totalorder %v817, 1
      %vm850 = vcmp.ge.s32.totalorder %v818, 1
      %vm851 = vcmp.ge.s32.totalorder %v819, 1
      %vm852 = vcmp.ge.s32.totalorder %v820, 1
      %vm853 = vcmp.ge.s32.totalorder %v821, 1
      %vm854 = vcmp.ge.s32.totalorder %v822, 1
      %vm855 = vcmp.ge.s32.totalorder %v823, 1
      %vm856 = vcmp.ge.s32.totalorder %v824, 1
      %vm857 = vcmp.ge.s32.totalorder %v825, 1
      %vm858 = vcmp.ge.s32.totalorder %v826, 1
      %vm859 = vcmp.ge.s32.totalorder %v827, 1
      %vm860 = vcmp.ge.s32.totalorder %v828, 1
      %vm861 = vcmp.ge.s32.totalorder %v829, 1
      %vm862 = vcmp.ge.s32.totalorder %v830, 1
      %vm863 = vcmp.ge.s32.totalorder %v831, 1
      %vm864 = vcmp.ge.s32.totalorder %v832, 1
      %vm865 = vcmp.ge.s32.totalorder %v833, 1
      %vm866 = vcmp.ge.s32.totalorder %v834, 1
      %vm867 = vcmp.ge.s32.totalorder %v835, 1
      %vm868 = vcmp.ge.s32.totalorder %v836, 1
      %v869 = vsel %vm837, 1, 0
      %v870 = vsel %vm838, 1, 0
      %v871 = vsel %vm839, 1, 0
      %v872 = vsel %vm840, 1, 0
      %v873 = vsel %vm841, 1, 0
      %v874 = vsel %vm842, 1, 0
      %v875 = vsel %vm843, 1, 0
      %v876 = vsel %vm844, 1, 0
      %v877 = vsel %vm845, 1, 0
      %v878 = vsel %vm846, 1, 0
      %v879 = vsel %vm847, 1, 0
      %v880 = vsel %vm848, 1, 0
      %v881 = vsel %vm849, 1, 0
      %v882 = vsel %vm850, 1, 0
      %v883 = vsel %vm851, 1, 0
      %v884 = vsel %vm852, 1, 0
      %v885 = vsel %vm853, 1, 0
      %v886 = vsel %vm854, 1, 0
      %v887 = vsel %vm855, 1, 0
      %v888 = vsel %vm856, 1, 0
      %v889 = vsel %vm857, 1, 0
      %v890 = vsel %vm858, 1, 0
      %v891 = vsel %vm859, 1, 0
      %v892 = vsel %vm860, 1, 0
      %v893 = vsel %vm861, 1, 0
      %v894 = vsel %vm862, 1, 0
      %v895 = vsel %vm863, 1, 0
      %v896 = vsel %vm864, 1, 0
      %v897 = vsel %vm865, 1, 0
      %v898 = vsel %vm866, 1, 0
      %v899 = vsel %vm867, 1, 0
      %v900 = vsel %vm868, 1, 0
      %v901 = vcvt.s32.f32 %v869
      %v902 = vcvt.s32.f32 %v870
      %v903 = vcvt.s32.f32 %v871
      %v904 = vcvt.s32.f32 %v872
      %v905 = vcvt.s32.f32 %v873
      %v906 = vcvt.s32.f32 %v874
      %v907 = vcvt.s32.f32 %v875
      %v908 = vcvt.s32.f32 %v876
      %v909 = vcvt.s32.f32 %v877
      %v910 = vcvt.s32.f32 %v878
      %v911 = vcvt.s32.f32 %v879
      %v912 = vcvt.s32.f32 %v880
      %v913 = vcvt.s32.f32 %v881
      %v914 = vcvt.s32.f32 %v882
      %v915 = vcvt.s32.f32 %v883
      %v916 = vcvt.s32.f32 %v884
      %v917 = vcvt.s32.f32 %v885
      %v918 = vcvt.s32.f32 %v886
      %v919 = vcvt.s32.f32 %v887
      %v920 = vcvt.s32.f32 %v888
      %v921 = vcvt.s32.f32 %v889
      %v922 = vcvt.s32.f32 %v890
      %v923 = vcvt.s32.f32 %v891
      %v924 = vcvt.s32.f32 %v892
      %v925 = vcvt.s32.f32 %v893
      %v926 = vcvt.s32.f32 %v894
      %v927 = vcvt.s32.f32 %v895
      %v928 = vcvt.s32.f32 %v896
      %v929 = vcvt.s32.f32 %v897
      %v930 = vcvt.s32.f32 %v898
      %v931 = vcvt.s32.f32 %v899
      %v932 = vcvt.s32.f32 %v900
      %vm933 = vcmp.lt.s32.totalorder %v805, 15
      %vm934 = vcmp.lt.s32.totalorder %v806, 15
      %vm935 = vcmp.lt.s32.totalorder %v807, 15
      %vm936 = vcmp.lt.s32.totalorder %v808, 15
      %vm937 = vcmp.lt.s32.totalorder %v809, 15
      %vm938 = vcmp.lt.s32.totalorder %v810, 15
      %vm939 = vcmp.lt.s32.totalorder %v811, 15
      %vm940 = vcmp.lt.s32.totalorder %v812, 15
      %vm941 = vcmp.lt.s32.totalorder %v813, 15
      %vm942 = vcmp.lt.s32.totalorder %v814, 15
      %vm943 = vcmp.lt.s32.totalorder %v815, 15
      %vm944 = vcmp.lt.s32.totalorder %v816, 15
      %vm945 = vcmp.lt.s32.totalorder %v817, 15
      %vm946 = vcmp.lt.s32.totalorder %v818, 15
      %vm947 = vcmp.lt.s32.totalorder %v819, 15
      %vm948 = vcmp.lt.s32.totalorder %v820, 15
      %vm949 = vcmp.lt.s32.totalorder %v821, 15
      %vm950 = vcmp.lt.s32.totalorder %v822, 15
      %vm951 = vcmp.lt.s32.totalorder %v823, 15
      %vm952 = vcmp.lt.s32.totalorder %v824, 15
      %vm953 = vcmp.lt.s32.totalorder %v825, 15
      %vm954 = vcmp.lt.s32.totalorder %v826, 15
      %vm955 = vcmp.lt.s32.totalorder %v827, 15
      %vm956 = vcmp.lt.s32.totalorder %v828, 15
      %vm957 = vcmp.lt.s32.totalorder %v829, 15
      %vm958 = vcmp.lt.s32.totalorder %v830, 15
      %vm959 = vcmp.lt.s32.totalorder %v831, 15
      %vm960 = vcmp.lt.s32.totalorder %v832, 15
      %vm961 = vcmp.lt.s32.totalorder %v833, 15
      %vm962 = vcmp.lt.s32.totalorder %v834, 15
      %vm963 = vcmp.lt.s32.totalorder %v835, 15
      %vm964 = vcmp.lt.s32.totalorder %v836, 15
      %v965 = vsel %vm933, 1, 0
      %v966 = vsel %vm934, 1, 0
      %v967 = vsel %vm935, 1, 0
      %v968 = vsel %vm936, 1, 0
      %v969 = vsel %vm937, 1, 0
      %v970 = vsel %vm938, 1, 0
      %v971 = vsel %vm939, 1, 0
      %v972 = vsel %vm940, 1, 0
      %v973 = vsel %vm941, 1, 0
      %v974 = vsel %vm942, 1, 0
      %v975 = vsel %vm943, 1, 0
      %v976 = vsel %vm944, 1, 0
      %v977 = vsel %vm945, 1, 0
      %v978 = vsel %vm946, 1, 0
      %v979 = vsel %vm947, 1, 0
      %v980 = vsel %vm948, 1, 0
      %v981 = vsel %vm949, 1, 0
      %v982 = vsel %vm950, 1, 0
      %v983 = vsel %vm951, 1, 0
      %v984 = vsel %vm952, 1, 0
      %v985 = vsel %vm953, 1, 0
      %v986 = vsel %vm954, 1, 0
      %v987 = vsel %vm955, 1, 0
      %v988 = vsel %vm956, 1, 0
      %v989 = vsel %vm957, 1, 0
      %v990 = vsel %vm958, 1, 0
      %v991 = vsel %vm959, 1, 0
      %v992 = vsel %vm960, 1, 0
      %v993 = vsel %vm961, 1, 0
      %v994 = vsel %vm962, 1, 0
      %v995 = vsel %vm963, 1, 0
      %v996 = vsel %vm964, 1, 0
      %v997 = vcvt.s32.f32 %v965
      %v998 = vcvt.s32.f32 %v966
      %v999 = vcvt.s32.f32 %v967
      %v1000 = vcvt.s32.f32 %v968
      %v1001 = vcvt.s32.f32 %v969
      %v1002 = vcvt.s32.f32 %v970
      %v1003 = vcvt.s32.f32 %v971
      %v1004 = vcvt.s32.f32 %v972
      %v1005 = vcvt.s32.f32 %v973
      %v1006 = vcvt.s32.f32 %v974
      %v1007 = vcvt.s32.f32 %v975
      %v1008 = vcvt.s32.f32 %v976
      %v1009 = vcvt.s32.f32 %v977
      %v1010 = vcvt.s32.f32 %v978
      %v1011 = vcvt.s32.f32 %v979
      %v1012 = vcvt.s32.f32 %v980
      %v1013 = vcvt.s32.f32 %v981
      %v1014 = vcvt.s32.f32 %v982
      %v1015 = vcvt.s32.f32 %v983
      %v1016 = vcvt.s32.f32 %v984
      %v1017 = vcvt.s32.f32 %v985
      %v1018 = vcvt.s32.f32 %v986
      %v1019 = vcvt.s32.f32 %v987
      %v1020 = vcvt.s32.f32 %v988
      %v1021 = vcvt.s32.f32 %v989
      %v1022 = vcvt.s32.f32 %v990
      %v1023 = vcvt.s32.f32 %v991
      %v1024 = vcvt.s32.f32 %v992
      %v1025 = vcvt.s32.f32 %v993
      %v1026 = vcvt.s32.f32 %v994
      %v1027 = vcvt.s32.f32 %v995
      %v1028 = vcvt.s32.f32 %v996
      %v1029 = vld [vmem:[#allocation2 + $0x7] sm:$0xff]
      %v1030 = vld [vmem:[#allocation2 + $0xf] sm:$0xff]
      %v1031 = vld [vmem:[#allocation2 + $0x17] sm:$0xff]
      %v1032 = vld [vmem:[#allocation2 + $0x1f] sm:$0xff]
      %v1033 = vld [vmem:[#allocation2 + $0x27] sm:$0xff]
      %v1034 = vld [vmem:[#allocation2 + $0x2f] sm:$0xff]
      %v1035 = vld [vmem:[#allocation2 + $0x37] sm:$0xff]
      %v1036 = vld [vmem:[#allocation2 + $0x3f] sm:$0xff]
      %v1037 = vld [vmem:[#allocation2 + $0x47] sm:$0xff]
      %v1038 = vld [vmem:[#allocation2 + $0x4f] sm:$0xff]
      %v1039 = vld [vmem:[#allocation2 + $0x57] sm:$0xff]
      %v1040 = vld [vmem:[#allocation2 + $0x5f] sm:$0xff]
      %v1041 = vld [vmem:[#allocation2 + $0x67] sm:$0xff]
      %v1042 = vld [vmem:[#allocation2 + $0x6f] sm:$0xff]
      %v1043 = vld [vmem:[#allocation2 + $0x77] sm:$0xff]
      %v1044 = vld [vmem:[#allocation2 + $0x7f] sm:$0xff]
      %v1045 = vld [vmem:[#allocation2 + $0x87] sm:$0xff]
      %v1046 = vld [vmem:[#allocation2 + $0x8f] sm:$0xff]
      %v1047 = vld [vmem:[#allocation2 + $0x97] sm:$0xff]
      %v1048 = vld [vmem:[#allocation2 + $0x9f] sm:$0xff]
      %v1049 = vld [vmem:[#allocation2 + $0xa7] sm:$0xff]
      %v1050 = vld [vmem:[#allocation2 + $0xaf] sm:$0xff]
      %v1051 = vld [vmem:[#allocation2 + $0xb7] sm:$0xff]
      %v1052 = vld [vmem:[#allocation2 + $0xbf] sm:$0xff]
      %v1053 = vld [vmem:[#allocation2 + $0xc7] sm:$0xff]
      %v1054 = vld [vmem:[#allocation2 + $0xcf] sm:$0xff]
      %v1055 = vld [vmem:[#allocation2 + $0xd7] sm:$0xff]
      %v1056 = vld [vmem:[#allocation2 + $0xdf] sm:$0xff]
      %v1057 = vld [vmem:[#allocation2 + $0xe7] sm:$0xff]
      %v1058 = vld [vmem:[#allocation2 + $0xef] sm:$0xff]
      %v1059 = vld [vmem:[#allocation2 + $0xf7] sm:$0xff]
      %v1060 = vld [vmem:[#allocation2 + $0xff] sm:$0xff]
      %v1061 = vld [vmem:[#allocation2 + $0x107] sm:$0xff]
      %v1062 = vld [vmem:[#allocation2 + $0x10f] sm:$0xff]
      %v1063 = vld [vmem:[#allocation2 + $0x117] sm:$0xff]
      %v1064 = vld [vmem:[#allocation2 + $0x11f] sm:$0xff]
      %1097 = vrot.lane.b32.xlu0 %v1031, 4
      %v1098 = vpop.permute.xlu0 %1097
      %1099 = vrot.lane.b32.xlu0 %v1032, 4
      %v1100 = vpop.permute.xlu0 %1099
      %1101 = vrot.lane.b32.xlu0 %v1033, 4
      %v1102 = vpop.permute.xlu0 %1101
      %1103 = vrot.lane.b32.xlu0 %v1034, 4
      %v1104 = vpop.permute.xlu0 %1103
      %1105 = vrot.lane.b32.xlu0 %v1035, 4
      %v1106 = vpop.permute.xlu0 %1105
      %1107 = vrot.lane.b32.xlu0 %v1036, 4
      %v1108 = vpop.permute.xlu0 %1107
      %1109 = vrot.lane.b32.xlu0 %v1037, 4
      %v1110 = vpop.permute.xlu0 %1109
      %1111 = vrot.lane.b32.xlu0 %v1038, 4
      %v1112 = vpop.permute.xlu0 %1111
      %1113 = vrot.lane.b32.xlu0 %v1039, 4
      %v1114 = vpop.permute.xlu0 %1113
      %1115 = vrot.lane.b32.xlu0 %v1040, 4
      %v1116 = vpop.permute.xlu0 %1115
      %1117 = vrot.lane.b32.xlu0 %v1041, 4
      %v1118 = vpop.permute.xlu0 %1117
      %1119 = vrot.lane.b32.xlu0 %v1042, 4
      %v1120 = vpop.permute.xlu0 %1119
      %1121 = vrot.lane.b32.xlu0 %v1043, 4
      %v1122 = vpop.permute.xlu0 %1121
      %1123 = vrot.lane.b32.xlu0 %v1044, 4
      %v1124 = vpop.permute.xlu0 %1123
      %1125 = vrot.lane.b32.xlu0 %v1045, 4
      %v1126 = vpop.permute.xlu0 %1125
      %1127 = vrot.lane.b32.xlu0 %v1046, 4
      %v1128 = vpop.permute.xlu0 %1127
      %1129 = vrot.lane.b32.xlu0 %v1047, 4
      %v1130 = vpop.permute.xlu0 %1129
      %1131 = vrot.lane.b32.xlu0 %v1048, 4
      %v1132 = vpop.permute.xlu0 %1131
      %1133 = vrot.lane.b32.xlu0 %v1049, 4
      %v1134 = vpop.permute.xlu0 %1133
      %1135 = vrot.lane.b32.xlu0 %v1050, 4
      %v1136 = vpop.permute.xlu0 %1135
      %1137 = vrot.lane.b32.xlu0 %v1051, 4
      %v1138 = vpop.permute.xlu0 %1137
      %1139 = vrot.lane.b32.xlu0 %v1052, 4
      %v1140 = vpop.permute.xlu0 %1139
      %1141 = vrot.lane.b32.xlu0 %v1053, 4
      %v1142 = vpop.permute.xlu0 %1141
      %1143 = vrot.lane.b32.xlu0 %v1054, 4
      %v1144 = vpop.permute.xlu0 %1143
      %1145 = vrot.lane.b32.xlu0 %v1055, 4
      %v1146 = vpop.permute.xlu0 %1145
      %1147 = vrot.lane.b32.xlu0 %v1056, 4
      %v1148 = vpop.permute.xlu0 %1147
      %1149 = vrot.lane.b32.xlu0 %v1057, 4
      %v1150 = vpop.permute.xlu0 %1149
      %1151 = vrot.lane.b32.xlu0 %v1058, 4
      %v1152 = vpop.permute.xlu0 %1151
      %1153 = vrot.lane.b32.xlu0 %v1059, 4
      %v1154 = vpop.permute.xlu0 %1153
      %1155 = vrot.lane.b32.xlu0 %v1060, 4
      %v1156 = vpop.permute.xlu0 %1155
      %1157 = vrot.lane.b32.xlu0 %v1061, 4
      %v1158 = vpop.permute.xlu0 %1157
      %1159 = vrot.lane.b32.xlu0 %v1062, 4
      %v1160 = vpop.permute.xlu0 %1159
      %1195 = vrot.lane.b32.xlu0 %v1033, 8
      %v1196 = vpop.permute.xlu0 %1195
      %1197 = vrot.lane.b32.xlu0 %v1034, 8
      %v1198 = vpop.permute.xlu0 %1197
      %1199 = vrot.lane.b32.xlu0 %v1035, 8
      %v1200 = vpop.permute.xlu0 %1199
      %1201 = vrot.lane.b32.xlu0 %v1036, 8
      %v1202 = vpop.permute.xlu0 %1201
      %1203 = vrot.lane.b32.xlu0 %v1037, 8
      %v1204 = vpop.permute.xlu0 %1203
      %1205 = vrot.lane.b32.xlu0 %v1038, 8
      %v1206 = vpop.permute.xlu0 %1205
      %1207 = vrot.lane.b32.xlu0 %v1039, 8
      %v1208 = vpop.permute.xlu0 %1207
      %1209 = vrot.lane.b32.xlu0 %v1040, 8
      %v1210 = vpop.permute.xlu0 %1209
      %1211 = vrot.lane.b32.xlu0 %v1041, 8
      %v1212 = vpop.permute.xlu0 %1211
      %1213 = vrot.lane.b32.xlu0 %v1042, 8
      %v1214 = vpop.permute.xlu0 %1213
      %1215 = vrot.lane.b32.xlu0 %v1043, 8
      %v1216 = vpop.permute.xlu0 %1215
      %1217 = vrot.lane.b32.xlu0 %v1044, 8
      %v1218 = vpop.permute.xlu0 %1217
      %1219 = vrot.lane.b32.xlu0 %v1045, 8
      %v1220 = vpop.permute.xlu0 %1219
      %1221 = vrot.lane.b32.xlu0 %v1046, 8
      %v1222 = vpop.permute.xlu0 %1221
      %1223 = vrot.lane.b32.xlu0 %v1047, 8
      %v1224 = vpop.permute.xlu0 %1223
      %1225 = vrot.lane.b32.xlu0 %v1048, 8
      %v1226 = vpop.permute.xlu0 %1225
      %1227 = vrot.lane.b32.xlu0 %v1049, 8
      %v1228 = vpop.permute.xlu0 %1227
      %1229 = vrot.lane.b32.xlu0 %v1050, 8
      %v1230 = vpop.permute.xlu0 %1229
      %1231 = vrot.lane.b32.xlu0 %v1051, 8
      %v1232 = vpop.permute.xlu0 %1231
      %1233 = vrot.lane.b32.xlu0 %v1052, 8
      %v1234 = vpop.permute.xlu0 %1233
      %1235 = vrot.lane.b32.xlu0 %v1053, 8
      %v1236 = vpop.permute.xlu0 %1235
      %1237 = vrot.lane.b32.xlu0 %v1054, 8
      %v1238 = vpop.permute.xlu0 %1237
      %1239 = vrot.lane.b32.xlu0 %v1055, 8
      %v1240 = vpop.permute.xlu0 %1239
      %1241 = vrot.lane.b32.xlu0 %v1056, 8
      %v1242 = vpop.permute.xlu0 %1241
      %1243 = vrot.lane.b32.xlu0 %v1057, 8
      %v1244 = vpop.permute.xlu0 %1243
      %1245 = vrot.lane.b32.xlu0 %v1058, 8
      %v1246 = vpop.permute.xlu0 %1245
      %1247 = vrot.lane.b32.xlu0 %v1059, 8
      %v1248 = vpop.permute.xlu0 %1247
      %1249 = vrot.lane.b32.xlu0 %v1060, 8
      %v1250 = vpop.permute.xlu0 %1249
      %1251 = vrot.lane.b32.xlu0 %v1061, 8
      %v1252 = vpop.permute.xlu0 %1251
      %1253 = vrot.lane.b32.xlu0 %v1062, 8
      %v1254 = vpop.permute.xlu0 %1253
      %1255 = vrot.lane.b32.xlu0 %v1063, 8
      %v1256 = vpop.permute.xlu0 %1255
      %1257 = vrot.lane.b32.xlu0 %v1064, 8
      %v1258 = vpop.permute.xlu0 %1257
      %v1291 = vsel %vm381, %v1029, %v1098
      %v1292 = vsel %vm381, %v1030, %v1100
      %v1293 = vsel %vm381, %v1031, %v1102
      %v1294 = vsel %vm381, %v1032, %v1104
      %v1295 = vsel %vm381, %v1033, %v1106
      %v1296 = vsel %vm381, %v1034, %v1108
      %v1297 = vsel %vm381, %v1035, %v1110
      %v1298 = vsel %vm381, %v1036, %v1112
      %v1299 = vsel %vm381, %v1037, %v1114
      %v1300 = vsel %vm381, %v1038, %v1116
      %v1301 = vsel %vm381, %v1039, %v1118
      %v1302 = vsel %vm381, %v1040, %v1120
      %v1303 = vsel %vm381, %v1041, %v1122
      %v1304 = vsel %vm381, %v1042, %v1124
      %v1305 = vsel %vm381, %v1043, %v1126
      %v1306 = vsel %vm381, %v1044, %v1128
      %v1307 = vsel %vm381, %v1045, %v1130
      %v1308 = vsel %vm381, %v1046, %v1132
      %v1309 = vsel %vm381, %v1047, %v1134
      %v1310 = vsel %vm381, %v1048, %v1136
      %v1311 = vsel %vm381, %v1049, %v1138
      %v1312 = vsel %vm381, %v1050, %v1140
      %v1313 = vsel %vm381, %v1051, %v1142
      %v1314 = vsel %vm381, %v1052, %v1144
      %v1315 = vsel %vm381, %v1053, %v1146
      %v1316 = vsel %vm381, %v1054, %v1148
      %v1317 = vsel %vm381, %v1055, %v1150
      %v1318 = vsel %vm381, %v1056, %v1152
      %v1319 = vsel %vm381, %v1057, %v1154
      %v1320 = vsel %vm381, %v1058, %v1156
      %v1321 = vsel %vm381, %v1059, %v1158
      %v1322 = vsel %vm381, %v1060, %v1160
      %vm1323 = vcmask 64512
      %v1324 = vsel %vm1323, %v1291, %v1196
      %v1325 = vsel %vm1323, %v1292, %v1198
      %v1326 = vsel %vm1323, %v1293, %v1200
      %v1327 = vsel %vm1323, %v1294, %v1202
      %v1328 = vsel %vm1323, %v1295, %v1204
      %v1329 = vsel %vm1323, %v1296, %v1206
      %v1330 = vsel %vm1323, %v1297, %v1208
      %v1331 = vsel %vm1323, %v1298, %v1210
      %v1332 = vsel %vm1323, %v1299, %v1212
      %v1333 = vsel %vm1323, %v1300, %v1214
      %v1334 = vsel %vm1323, %v1301, %v1216
      %v1335 = vsel %vm1323, %v1302, %v1218
      %v1336 = vsel %vm1323, %v1303, %v1220
      %v1337 = vsel %vm1323, %v1304, %v1222
      %v1338 = vsel %vm1323, %v1305, %v1224
      %v1339 = vsel %vm1323, %v1306, %v1226
      %v1340 = vsel %vm1323, %v1307, %v1228
      %v1341 = vsel %vm1323, %v1308, %v1230
      %v1342 = vsel %vm1323, %v1309, %v1232
      %v1343 = vsel %vm1323, %v1310, %v1234
      %v1344 = vsel %vm1323, %v1311, %v1236
      %v1345 = vsel %vm1323, %v1312, %v1238
      %v1346 = vsel %vm1323, %v1313, %v1240
      %v1347 = vsel %vm1323, %v1314, %v1242
      %v1348 = vsel %vm1323, %v1315, %v1244
      %v1349 = vsel %vm1323, %v1316, %v1246
      %v1350 = vsel %vm1323, %v1317, %v1248
      %v1351 = vsel %vm1323, %v1318, %v1250
      %v1352 = vsel %vm1323, %v1319, %v1252
      %v1353 = vsel %vm1323, %v1320, %v1254
      %v1354 = vsel %vm1323, %v1321, %v1256
      %v1355 = vsel %vm1323, %v1322, %v1258
      %v1356 = vmul.f32 %v1324, %v901
      %v1357 = vmul.f32 %v1325, %v902
      %v1358 = vmul.f32 %v1326, %v903
      %v1359 = vmul.f32 %v1327, %v904
      %v1360 = vmul.f32 %v1328, %v905
      %v1361 = vmul.f32 %v1329, %v906
      %v1362 = vmul.f32 %v1330, %v907
      %v1363 = vmul.f32 %v1331, %v908
      %v1364 = vmul.f32 %v1332, %v909
      %v1365 = vmul.f32 %v1333, %v910
      %v1366 = vmul.f32 %v1334, %v911
      %v1367 = vmul.f32 %v1335, %v912
      %v1368 = vmul.f32 %v1336, %v913
      %v1369 = vmul.f32 %v1337, %v914
      %v1370 = vmul.f32 %v1338, %v915
      %v1371 = vmul.f32 %v1339, %v916
      %v1372 = vmul.f32 %v1340, %v917
      %v1373 = vmul.f32 %v1341, %v918
      %v1374 = vmul.f32 %v1342, %v919
      %v1375 = vmul.f32 %v1343, %v920
      %v1376 = vmul.f32 %v1344, %v921
      %v1377 = vmul.f32 %v1345, %v922
      %v1378 = vmul.f32 %v1346, %v923
      %v1379 = vmul.f32 %v1347, %v924
      %v1380 = vmul.f32 %v1348, %v925
      %v1381 = vmul.f32 %v1349, %v926
      %v1382 = vmul.f32 %v1350, %v927
      %v1383 = vmul.f32 %v1351, %v928
      %v1384 = vmul.f32 %v1352, %v929
      %v1385 = vmul.f32 %v1353, %v930
      %v1386 = vmul.f32 %v1354, %v931
      %v1387 = vmul.f32 %v1355, %v932
      %v1388 = vld [vmem:[%s3] sm:$0xff]
      %v1389 = vld [vmem:[%s3 + $0x8] sm:$0xf]
      %v1390 = vld [vmem:[#allocation2 + $0x8] sm:$0xff]
      %v1391 = vld [vmem:[#allocation2 + $0x10] sm:$0xff]
      %v1392 = vld [vmem:[#allocation2 + $0x18] sm:$0xff]
      %v1393 = vld [vmem:[#allocation2 + $0x20] sm:$0xff]
      %v1394 = vld [vmem:[#allocation2 + $0x28] sm:$0xff]
      %v1395 = vld [vmem:[#allocation2 + $0x30] sm:$0xff]
      %v1396 = vld [vmem:[#allocation2 + $0x38] sm:$0xff]
      %v1397 = vld [vmem:[#allocation2 + $0x40] sm:$0xff]
      %v1398 = vld [vmem:[#allocation2 + $0x48] sm:$0xff]
      %v1399 = vld [vmem:[#allocation2 + $0x50] sm:$0xff]
      %v1400 = vld [vmem:[#allocation2 + $0x58] sm:$0xff]
      %v1401 = vld [vmem:[#allocation2 + $0x60] sm:$0xff]
      %v1402 = vld [vmem:[#allocation2 + $0x68] sm:$0xff]
      %v1403 = vld [vmem:[#allocation2 + $0x70] sm:$0xff]
      %v1404 = vld [vmem:[#allocation2 + $0x78] sm:$0xff]
      %v1405 = vld [vmem:[#allocation2 + $0x80] sm:$0xff]
      %v1406 = vld [vmem:[#allocation2 + $0x88] sm:$0xff]
      %v1407 = vld [vmem:[#allocation2 + $0x90] sm:$0xff]
      %v1408 = vld [vmem:[#allocation2 + $0x98] sm:$0xff]
      %v1409 = vld [vmem:[#allocation2 + $0xa0] sm:$0xff]
      %v1410 = vld [vmem:[#allocation2 + $0xa8] sm:$0xff]
      %v1411 = vld [vmem:[#allocation2 + $0xb0] sm:$0xff]
      %v1412 = vld [vmem:[#allocation2 + $0xb8] sm:$0xff]
      %v1413 = vld [vmem:[#allocation2 + $0xc0] sm:$0xff]
      %v1414 = vld [vmem:[#allocation2 + $0xc8] sm:$0xff]
      %v1415 = vld [vmem:[#allocation2 + $0xd0] sm:$0xff]
      %v1416 = vld [vmem:[#allocation2 + $0xd8] sm:$0xff]
      %v1417 = vld [vmem:[#allocation2 + $0xe0] sm:$0xff]
      %v1418 = vld [vmem:[#allocation2 + $0xe8] sm:$0xff]
      %v1419 = vld [vmem:[#allocation2 + $0xf0] sm:$0xff]
      %v1420 = vld [vmem:[#allocation2 + $0xf8] sm:$0xff]
      %v1421 = vld [vmem:[#allocation2 + $0x100] sm:$0xff]
      %v1422 = vld [vmem:[#allocation2 + $0x108] sm:$0xff]
      %v1423 = vld [vmem:[#allocation2 + $0x110] sm:$0xff]
      %v1424 = vld [vmem:[#allocation2 + $0x118] sm:$0xff]
      %v1425 = vld [vmem:[#allocation2 + $0x120] sm:$0xff]
      %1458 = vrot.lane.b32.xlu0 %v1392, 4
      %v1459 = vpop.permute.xlu0 %1458
      %1460 = vrot.lane.b32.xlu0 %v1393, 4
      %v1461 = vpop.permute.xlu0 %1460
      %1462 = vrot.lane.b32.xlu0 %v1394, 4
      %v1463 = vpop.permute.xlu0 %1462
      %1464 = vrot.lane.b32.xlu0 %v1395, 4
      %v1465 = vpop.permute.xlu0 %1464
      %1466 = vrot.lane.b32.xlu0 %v1396, 4
      %v1467 = vpop.permute.xlu0 %1466
      %1468 = vrot.lane.b32.xlu0 %v1397, 4
      %v1469 = vpop.permute.xlu0 %1468
      %1470 = vrot.lane.b32.xlu0 %v1398, 4
      %v1471 = vpop.permute.xlu0 %1470
      %1472 = vrot.lane.b32.xlu0 %v1399, 4
      %v1473 = vpop.permute.xlu0 %1472
      %1474 = vrot.lane.b32.xlu0 %v1400, 4
      %v1475 = vpop.permute.xlu0 %1474
      %1476 = vrot.lane.b32.xlu0 %v1401, 4
      %v1477 = vpop.permute.xlu0 %1476
      %1478 = vrot.lane.b32.xlu0 %v1402, 4
      %v1479 = vpop.permute.xlu0 %1478
      %1480 = vrot.lane.b32.xlu0 %v1403, 4
      %v1481 = vpop.permute.xlu0 %1480
      %1482 = vrot.lane.b32.xlu0 %v1404, 4
      %v1483 = vpop.permute.xlu0 %1482
      %1484 = vrot.lane.b32.xlu0 %v1405, 4
      %v1485 = vpop.permute.xlu0 %1484
      %1486 = vrot.lane.b32.xlu0 %v1406, 4
      %v1487 = vpop.permute.xlu0 %1486
      %1488 = vrot.lane.b32.xlu0 %v1407, 4
      %v1489 = vpop.permute.xlu0 %1488
      %1490 = vrot.lane.b32.xlu0 %v1408, 4
      %v1491 = vpop.permute.xlu0 %1490
      %1492 = vrot.lane.b32.xlu0 %v1409, 4
      %v1493 = vpop.permute.xlu0 %1492
      %1494 = vrot.lane.b32.xlu0 %v1410, 4
      %v1495 = vpop.permute.xlu0 %1494
      %1496 = vrot.lane.b32.xlu0 %v1411, 4
      %v1497 = vpop.permute.xlu0 %1496
      %1498 = vrot.lane.b32.xlu0 %v1412, 4
      %v1499 = vpop.permute.xlu0 %1498
      %1500 = vrot.lane.b32.xlu0 %v1413, 4
      %v1501 = vpop.permute.xlu0 %1500
      %1502 = vrot.lane.b32.xlu0 %v1414, 4
      %v1503 = vpop.permute.xlu0 %1502
      %1504 = vrot.lane.b32.xlu0 %v1415, 4
      %v1505 = vpop.permute.xlu0 %1504
      %1506 = vrot.lane.b32.xlu0 %v1416, 4
      %v1507 = vpop.permute.xlu0 %1506
      %1508 = vrot.lane.b32.xlu0 %v1417, 4
      %v1509 = vpop.permute.xlu0 %1508
      %1510 = vrot.lane.b32.xlu0 %v1418, 4
      %v1511 = vpop.permute.xlu0 %1510
      %1512 = vrot.lane.b32.xlu0 %v1419, 4
      %v1513 = vpop.permute.xlu0 %1512
      %1514 = vrot.lane.b32.xlu0 %v1420, 4
      %v1515 = vpop.permute.xlu0 %1514
      %1516 = vrot.lane.b32.xlu0 %v1421, 4
      %v1517 = vpop.permute.xlu0 %1516
      %1518 = vrot.lane.b32.xlu0 %v1422, 4
      %v1519 = vpop.permute.xlu0 %1518
      %1520 = vrot.lane.b32.xlu0 %v1423, 4
      %v1521 = vpop.permute.xlu0 %1520
      %1556 = vrot.lane.b32.xlu0 %v1394, 8
      %v1557 = vpop.permute.xlu0 %1556
      %1558 = vrot.lane.b32.xlu0 %v1395, 8
      %v1559 = vpop.permute.xlu0 %1558
      %1560 = vrot.lane.b32.xlu0 %v1396, 8
      %v1561 = vpop.permute.xlu0 %1560
      %1562 = vrot.lane.b32.xlu0 %v1397, 8
      %v1563 = vpop.permute.xlu0 %1562
      %1564 = vrot.lane.b32.xlu0 %v1398, 8
      %v1565 = vpop.permute.xlu0 %1564
      %1566 = vrot.lane.b32.xlu0 %v1399, 8
      %v1567 = vpop.permute.xlu0 %1566
      %1568 = vrot.lane.b32.xlu0 %v1400, 8
      %v1569 = vpop.permute.xlu0 %1568
      %1570 = vrot.lane.b32.xlu0 %v1401, 8
      %v1571 = vpop.permute.xlu0 %1570
      %1572 = vrot.lane.b32.xlu0 %v1402, 8
      %v1573 = vpop.permute.xlu0 %1572
      %1574 = vrot.lane.b32.xlu0 %v1403, 8
      %v1575 = vpop.permute.xlu0 %1574
      %1576 = vrot.lane.b32.xlu0 %v1404, 8
      %v1577 = vpop.permute.xlu0 %1576
      %1578 = vrot.lane.b32.xlu0 %v1405, 8
      %v1579 = vpop.permute.xlu0 %1578
      %1580 = vrot.lane.b32.xlu0 %v1406, 8
      %v1581 = vpop.permute.xlu0 %1580
      %1582 = vrot.lane.b32.xlu0 %v1407, 8
      %v1583 = vpop.permute.xlu0 %1582
      %1584 = vrot.lane.b32.xlu0 %v1408, 8
      %v1585 = vpop.permute.xlu0 %1584
      %1586 = vrot.lane.b32.xlu0 %v1409, 8
      %v1587 = vpop.permute.xlu0 %1586
      %1588 = vrot.lane.b32.xlu0 %v1410, 8
      %v1589 = vpop.permute.xlu0 %1588
      %1590 = vrot.lane.b32.xlu0 %v1411, 8
      %v1591 = vpop.permute.xlu0 %1590
      %1592 = vrot.lane.b32.xlu0 %v1412, 8
      %v1593 = vpop.permute.xlu0 %1592
      %1594 = vrot.lane.b32.xlu0 %v1413, 8
      %v1595 = vpop.permute.xlu0 %1594
      %1596 = vrot.lane.b32.xlu0 %v1414, 8
      %v1597 = vpop.permute.xlu0 %1596
      %1598 = vrot.lane.b32.xlu0 %v1415, 8
      %v1599 = vpop.permute.xlu0 %1598
      %1600 = vrot.lane.b32.xlu0 %v1416, 8
      %v1601 = vpop.permute.xlu0 %1600
      %1602 = vrot.lane.b32.xlu0 %v1417, 8
      %v1603 = vpop.permute.xlu0 %1602
      %1604 = vrot.lane.b32.xlu0 %v1418, 8
      %v1605 = vpop.permute.xlu0 %1604
      %1606 = vrot.lane.b32.xlu0 %v1419, 8
      %v1607 = vpop.permute.xlu0 %1606
      %1608 = vrot.lane.b32.xlu0 %v1420, 8
      %v1609 = vpop.permute.xlu0 %1608
      %1610 = vrot.lane.b32.xlu0 %v1421, 8
      %v1611 = vpop.permute.xlu0 %1610
      %1612 = vrot.lane.b32.xlu0 %v1422, 8
      %v1613 = vpop.permute.xlu0 %1612
      %1614 = vrot.lane.b32.xlu0 %v1423, 8
      %v1615 = vpop.permute.xlu0 %1614
      %1616 = vrot.lane.b32.xlu0 %v1424, 8
      %v1617 = vpop.permute.xlu0 %1616
      %1618 = vrot.lane.b32.xlu0 %v1425, 8
      %v1619 = vpop.permute.xlu0 %1618
      %v1652 = vsel %vm381, %v1390, %v1459
      %v1653 = vsel %vm381, %v1391, %v1461
      %v1654 = vsel %vm381, %v1392, %v1463
      %v1655 = vsel %vm381, %v1393, %v1465
      %v1656 = vsel %vm381, %v1394, %v1467
      %v1657 = vsel %vm381, %v1395, %v1469
      %v1658 = vsel %vm381, %v1396, %v1471
      %v1659 = vsel %vm381, %v1397, %v1473
      %v1660 = vsel %vm381, %v1398, %v1475
      %v1661 = vsel %vm381, %v1399, %v1477
      %v1662 = vsel %vm381, %v1400, %v1479
      %v1663 = vsel %vm381, %v1401, %v1481
      %v1664 = vsel %vm381, %v1402, %v1483
      %v1665 = vsel %vm381, %v1403, %v1485
      %v1666 = vsel %vm381, %v1404, %v1487
      %v1667 = vsel %vm381, %v1405, %v1489
      %v1668 = vsel %vm381, %v1406, %v1491
      %v1669 = vsel %vm381, %v1407, %v1493
      %v1670 = vsel %vm381, %v1408, %v1495
      %v1671 = vsel %vm381, %v1409, %v1497
      %v1672 = vsel %vm381, %v1410, %v1499
      %v1673 = vsel %vm381, %v1411, %v1501
      %v1674 = vsel %vm381, %v1412, %v1503
      %v1675 = vsel %vm381, %v1413, %v1505
      %v1676 = vsel %vm381, %v1414, %v1507
      %v1677 = vsel %vm381, %v1415, %v1509
      %v1678 = vsel %vm381, %v1416, %v1511
      %v1679 = vsel %vm381, %v1417, %v1513
      %v1680 = vsel %vm381, %v1418, %v1515
      %v1681 = vsel %vm381, %v1419, %v1517
      %v1682 = vsel %vm381, %v1420, %v1519
      %v1683 = vsel %vm381, %v1421, %v1521
      %v1684 = vsel %vm1323, %v1652, %v1557
      %v1685 = vsel %vm1323, %v1653, %v1559
      %v1686 = vsel %vm1323, %v1654, %v1561
      %v1687 = vsel %vm1323, %v1655, %v1563
      %v1688 = vsel %vm1323, %v1656, %v1565
      %v1689 = vsel %vm1323, %v1657, %v1567
      %v1690 = vsel %vm1323, %v1658, %v1569
      %v1691 = vsel %vm1323, %v1659, %v1571
      %v1692 = vsel %vm1323, %v1660, %v1573
      %v1693 = vsel %vm1323, %v1661, %v1575
      %v1694 = vsel %vm1323, %v1662, %v1577
      %v1695 = vsel %vm1323, %v1663, %v1579
      %v1696 = vsel %vm1323, %v1664, %v1581
      %v1697 = vsel %vm1323, %v1665, %v1583
      %v1698 = vsel %vm1323, %v1666, %v1585
      %v1699 = vsel %vm1323, %v1667, %v1587
      %v1700 = vsel %vm1323, %v1668, %v1589
      %v1701 = vsel %vm1323, %v1669, %v1591
      %v1702 = vsel %vm1323, %v1670, %v1593
      %v1703 = vsel %vm1323, %v1671, %v1595
      %v1704 = vsel %vm1323, %v1672, %v1597
      %v1705 = vsel %vm1323, %v1673, %v1599
      %v1706 = vsel %vm1323, %v1674, %v1601
      %v1707 = vsel %vm1323, %v1675, %v1603
      %v1708 = vsel %vm1323, %v1676, %v1605
      %v1709 = vsel %vm1323, %v1677, %v1607
      %v1710 = vsel %vm1323, %v1678, %v1609
      %v1711 = vsel %vm1323, %v1679, %v1611
      %v1712 = vsel %vm1323, %v1680, %v1613
      %v1713 = vsel %vm1323, %v1681, %v1615
      %v1714 = vsel %vm1323, %v1682, %v1617
      %v1715 = vsel %vm1323, %v1683, %v1619
      %s1716 = scalar_lea.vmem %s3, 16
      %v1717 = vld [vmem:[%s1716] sm:$0xff]
      %v1718 = vld [vmem:[%s1716 + $0x8] sm:$0xf]
      %vm1719 = vcmask 97280
      %v1721 = vsel %vm1719, %v1684, 0
      %v1724 = vsel %vm1719, %v1685, 0
      %v1727 = vsel %vm1719, %v1686, 0
      %v1730 = vsel %vm1719, %v1687, 0
      %v1733 = vsel %vm1719, %v1688, 0
      %v1736 = vsel %vm1719, %v1689, 0
      %v1739 = vsel %vm1719, %v1690, 0
      %v1742 = vsel %vm1719, %v1691, 0
      %v1745 = vsel %vm1719, %v1692, 0
      %v1748 = vsel %vm1719, %v1693, 0
      %v1751 = vsel %vm1719, %v1694, 0
      %v1754 = vsel %vm1719, %v1695, 0
      %v1757 = vsel %vm1719, %v1696, 0
      %v1760 = vsel %vm1719, %v1697, 0
      %v1763 = vsel %vm1719, %v1698, 0
      %v1766 = vsel %vm1719, %v1699, 0
      %v1769 = vsel %vm1719, %v1700, 0
      %v1772 = vsel %vm1719, %v1701, 0
      %v1775 = vsel %vm1719, %v1702, 0
      %v1778 = vsel %vm1719, %v1703, 0
      %v1781 = vsel %vm1719, %v1704, 0
      %v1784 = vsel %vm1719, %v1705, 0
      %v1787 = vsel %vm1719, %v1706, 0
      %v1790 = vsel %vm1719, %v1707, 0
      %v1793 = vsel %vm1719, %v1708, 0
      %v1796 = vsel %vm1719, %v1709, 0
      %v1799 = vsel %vm1719, %v1710, 0
      %v1802 = vsel %vm1719, %v1711, 0
      %v1805 = vsel %vm1719, %v1712, 0
      %v1808 = vsel %vm1719, %v1713, 0
      %v1811 = vsel %vm1719, %v1714, 0
      %v1814 = vsel %vm1719, %v1715, 0
      %vm1816 = vcmask 1043456
      %v1818 = vsel %vm1816, %v1718, 0
      %1820 = vmatprep.subr.mxu0 0.0
      %1821 = vmatpush1.msra.mxu0 %v1717
      %1822 = vmatprep.subr.mxu0 0.0
      %1823 = vmatpush1.msra.mxu0 %v1818
      %1824 = vmatprep.subr.mxu0 0.0
      %1825 = vmatpush1.msra.mxu0 0.0
      %1826 = vmatprep.subr.mxu0 0.0
      %1827 = vmatpush1.msra.mxu0 0.0
      %1828 = vmatprep.subr.mxu0 0.0
      %1829 = vmatpush1.msra.mxu0 0.0
      %1830 = vmatprep.subr.mxu0 0.0
      %1831 = vmatpush1.msra.mxu0 0.0
      %1832 = vmatprep.subr.mxu0 0.0
      %1833 = vmatpush1.msra.mxu0 0.0
      %1834 = vmatprep.subr.mxu0 0.0
      %1835 = vmatpush1.msra.mxu0 0.0
      %1836 = vmatprep.subr.mxu0 0.0
      %1837 = vmatpush1.msra.mxu0 0.0
      %1838 = vmatprep.subr.mxu0 0.0
      %1839 = vmatpush1.msra.mxu0 0.0
      %1840 = vmatprep.subr.mxu0 0.0
      %1841 = vmatpush1.msra.mxu0 0.0
      %1842 = vmatprep.subr.mxu0 0.0
      %1843 = vmatpush1.msra.mxu0 0.0
      %1844 = vmatprep.subr.mxu0 0.0
      %1845 = vmatpush1.msra.mxu0 0.0
      %1846 = vmatprep.subr.mxu0 0.0
      %1847 = vmatpush1.msra.mxu0 0.0
      %1848 = vmatprep.subr.mxu0 0.0
      %1849 = vmatpush1.msra.mxu0 0.0
      %1850 = vmatprep.subr.mxu0 0.0
      %1851 = vmatpush1.msra.mxu0 0.0
      %1852 = vmatprep.subr.mxu0 0.0
      %1853 = vmatpush1.msra.mxu0 0.0
      %1854 = vmatprep.subr.mxu0 0.0
      %1855 = vmatpush1.msra.mxu0 0.0
      %1856 = vmatprep.subr.mxu0 0.0
      %1857 = vmatpush1.msra.mxu0 0.0
      %1858 = vmatprep.subr.mxu0 0.0
      %1859 = vmatpush1.msra.mxu0 0.0
      %1860 = vmatprep.subr.mxu0 0.0
      %1861 = vmatpush1.msra.mxu0 0.0
      %1862 = vmatprep.subr.mxu0 0.0
      %1863 = vmatpush1.msra.mxu0 0.0
      %1864 = vmatprep.subr.mxu0 0.0
      %1865 = vmatpush1.msra.mxu0 0.0
      %1866 = vmatprep.subr.mxu0 0.0
      %1867 = vmatpush1.msra.mxu0 0.0
      %1868 = vmatprep.subr.mxu0 0.0
      %1869 = vmatpush1.msra.mxu0 0.0
      %1870 = vmatprep.subr.mxu0 0.0
      %1871 = vmatpush1.msra.mxu0 0.0
      %1872 = vmatprep.subr.mxu0 0.0
      %1873 = vmatpush1.msra.mxu0 0.0
      %1874 = vmatprep.subr.mxu0 0.0
      %1875 = vmatpush1.msra.mxu0 0.0
      %1876 = vmatprep.subr.mxu0 0.0
      %1877 = vmatpush1.msra.mxu0 0.0
      %1878 = vmatprep.subr.mxu0 0.0
      %1879 = vmatpush1.msra.mxu0 0.0
      %1880 = vmatprep.subr.mxu0 0.0
      %1881 = vmatpush1.msra.mxu0 0.0
      %1882 = vmatprep.subr.mxu0 0.0
      %1883 = vmatpush1.msra.mxu0 0.0
      %1884 = vmatprep.mubr.f32.mxu0 0.0
      %1885 = vmatmul.mubr.f32.gmra.mrb[0].mxu0 %v1721
      %v1886 = vpop.f32.mrb[0].mxu0
      %v1887 = vadd.f32 0.0, %v1886
      %v1888 = vpop.f32.mrb[0].mxu0
      %1889 = vmatprep.mubr.f32.mxu0 0.0
      %1890 = vmatmul.mubr.f32.gmra.mrb[0].mxu0 %v1724
      %v1891 = vpop.f32.mrb[0].mxu0
      %v1892 = vadd.f32 0.0, %v1891
      %v1893 = vpop.f32.mrb[0].mxu0
      %1894 = vmatprep.mubr.f32.mxu0 0.0
      %1895 = vmatmul.mubr.f32.gmra.mrb[0].mxu0 %v1727
      %v1896 = vpop.f32.mrb[0].mxu0
      %v1897 = vadd.f32 0.0, %v1896
      %v1898 = vpop.f32.mrb[0].mxu0
      %1899 = vmatprep.mubr.f32.mxu0 0.0
      %1900 = vmatmul.mubr.f32.gmra.mrb[0].mxu0 %v1730
      %v1901 = vpop.f32.mrb[0].mxu0
      %v1902 = vadd.f32 0.0, %v1901
      %v1903 = vpop.f32.mrb[0].mxu0
      %1904 = vmatprep.mubr.f32.mxu0 0.0
      %1905 = vmatmul.mubr.f32.gmra.mrb[0].mxu0 %v1733
      %v1906 = vpop.f32.mrb[0].mxu0
      %v1907 = vadd.f32 0.0, %v1906
      %v1908 = vpop.f32.mrb[0].mxu0
      %1909 = vmatprep.mubr.f32.mxu0 0.0
      %1910 = vmatmul.mubr.f32.gmra.mrb[0].mxu0 %v1736
      %v1911 = vpop.f32.mrb[0].mxu0
      %v1912 = vadd.f32 0.0, %v1911
      %v1913 = vpop.f32.mrb[0].mxu0
      %1914 = vmatprep.mubr.f32.mxu0 0.0
      %1915 = vmatmul.mubr.f32.gmra.mrb[0].mxu0 %v1739
      %v1916 = vpop.f32.mrb[0].mxu0
      %v1917 = vadd.f32 0.0, %v1916
      %v1918 = vpop.f32.mrb[0].mxu0
      %1919 = vmatprep.mubr.f32.mxu0 0.0
      %1920 = vmatmul.mubr.f32.gmra.mrb[0].mxu0 %v1742
      %v1921 = vpop.f32.mrb[0].mxu0
      %v1922 = vadd.f32 0.0, %v1921
      %v1923 = vpop.f32.mrb[0].mxu0
      %1924 = vmatprep.mubr.f32.mxu0 0.0
      %1925 = vmatmul.mubr.f32.gmra.mrb[0].mxu0 %v1745
      %v1926 = vpop.f32.mrb[0].mxu0
      %v1927 = vadd.f32 0.0, %v1926
      %v1928 = vpop.f32.mrb[0].mxu0
      %1929 = vmatprep.mubr.f32.mxu0 0.0
      %1930 = vmatmul.mubr.f32.gmra.mrb[0].mxu0 %v1748
      %v1931 = vpop.f32.mrb[0].mxu0
      %v1932 = vadd.f32 0.0, %v1931
      %v1933 = vpop.f32.mrb[0].mxu0
      %1934 = vmatprep.mubr.f32.mxu0 0.0
      %1935 = vmatmul.mubr.f32.gmra.mrb[0].mxu0 %v1751
      %v1936 = vpop.f32.mrb[0].mxu0
      %v1937 = vadd.f32 0.0, %v1936
      %v1938 = vpop.f32.mrb[0].mxu0
      %1939 = vmatprep.mubr.f32.mxu0 0.0
      %1940 = vmatmul.mubr.f32.gmra.mrb[0].mxu0 %v1754
      %v1941 = vpop.f32.mrb[0].mxu0
      %v1942 = vadd.f32 0.0, %v1941
      %v1943 = vpop.f32.mrb[0].mxu0
      %1944 = vmatprep.mubr.f32.mxu0 0.0
      %1945 = vmatmul.mubr.f32.gmra.mrb[0].mxu0 %v1757
      %v1946 = vpop.f32.mrb[0].mxu0
      %v1947 = vadd.f32 0.0, %v1946
      %v1948 = vpop.f32.mrb[0].mxu0
      %1949 = vmatprep.mubr.f32.mxu0 0.0
      %1950 = vmatmul.mubr.f32.gmra.mrb[0].mxu0 %v1760
      %v1951 = vpop.f32.mrb[0].mxu0
      %v1952 = vadd.f32 0.0, %v1951
      %v1953 = vpop.f32.mrb[0].mxu0
      %1954 = vmatprep.mubr.f32.mxu0 0.0
      %1955 = vmatmul.mubr.f32.gmra.mrb[0].mxu0 %v1763
      %v1956 = vpop.f32.mrb[0].mxu0
      %v1957 = vadd.f32 0.0, %v1956
      %v1958 = vpop.f32.mrb[0].mxu0
      %1959 = vmatprep.mubr.f32.mxu0 0.0
      %1960 = vmatmul.mubr.f32.gmra.mrb[0].mxu0 %v1766
      %v1961 = vpop.f32.mrb[0].mxu0
      %v1962 = vadd.f32 0.0, %v1961
      %v1963 = vpop.f32.mrb[0].mxu0
      %1964 = vmatprep.mubr.f32.mxu0 0.0
      %1965 = vmatmul.mubr.f32.gmra.mrb[0].mxu0 %v1769
      %v1966 = vpop.f32.mrb[0].mxu0
      %v1967 = vadd.f32 0.0, %v1966
      %v1968 = vpop.f32.mrb[0].mxu0
      %1969 = vmatprep.mubr.f32.mxu0 0.0
      %1970 = vmatmul.mubr.f32.gmra.mrb[0].mxu0 %v1772
      %v1971 = vpop.f32.mrb[0].mxu0
      %v1972 = vadd.f32 0.0, %v1971
      %v1973 = vpop.f32.mrb[0].mxu0
      %1974 = vmatprep.mubr.f32.mxu0 0.0
      %1975 = vmatmul.mubr.f32.gmra.mrb[0].mxu0 %v1775
      %v1976 = vpop.f32.mrb[0].mxu0
      %v1977 = vadd.f32 0.0, %v1976
      %v1978 = vpop.f32.mrb[0].mxu0
      %1979 = vmatprep.mubr.f32.mxu0 0.0
      %1980 = vmatmul.mubr.f32.gmra.mrb[0].mxu0 %v1778
      %v1981 = vpop.f32.mrb[0].mxu0
      %v1982 = vadd.f32 0.0, %v1981
      %v1983 = vpop.f32.mrb[0].mxu0
      %1984 = vmatprep.mubr.f32.mxu0 0.0
      %1985 = vmatmul.mubr.f32.gmra.mrb[0].mxu0 %v1781
      %v1986 = vpop.f32.mrb[0].mxu0
      %v1987 = vadd.f32 0.0, %v1986
      %v1988 = vpop.f32.mrb[0].mxu0
      %1989 = vmatprep.mubr.f32.mxu0 0.0
      %1990 = vmatmul.mubr.f32.gmra.mrb[0].mxu0 %v1784
      %v1991 = vpop.f32.mrb[0].mxu0
      %v1992 = vadd.f32 0.0, %v1991
      %v1993 = vpop.f32.mrb[0].mxu0
      %1994 = vmatprep.mubr.f32.mxu0 0.0
      %1995 = vmatmul.mubr.f32.gmra.mrb[0].mxu0 %v1787
      %v1996 = vpop.f32.mrb[0].mxu0
      %v1997 = vadd.f32 0.0, %v1996
      %v1998 = vpop.f32.mrb[0].mxu0
      %1999 = vmatprep.mubr.f32.mxu0 0.0
      %2000 = vmatmul.mubr.f32.gmra.mrb[0].mxu0 %v1790
      %v2001 = vpop.f32.mrb[0].mxu0
      %v2002 = vadd.f32 0.0, %v2001
      %v2003 = vpop.f32.mrb[0].mxu0
      %2004 = vmatprep.mubr.f32.mxu0 0.0
      %2005 = vmatmul.mubr.f32.gmra.mrb[0].mxu0 %v1793
      %v2006 = vpop.f32.mrb[0].mxu0
      %v2007 = vadd.f32 0.0, %v2006
      %v2008 = vpop.f32.mrb[0].mxu0
      %2009 = vmatprep.mubr.f32.mxu0 0.0
      %2010 = vmatmul.mubr.f32.gmra.mrb[0].mxu0 %v1796
      %v2011 = vpop.f32.mrb[0].mxu0
      %v2012 = vadd.f32 0.0, %v2011
      %v2013 = vpop.f32.mrb[0].mxu0
      %2014 = vmatprep.mubr.f32.mxu0 0.0
      %2015 = vmatmul.mubr.f32.gmra.mrb[0].mxu0 %v1799
      %v2016 = vpop.f32.mrb[0].mxu0
      %v2017 = vadd.f32 0.0, %v2016
      %v2018 = vpop.f32.mrb[0].mxu0
      %2019 = vmatprep.mubr.f32.mxu0 0.0
      %2020 = vmatmul.mubr.f32.gmra.mrb[0].mxu0 %v1802
      %v2021 = vpop.f32.mrb[0].mxu0
      %v2022 = vadd.f32 0.0, %v2021
      %v2023 = vpop.f32.mrb[0].mxu0
      %2024 = vmatprep.mubr.f32.mxu0 0.0
      %2025 = vmatmul.mubr.f32.gmra.mrb[0].mxu0 %v1805
      %v2026 = vpop.f32.mrb[0].mxu0
      %v2027 = vadd.f32 0.0, %v2026
      %v2028 = vpop.f32.mrb[0].mxu0
      %2029 = vmatprep.mubr.f32.mxu0 0.0
      %2030 = vmatmul.mubr.f32.gmra.mrb[0].mxu0 %v1808
      %v2031 = vpop.f32.mrb[0].mxu0
      %v2032 = vadd.f32 0.0, %v2031
      %v2033 = vpop.f32.mrb[0].mxu0
      %2034 = vmatprep.mubr.f32.mxu0 0.0
      %2035 = vmatmul.mubr.f32.gmra.mrb[0].mxu0 %v1811
      %v2036 = vpop.f32.mrb[0].mxu0
      %v2037 = vadd.f32 0.0, %v2036
      %v2038 = vpop.f32.mrb[0].mxu0
      %2039 = vmatprep.mubr.f32.mxu0 0.0
      %2040 = vmatmul.mubr.f32.gmra.mrb[0].mxu0 %v1814
      %v2041 = vpop.f32.mrb[0].mxu0
      %v2042 = vadd.f32 0.0, %v2041
      %v2043 = vpop.f32.mrb[0].mxu0
      %2044 = vdwg.mxu0
      %v2046 = vsel %vm1719, %v1356, 0
      %v2049 = vsel %vm1719, %v1357, 0
      %v2052 = vsel %vm1719, %v1358, 0
      %v2055 = vsel %vm1719, %v1359, 0
      %v2058 = vsel %vm1719, %v1360, 0
      %v2061 = vsel %vm1719, %v1361, 0
      %v2064 = vsel %vm1719, %v1362, 0
      %v2067 = vsel %vm1719, %v1363, 0
      %v2070 = vsel %vm1719, %v1364, 0
      %v2073 = vsel %vm1719, %v1365, 0
      %v2076 = vsel %vm1719, %v1366, 0
      %v2079 = vsel %vm1719, %v1367, 0
      %v2082 = vsel %vm1719, %v1368, 0
      %v2085 = vsel %vm1719, %v1369, 0
      %v2088 = vsel %vm1719, %v1370, 0
      %v2091 = vsel %vm1719, %v1371, 0
      %v2094 = vsel %vm1719, %v1372, 0
      %v2097 = vsel %vm1719, %v1373, 0
      %v2100 = vsel %vm1719, %v1374, 0
      %v2103 = vsel %vm1719, %v1375, 0
      %v2106 = vsel %vm1719, %v1376, 0
      %v2109 = vsel %vm1719, %v1377, 0
      %v2112 = vsel %vm1719, %v1378, 0
      %v2115 = vsel %vm1719, %v1379, 0
      %v2118 = vsel %vm1719, %v1380, 0
      %v2121 = vsel %vm1719, %v1381, 0
      %v2124 = vsel %vm1719, %v1382, 0
      %v2127 = vsel %vm1719, %v1383, 0
      %v2130 = vsel %vm1719, %v1384, 0
      %v2133 = vsel %vm1719, %v1385, 0
      %v2136 = vsel %vm1719, %v1386, 0
      %v2139 = vsel %vm1719, %v1387, 0
      %v2142 = vsel %vm1816, %v1389, 0
      %2144 = vmatprep.subr.mxu0 0.0
      %2145 = vmatpush1.msra.mxu0 %v1388
      %2146 = vmatprep.subr.mxu0 0.0
      %2147 = vmatpush1.msra.mxu0 %v2142
      %2148 = vmatprep.subr.mxu0 0.0
      %2149 = vmatpush1.msra.mxu0 0.0
      %2150 = vmatprep.subr.mxu0 0.0
      %2151 = vmatpush1.msra.mxu0 0.0
      %2152 = vmatprep.subr.mxu0 0.0
      %2153 = vmatpush1.msra.mxu0 0.0
      %2154 = vmatprep.subr.mxu0 0.0
      %2155 = vmatpush1.msra.mxu0 0.0
      %2156 = vmatprep.subr.mxu0 0.0
      %2157 = vmatpush1.msra.mxu0 0.0
      %2158 = vmatprep.subr.mxu0 0.0
      %2159 = vmatpush1.msra.mxu0 0.0
      %2160 = vmatprep.subr.mxu0 0.0
      %2161 = vmatpush1.msra.mxu0 0.0
      %2162 = vmatprep.subr.mxu0 0.0
      %2163 = vmatpush1.msra.mxu0 0.0
      %2164 = vmatprep.subr.mxu0 0.0
      %2165 = vmatpush1.msra.mxu0 0.0
      %2166 = vmatprep.subr.mxu0 0.0
      %2167 = vmatpush1.msra.mxu0 0.0
      %2168 = vmatprep.subr.mxu0 0.0
      %2169 = vmatpush1.msra.mxu0 0.0
      %2170 = vmatprep.subr.mxu0 0.0
      %2171 = vmatpush1.msra.mxu0 0.0
      %2172 = vmatprep.subr.mxu0 0.0
      %2173 = vmatpush1.msra.mxu0 0.0
      %2174 = vmatprep.subr.mxu0 0.0
      %2175 = vmatpush1.msra.mxu0 0.0
      %2176 = vmatprep.subr.mxu0 0.0
      %2177 = vmatpush1.msra.mxu0 0.0
      %2178 = vmatprep.subr.mxu0 0.0
      %2179 = vmatpush1.msra.mxu0 0.0
      %2180 = vmatprep.subr.mxu0 0.0
      %2181 = vmatpush1.msra.mxu0 0.0
      %2182 = vmatprep.subr.mxu0 0.0
      %2183 = vmatpush1.msra.mxu0 0.0
      %2184 = vmatprep.subr.mxu0 0.0
      %2185 = vmatpush1.msra.mxu0 0.0
      %2186 = vmatprep.subr.mxu0 0.0
      %2187 = vmatpush1.msra.mxu0 0.0
      %2188 = vmatprep.subr.mxu0 0.0
      %2189 = vmatpush1.msra.mxu0 0.0
      %2190 = vmatprep.subr.mxu0 0.0
      %2191 = vmatpush1.msra.mxu0 0.0
      %2192 = vmatprep.subr.mxu0 0.0
      %2193 = vmatpush1.msra.mxu0 0.0
      %2194 = vmatprep.subr.mxu0 0.0
      %2195 = vmatpush1.msra.mxu0 0.0
      %2196 = vmatprep.subr.mxu0 0.0
      %2197 = vmatpush1.msra.mxu0 0.0
      %2198 = vmatprep.subr.mxu0 0.0
      %2199 = vmatpush1.msra.mxu0 0.0
      %2200 = vmatprep.subr.mxu0 0.0
      %2201 = vmatpush1.msra.mxu0 0.0
      %2202 = vmatprep.subr.mxu0 0.0
      %2203 = vmatpush1.msra.mxu0 0.0
      %2204 = vmatprep.subr.mxu0 0.0
      %2205 = vmatpush1.msra.mxu0 0.0
      %2206 = vmatprep.subr.mxu0 0.0
      %2207 = vmatpush1.msra.mxu0 0.0
      %2208 = vmatprep.mubr.f32.mxu0 0.0
      %2209 = vmatmul.mubr.f32.gmra.mrb[0].mxu0 %v2046
      %v2210 = vpop.f32.mrb[0].mxu0
      %v2211 = vadd.f32 %v1887, %v2210
      %v2212 = vpop.f32.mrb[0].mxu0
      %2213 = vmatprep.mubr.f32.mxu0 0.0
      %2214 = vmatmul.mubr.f32.gmra.mrb[0].mxu0 %v2049
      %v2215 = vpop.f32.mrb[0].mxu0
      %v2216 = vadd.f32 %v1892, %v2215
      %v2217 = vpop.f32.mrb[0].mxu0
      %2218 = vmatprep.mubr.f32.mxu0 0.0
      %2219 = vmatmul.mubr.f32.gmra.mrb[0].mxu0 %v2052
      %v2220 = vpop.f32.mrb[0].mxu0
      %v2221 = vadd.f32 %v1897, %v2220
      %v2222 = vpop.f32.mrb[0].mxu0
      %2223 = vmatprep.mubr.f32.mxu0 0.0
      %2224 = vmatmul.mubr.f32.gmra.mrb[0].mxu0 %v2055
      %v2225 = vpop.f32.mrb[0].mxu0
      %v2226 = vadd.f32 %v1902, %v2225
      %v2227 = vpop.f32.mrb[0].mxu0
      %2228 = vmatprep.mubr.f32.mxu0 0.0
      %2229 = vmatmul.mubr.f32.gmra.mrb[0].mxu0 %v2058
      %v2230 = vpop.f32.mrb[0].mxu0
      %v2231 = vadd.f32 %v1907, %v2230
      %v2232 = vpop.f32.mrb[0].mxu0
      %2233 = vmatprep.mubr.f32.mxu0 0.0
      %2234 = vmatmul.mubr.f32.gmra.mrb[0].mxu0 %v2061
      %v2235 = vpop.f32.mrb[0].mxu0
      %v2236 = vadd.f32 %v1912, %v2235
      %v2237 = vpop.f32.mrb[0].mxu0
      %2238 = vmatprep.mubr.f32.mxu0 0.0
      %2239 = vmatmul.mubr.f32.gmra.mrb[0].mxu0 %v2064
      %v2240 = vpop.f32.mrb[0].mxu0
      %v2241 = vadd.f32 %v1917, %v2240
      %v2242 = vpop.f32.mrb[0].mxu0
      %2243 = vmatprep.mubr.f32.mxu0 0.0
      %2244 = vmatmul.mubr.f32.gmra.mrb[0].mxu0 %v2067
      %v2245 = vpop.f32.mrb[0].mxu0
      %v2246 = vadd.f32 %v1922, %v2245
      %v2247 = vpop.f32.mrb[0].mxu0
      %2248 = vmatprep.mubr.f32.mxu0 0.0
      %2249 = vmatmul.mubr.f32.gmra.mrb[0].mxu0 %v2070
      %v2250 = vpop.f32.mrb[0].mxu0
      %v2251 = vadd.f32 %v1927, %v2250
      %v2252 = vpop.f32.mrb[0].mxu0
      %2253 = vmatprep.mubr.f32.mxu0 0.0
      %2254 = vmatmul.mubr.f32.gmra.mrb[0].mxu0 %v2073
      %v2255 = vpop.f32.mrb[0].mxu0
      %v2256 = vadd.f32 %v1932, %v2255
      %v2257 = vpop.f32.mrb[0].mxu0
      %2258 = vmatprep.mubr.f32.mxu0 0.0
      %2259 = vmatmul.mubr.f32.gmra.mrb[0].mxu0 %v2076
      %v2260 = vpop.f32.mrb[0].mxu0
      %v2261 = vadd.f32 %v1937, %v2260
      %v2262 = vpop.f32.mrb[0].mxu0
      %2263 = vmatprep.mubr.f32.mxu0 0.0
      %2264 = vmatmul.mubr.f32.gmra.mrb[0].mxu0 %v2079
      %v2265 = vpop.f32.mrb[0].mxu0
      %v2266 = vadd.f32 %v1942, %v2265
      %v2267 = vpop.f32.mrb[0].mxu0
      %2268 = vmatprep.mubr.f32.mxu0 0.0
      %2269 = vmatmul.mubr.f32.gmra.mrb[0].mxu0 %v2082
      %v2270 = vpop.f32.mrb[0].mxu0
      %v2271 = vadd.f32 %v1947, %v2270
      %v2272 = vpop.f32.mrb[0].mxu0
      %2273 = vmatprep.mubr.f32.mxu0 0.0
      %2274 = vmatmul.mubr.f32.gmra.mrb[0].mxu0 %v2085
      %v2275 = vpop.f32.mrb[0].mxu0
      %v2276 = vadd.f32 %v1952, %v2275
      %v2277 = vpop.f32.mrb[0].mxu0
      %2278 = vmatprep.mubr.f32.mxu0 0.0
      %2279 = vmatmul.mubr.f32.gmra.mrb[0].mxu0 %v2088
      %v2280 = vpop.f32.mrb[0].mxu0
      %v2281 = vadd.f32 %v1957, %v2280
      %v2282 = vpop.f32.mrb[0].mxu0
      %2283 = vmatprep.mubr.f32.mxu0 0.0
      %2284 = vmatmul.mubr.f32.gmra.mrb[0].mxu0 %v2091
      %v2285 = vpop.f32.mrb[0].mxu0
      %v2286 = vadd.f32 %v1962, %v2285
      %v2287 = vpop.f32.mrb[0].mxu0
      %2288 = vmatprep.mubr.f32.mxu0 0.0
      %2289 = vmatmul.mubr.f32.gmra.mrb[0].mxu0 %v2094
      %v2290 = vpop.f32.mrb[0].mxu0
      %v2291 = vadd.f32 %v1967, %v2290
      %v2292 = vpop.f32.mrb[0].mxu0
      %2293 = vmatprep.mubr.f32.mxu0 0.0
      %2294 = vmatmul.mubr.f32.gmra.mrb[0].mxu0 %v2097
      %v2295 = vpop.f32.mrb[0].mxu0
      %v2296 = vadd.f32 %v1972, %v2295
      %v2297 = vpop.f32.mrb[0].mxu0
      %2298 = vmatprep.mubr.f32.mxu0 0.0
      %2299 = vmatmul.mubr.f32.gmra.mrb[0].mxu0 %v2100
      %v2300 = vpop.f32.mrb[0].mxu0
      %v2301 = vadd.f32 %v1977, %v2300
      %v2302 = vpop.f32.mrb[0].mxu0
      %2303 = vmatprep.mubr.f32.mxu0 0.0
      %2304 = vmatmul.mubr.f32.gmra.mrb[0].mxu0 %v2103
      %v2305 = vpop.f32.mrb[0].mxu0
      %v2306 = vadd.f32 %v1982, %v2305
      %v2307 = vpop.f32.mrb[0].mxu0
      %2308 = vmatprep.mubr.f32.mxu0 0.0
      %2309 = vmatmul.mubr.f32.gmra.mrb[0].mxu0 %v2106
      %v2310 = vpop.f32.mrb[0].mxu0
      %v2311 = vadd.f32 %v1987, %v2310
      %v2312 = vpop.f32.mrb[0].mxu0
      %2313 = vmatprep.mubr.f32.mxu0 0.0
      %2314 = vmatmul.mubr.f32.gmra.mrb[0].mxu0 %v2109
      %v2315 = vpop.f32.mrb[0].mxu0
      %v2316 = vadd.f32 %v1992, %v2315
      %v2317 = vpop.f32.mrb[0].mxu0
      %2318 = vmatprep.mubr.f32.mxu0 0.0
      %2319 = vmatmul.mubr.f32.gmra.mrb[0].mxu0 %v2112
      %v2320 = vpop.f32.mrb[0].mxu0
      %v2321 = vadd.f32 %v1997, %v2320
      %v2322 = vpop.f32.mrb[0].mxu0
      %2323 = vmatprep.mubr.f32.mxu0 0.0
      %2324 = vmatmul.mubr.f32.gmra.mrb[0].mxu0 %v2115
      %v2325 = vpop.f32.mrb[0].mxu0
      %v2326 = vadd.f32 %v2002, %v2325
      %v2327 = vpop.f32.mrb[0].mxu0
      %2328 = vmatprep.mubr.f32.mxu0 0.0
      %2329 = vmatmul.mubr.f32.gmra.mrb[0].mxu0 %v2118
      %v2330 = vpop.f32.mrb[0].mxu0
      %v2331 = vadd.f32 %v2007, %v2330
      %v2332 = vpop.f32.mrb[0].mxu0
      %2333 = vmatprep.mubr.f32.mxu0 0.0
      %2334 = vmatmul.mubr.f32.gmra.mrb[0].mxu0 %v2121
      %v2335 = vpop.f32.mrb[0].mxu0
      %v2336 = vadd.f32 %v2012, %v2335
      %v2337 = vpop.f32.mrb[0].mxu0
      %2338 = vmatprep.mubr.f32.mxu0 0.0
      %2339 = vmatmul.mubr.f32.gmra.mrb[0].mxu0 %v2124
      %v2340 = vpop.f32.mrb[0].mxu0
      %v2341 = vadd.f32 %v2017, %v2340
      %v2342 = vpop.f32.mrb[0].mxu0
      %2343 = vmatprep.mubr.f32.mxu0 0.0
      %2344 = vmatmul.mubr.f32.gmra.mrb[0].mxu0 %v2127
      %v2345 = vpop.f32.mrb[0].mxu0
      %v2346 = vadd.f32 %v2022, %v2345
      %v2347 = vpop.f32.mrb[0].mxu0
      %2348 = vmatprep.mubr.f32.mxu0 0.0
      %2349 = vmatmul.mubr.f32.gmra.mrb[0].mxu0 %v2130
      %v2350 = vpop.f32.mrb[0].mxu0
      %v2351 = vadd.f32 %v2027, %v2350
      %v2352 = vpop.f32.mrb[0].mxu0
      %2353 = vmatprep.mubr.f32.mxu0 0.0
      %2354 = vmatmul.mubr.f32.gmra.mrb[0].mxu0 %v2133
      %v2355 = vpop.f32.mrb[0].mxu0
      %v2356 = vadd.f32 %v2032, %v2355
      %v2357 = vpop.f32.mrb[0].mxu0
      %2358 = vmatprep.mubr.f32.mxu0 0.0
      %2359 = vmatmul.mubr.f32.gmra.mrb[0].mxu0 %v2136
      %v2360 = vpop.f32.mrb[0].mxu0
      %v2361 = vadd.f32 %v2037, %v2360
      %v2362 = vpop.f32.mrb[0].mxu0
      %2363 = vmatprep.mubr.f32.mxu0 0.0
      %2364 = vmatmul.mubr.f32.gmra.mrb[0].mxu0 %v2139
      %v2365 = vpop.f32.mrb[0].mxu0
      %v2366 = vadd.f32 %v2042, %v2365
      %v2367 = vpop.f32.mrb[0].mxu0
      %2368 = vdwg.mxu0
      %v2369 = vld [vmem:[#allocation2 + $0x9] sm:$0xff]
      %v2370 = vld [vmem:[#allocation2 + $0x11] sm:$0xff]
      %v2371 = vld [vmem:[#allocation2 + $0x19] sm:$0xff]
      %v2372 = vld [vmem:[#allocation2 + $0x21] sm:$0xff]
      %v2373 = vld [vmem:[#allocation2 + $0x29] sm:$0xff]
      %v2374 = vld [vmem:[#allocation2 + $0x31] sm:$0xff]
      %v2375 = vld [vmem:[#allocation2 + $0x39] sm:$0xff]
      %v2376 = vld [vmem:[#allocation2 + $0x41] sm:$0xff]
      %v2377 = vld [vmem:[#allocation2 + $0x49] sm:$0xff]
      %v2378 = vld [vmem:[#allocation2 + $0x51] sm:$0xff]
      %v2379 = vld [vmem:[#allocation2 + $0x59] sm:$0xff]
      %v2380 = vld [vmem:[#allocation2 + $0x61] sm:$0xff]
      %v2381 = vld [vmem:[#allocation2 + $0x69] sm:$0xff]
      %v2382 = vld [vmem:[#allocation2 + $0x71] sm:$0xff]
      %v2383 = vld [vmem:[#allocation2 + $0x79] sm:$0xff]
      %v2384 = vld [vmem:[#allocation2 + $0x81] sm:$0xff]
      %v2385 = vld [vmem:[#allocation2 + $0x89] sm:$0xff]
      %v2386 = vld [vmem:[#allocation2 + $0x91] sm:$0xff]
      %v2387 = vld [vmem:[#allocation2 + $0x99] sm:$0xff]
      %v2388 = vld [vmem:[#allocation2 + $0xa1] sm:$0xff]
      %v2389 = vld [vmem:[#allocation2 + $0xa9] sm:$0xff]
      %v2390 = vld [vmem:[#allocation2 + $0xb1] sm:$0xff]
      %v2391 = vld [vmem:[#allocation2 + $0xb9] sm:$0xff]
      %v2392 = vld [vmem:[#allocation2 + $0xc1] sm:$0xff]
      %v2393 = vld [vmem:[#allocation2 + $0xc9] sm:$0xff]
      %v2394 = vld [vmem:[#allocation2 + $0xd1] sm:$0xff]
      %v2395 = vld [vmem:[#allocation2 + $0xd9] sm:$0xff]
      %v2396 = vld [vmem:[#allocation2 + $0xe1] sm:$0xff]
      %v2397 = vld [vmem:[#allocation2 + $0xe9] sm:$0xff]
      %v2398 = vld [vmem:[#allocation2 + $0xf1] sm:$0xff]
      %v2399 = vld [vmem:[#allocation2 + $0xf9] sm:$0xff]
      %v2400 = vld [vmem:[#allocation2 + $0x101] sm:$0xff]
      %v2401 = vld [vmem:[#allocation2 + $0x109] sm:$0xff]
      %v2402 = vld [vmem:[#allocation2 + $0x111] sm:$0xff]
      %v2403 = vld [vmem:[#allocation2 + $0x119] sm:$0xff]
      %v2404 = vld [vmem:[#allocation2 + $0x121] sm:$0xff]
      %2437 = vrot.lane.b32.xlu0 %v2371, 4
      %v2438 = vpop.permute.xlu0 %2437
      %2439 = vrot.lane.b32.xlu0 %v2372, 4
      %v2440 = vpop.permute.xlu0 %2439
      %2441 = vrot.lane.b32.xlu0 %v2373, 4
      %v2442 = vpop.permute.xlu0 %2441
      %2443 = vrot.lane.b32.xlu0 %v2374, 4
      %v2444 = vpop.permute.xlu0 %2443
      %2445 = vrot.lane.b32.xlu0 %v2375, 4
      %v2446 = vpop.permute.xlu0 %2445
      %2447 = vrot.lane.b32.xlu0 %v2376, 4
      %v2448 = vpop.permute.xlu0 %2447
      %2449 = vrot.lane.b32.xlu0 %v2377, 4
      %v2450 = vpop.permute.xlu0 %2449
      %2451 = vrot.lane.b32.xlu0 %v2378, 4
      %v2452 = vpop.permute.xlu0 %2451
      %2453 = vrot.lane.b32.xlu0 %v2379, 4
      %v2454 = vpop.permute.xlu0 %2453
      %2455 = vrot.lane.b32.xlu0 %v2380, 4
      %v2456 = vpop.permute.xlu0 %2455
      %2457 = vrot.lane.b32.xlu0 %v2381, 4
      %v2458 = vpop.permute.xlu0 %2457
      %2459 = vrot.lane.b32.xlu0 %v2382, 4
      %v2460 = vpop.permute.xlu0 %2459
      %2461 = vrot.lane.b32.xlu0 %v2383, 4
      %v2462 = vpop.permute.xlu0 %2461
      %2463 = vrot.lane.b32.xlu0 %v2384, 4
      %v2464 = vpop.permute.xlu0 %2463
      %2465 = vrot.lane.b32.xlu0 %v2385, 4
      %v2466 = vpop.permute.xlu0 %2465
      %2467 = vrot.lane.b32.xlu0 %v2386, 4
      %v2468 = vpop.permute.xlu0 %2467
      %2469 = vrot.lane.b32.xlu0 %v2387, 4
      %v2470 = vpop.permute.xlu0 %2469
      %2471 = vrot.lane.b32.xlu0 %v2388, 4
      %v2472 = vpop.permute.xlu0 %2471
      %2473 = vrot.lane.b32.xlu0 %v2389, 4
      %v2474 = vpop.permute.xlu0 %2473
      %2475 = vrot.lane.b32.xlu0 %v2390, 4
      %v2476 = vpop.permute.xlu0 %2475
      %2477 = vrot.lane.b32.xlu0 %v2391, 4
      %v2478 = vpop.permute.xlu0 %2477
      %2479 = vrot.lane.b32.xlu0 %v2392, 4
      %v2480 = vpop.permute.xlu0 %2479
      %2481 = vrot.lane.b32.xlu0 %v2393, 4
      %v2482 = vpop.permute.xlu0 %2481
      %2483 = vrot.lane.b32.xlu0 %v2394, 4
      %v2484 = vpop.permute.xlu0 %2483
      %2485 = vrot.lane.b32.xlu0 %v2395, 4
      %v2486 = vpop.permute.xlu0 %2485
      %2487 = vrot.lane.b32.xlu0 %v2396, 4
      %v2488 = vpop.permute.xlu0 %2487
      %2489 = vrot.lane.b32.xlu0 %v2397, 4
      %v2490 = vpop.permute.xlu0 %2489
      %2491 = vrot.lane.b32.xlu0 %v2398, 4
      %v2492 = vpop.permute.xlu0 %2491
      %2493 = vrot.lane.b32.xlu0 %v2399, 4
      %v2494 = vpop.permute.xlu0 %2493
      %2495 = vrot.lane.b32.xlu0 %v2400, 4
      %v2496 = vpop.permute.xlu0 %2495
      %2497 = vrot.lane.b32.xlu0 %v2401, 4
      %v2498 = vpop.permute.xlu0 %2497
      %2499 = vrot.lane.b32.xlu0 %v2402, 4
      %v2500 = vpop.permute.xlu0 %2499
      %2535 = vrot.lane.b32.xlu0 %v2373, 8
      %v2536 = vpop.permute.xlu0 %2535
      %2537 = vrot.lane.b32.xlu0 %v2374, 8
      %v2538 = vpop.permute.xlu0 %2537
      %2539 = vrot.lane.b32.xlu0 %v2375, 8
      %v2540 = vpop.permute.xlu0 %2539
      %2541 = vrot.lane.b32.xlu0 %v2376, 8
      %v2542 = vpop.permute.xlu0 %2541
      %2543 = vrot.lane.b32.xlu0 %v2377, 8
      %v2544 = vpop.permute.xlu0 %2543
      %2545 = vrot.lane.b32.xlu0 %v2378, 8
      %v2546 = vpop.permute.xlu0 %2545
      %2547 = vrot.lane.b32.xlu0 %v2379, 8
      %v2548 = vpop.permute.xlu0 %2547
      %2549 = vrot.lane.b32.xlu0 %v2380, 8
      %v2550 = vpop.permute.xlu0 %2549
      %2551 = vrot.lane.b32.xlu0 %v2381, 8
      %v2552 = vpop.permute.xlu0 %2551
      %2553 = vrot.lane.b32.xlu0 %v2382, 8
      %v2554 = vpop.permute.xlu0 %2553
      %2555 = vrot.lane.b32.xlu0 %v2383, 8
      %v2556 = vpop.permute.xlu0 %2555
      %2557 = vrot.lane.b32.xlu0 %v2384, 8
      %v2558 = vpop.permute.xlu0 %2557
      %2559 = vrot.lane.b32.xlu0 %v2385, 8
      %v2560 = vpop.permute.xlu0 %2559
      %2561 = vrot.lane.b32.xlu0 %v2386, 8
      %v2562 = vpop.permute.xlu0 %2561
      %2563 = vrot.lane.b32.xlu0 %v2387, 8
      %v2564 = vpop.permute.xlu0 %2563
      %2565 = vrot.lane.b32.xlu0 %v2388, 8
      %v2566 = vpop.permute.xlu0 %2565
      %2567 = vrot.lane.b32.xlu0 %v2389, 8
      %v2568 = vpop.permute.xlu0 %2567
      %2569 = vrot.lane.b32.xlu0 %v2390, 8
      %v2570 = vpop.permute.xlu0 %2569
      %2571 = vrot.lane.b32.xlu0 %v2391, 8
      %v2572 = vpop.permute.xlu0 %2571
      %2573 = vrot.lane.b32.xlu0 %v2392, 8
      %v2574 = vpop.permute.xlu0 %2573
      %2575 = vrot.lane.b32.xlu0 %v2393, 8
      %v2576 = vpop.permute.xlu0 %2575
      %2577 = vrot.lane.b32.xlu0 %v2394, 8
      %v2578 = vpop.permute.xlu0 %2577
      %2579 = vrot.lane.b32.xlu0 %v2395, 8
      %v2580 = vpop.permute.xlu0 %2579
      %2581 = vrot.lane.b32.xlu0 %v2396, 8
      %v2582 = vpop.permute.xlu0 %2581
      %2583 = vrot.lane.b32.xlu0 %v2397, 8
      %v2584 = vpop.permute.xlu0 %2583
      %2585 = vrot.lane.b32.xlu0 %v2398, 8
      %v2586 = vpop.permute.xlu0 %2585
      %2587 = vrot.lane.b32.xlu0 %v2399, 8
      %v2588 = vpop.permute.xlu0 %2587
      %2589 = vrot.lane.b32.xlu0 %v2400, 8
      %v2590 = vpop.permute.xlu0 %2589
      %2591 = vrot.lane.b32.xlu0 %v2401, 8
      %v2592 = vpop.permute.xlu0 %2591
      %2593 = vrot.lane.b32.xlu0 %v2402, 8
      %v2594 = vpop.permute.xlu0 %2593
      %2595 = vrot.lane.b32.xlu0 %v2403, 8
      %v2596 = vpop.permute.xlu0 %2595
      %2597 = vrot.lane.b32.xlu0 %v2404, 8
      %v2598 = vpop.permute.xlu0 %2597
      %v2631 = vsel %vm381, %v2369, %v2438
      %v2632 = vsel %vm381, %v2370, %v2440
      %v2633 = vsel %vm381, %v2371, %v2442
      %v2634 = vsel %vm381, %v2372, %v2444
      %v2635 = vsel %vm381, %v2373, %v2446
      %v2636 = vsel %vm381, %v2374, %v2448
      %v2637 = vsel %vm381, %v2375, %v2450
      %v2638 = vsel %vm381, %v2376, %v2452
      %v2639 = vsel %vm381, %v2377, %v2454
      %v2640 = vsel %vm381, %v2378, %v2456
      %v2641 = vsel %vm381, %v2379, %v2458
      %v2642 = vsel %vm381, %v2380, %v2460
      %v2643 = vsel %vm381, %v2381, %v2462
      %v2644 = vsel %vm381, %v2382, %v2464
      %v2645 = vsel %vm381, %v2383, %v2466
      %v2646 = vsel %vm381, %v2384, %v2468
      %v2647 = vsel %vm381, %v2385, %v2470
      %v2648 = vsel %vm381, %v2386, %v2472
      %v2649 = vsel %vm381, %v2387, %v2474
      %v2650 = vsel %vm381, %v2388, %v2476
      %v2651 = vsel %vm381, %v2389, %v2478
      %v2652 = vsel %vm381, %v2390, %v2480
      %v2653 = vsel %vm381, %v2391, %v2482
      %v2654 = vsel %vm381, %v2392, %v2484
      %v2655 = vsel %vm381, %v2393, %v2486
      %v2656 = vsel %vm381, %v2394, %v2488
      %v2657 = vsel %vm381, %v2395, %v2490
      %v2658 = vsel %vm381, %v2396, %v2492
      %v2659 = vsel %vm381, %v2397, %v2494
      %v2660 = vsel %vm381, %v2398, %v2496
      %v2661 = vsel %vm381, %v2399, %v2498
      %v2662 = vsel %vm381, %v2400, %v2500
      %v2663 = vsel %vm1323, %v2631, %v2536
      %v2664 = vsel %vm1323, %v2632, %v2538
      %v2665 = vsel %vm1323, %v2633, %v2540
      %v2666 = vsel %vm1323, %v2634, %v2542
      %v2667 = vsel %vm1323, %v2635, %v2544
      %v2668 = vsel %vm1323, %v2636, %v2546
      %v2669 = vsel %vm1323, %v2637, %v2548
      %v2670 = vsel %vm1323, %v2638, %v2550
      %v2671 = vsel %vm1323, %v2639, %v2552
      %v2672 = vsel %vm1323, %v2640, %v2554
      %v2673 = vsel %vm1323, %v2641, %v2556
      %v2674 = vsel %vm1323, %v2642, %v2558
      %v2675 = vsel %vm1323, %v2643, %v2560
      %v2676 = vsel %vm1323, %v2644, %v2562
      %v2677 = vsel %vm1323, %v2645, %v2564
      %v2678 = vsel %vm1323, %v2646, %v2566
      %v2679 = vsel %vm1323, %v2647, %v2568
      %v2680 = vsel %vm1323, %v2648, %v2570
      %v2681 = vsel %vm1323, %v2649, %v2572
      %v2682 = vsel %vm1323, %v2650, %v2574
      %v2683 = vsel %vm1323, %v2651, %v2576
      %v2684 = vsel %vm1323, %v2652, %v2578
      %v2685 = vsel %vm1323, %v2653, %v2580
      %v2686 = vsel %vm1323, %v2654, %v2582
      %v2687 = vsel %vm1323, %v2655, %v2584
      %v2688 = vsel %vm1323, %v2656, %v2586
      %v2689 = vsel %vm1323, %v2657, %v2588
      %v2690 = vsel %vm1323, %v2658, %v2590
      %v2691 = vsel %vm1323, %v2659, %v2592
      %v2692 = vsel %vm1323, %v2660, %v2594
      %v2693 = vsel %vm1323, %v2661, %v2596
      %v2694 = vsel %vm1323, %v2662, %v2598
      %v2695 = vmul.f32 %v2663, %v997
      %v2696 = vmul.f32 %v2664, %v998
      %v2697 = vmul.f32 %v2665, %v999
      %v2698 = vmul.f32 %v2666, %v1000
      %v2699 = vmul.f32 %v2667, %v1001
      %v2700 = vmul.f32 %v2668, %v1002
      %v2701 = vmul.f32 %v2669, %v1003
      %v2702 = vmul.f32 %v2670, %v1004
      %v2703 = vmul.f32 %v2671, %v1005
      %v2704 = vmul.f32 %v2672, %v1006
      %v2705 = vmul.f32 %v2673, %v1007
      %v2706 = vmul.f32 %v2674, %v1008
      %v2707 = vmul.f32 %v2675, %v1009
      %v2708 = vmul.f32 %v2676, %v1010
      %v2709 = vmul.f32 %v2677, %v1011
      %v2710 = vmul.f32 %v2678, %v1012
      %v2711 = vmul.f32 %v2679, %v1013
      %v2712 = vmul.f32 %v2680, %v1014
      %v2713 = vmul.f32 %v2681, %v1015
      %v2714 = vmul.f32 %v2682, %v1016
      %v2715 = vmul.f32 %v2683, %v1017
      %v2716 = vmul.f32 %v2684, %v1018
      %v2717 = vmul.f32 %v2685, %v1019
      %v2718 = vmul.f32 %v2686, %v1020
      %v2719 = vmul.f32 %v2687, %v1021
      %v2720 = vmul.f32 %v2688, %v1022
      %v2721 = vmul.f32 %v2689, %v1023
      %v2722 = vmul.f32 %v2690, %v1024
      %v2723 = vmul.f32 %v2691, %v1025
      %v2724 = vmul.f32 %v2692, %v1026
      %v2725 = vmul.f32 %v2693, %v1027
      %v2726 = vmul.f32 %v2694, %v1028
      %s2727 = scalar_lea.vmem %s3, 32
      %v2728 = vld [vmem:[%s2727] sm:$0xff]
      %v2729 = vld [vmem:[%s2727 + $0x8] sm:$0xf]
      %v2731 = vsel %vm1719, %v2695, 0
      %v2734 = vsel %vm1719, %v2696, 0
      %v2737 = vsel %vm1719, %v2697, 0
      %v2740 = vsel %vm1719, %v2698, 0
      %v2743 = vsel %vm1719, %v2699, 0
      %v2746 = vsel %vm1719, %v2700, 0
      %v2749 = vsel %vm1719, %v2701, 0
      %v2752 = vsel %vm1719, %v2702, 0
      %v2755 = vsel %vm1719, %v2703, 0
      %v2758 = vsel %vm1719, %v2704, 0
      %v2761 = vsel %vm1719, %v2705, 0
      %v2764 = vsel %vm1719, %v2706, 0
      %v2767 = vsel %vm1719, %v2707, 0
      %v2770 = vsel %vm1719, %v2708, 0
      %v2773 = vsel %vm1719, %v2709, 0
      %v2776 = vsel %vm1719, %v2710, 0
      %v2779 = vsel %vm1719, %v2711, 0
      %v2782 = vsel %vm1719, %v2712, 0
      %v2785 = vsel %vm1719, %v2713, 0
      %v2788 = vsel %vm1719, %v2714, 0
      %v2791 = vsel %vm1719, %v2715, 0
      %v2794 = vsel %vm1719, %v2716, 0
      %v2797 = vsel %vm1719, %v2717, 0
      %v2800 = vsel %vm1719, %v2718, 0
      %v2803 = vsel %vm1719, %v2719, 0
      %v2806 = vsel %vm1719, %v2720, 0
      %v2809 = vsel %vm1719, %v2721, 0
      %v2812 = vsel %vm1719, %v2722, 0
      %v2815 = vsel %vm1719, %v2723, 0
      %v2818 = vsel %vm1719, %v2724, 0
      %v2821 = vsel %vm1719, %v2725, 0
      %v2824 = vsel %vm1719, %v2726, 0
      %v2827 = vsel %vm1816, %v2729, 0
      %2829 = vmatprep.subr.mxu0 0.0
      %2830 = vmatpush1.msra.mxu0 %v2728
      %2831 = vmatprep.subr.mxu0 0.0
      %2832 = vmatpush1.msra.mxu0 %v2827
      %2833 = vmatprep.subr.mxu0 0.0
      %2834 = vmatpush1.msra.mxu0 0.0
      %2835 = vmatprep.subr.mxu0 0.0
      %2836 = vmatpush1.msra.mxu0 0.0
      %2837 = vmatprep.subr.mxu0 0.0
      %2838 = vmatpush1.msra.mxu0 0.0
      %2839 = vmatprep.subr.mxu0 0.0
      %2840 = vmatpush1.msra.mxu0 0.0
      %2841 = vmatprep.subr.mxu0 0.0
      %2842 = vmatpush1.msra.mxu0 0.0
      %2843 = vmatprep.subr.mxu0 0.0
      %2844 = vmatpush1.msra.mxu0 0.0
      %2845 = vmatprep.subr.mxu0 0.0
      %2846 = vmatpush1.msra.mxu0 0.0
      %2847 = vmatprep.subr.mxu0 0.0
      %2848 = vmatpush1.msra.mxu0 0.0
      %2849 = vmatprep.subr.mxu0 0.0
      %2850 = vmatpush1.msra.mxu0 0.0
      %2851 = vmatprep.subr.mxu0 0.0
      %2852 = vmatpush1.msra.mxu0 0.0
      %2853 = vmatprep.subr.mxu0 0.0
      %2854 = vmatpush1.msra.mxu0 0.0
      %2855 = vmatprep.subr.mxu0 0.0
      %2856 = vmatpush1.msra.mxu0 0.0
      %2857 = vmatprep.subr.mxu0 0.0
      %2858 = vmatpush1.msra.mxu0 0.0
      %2859 = vmatprep.subr.mxu0 0.0
      %2860 = vmatpush1.msra.mxu0 0.0
      %2861 = vmatprep.subr.mxu0 0.0
      %2862 = vmatpush1.msra.mxu0 0.0
      %2863 = vmatprep.subr.mxu0 0.0
      %2864 = vmatpush1.msra.mxu0 0.0
      %2865 = vmatprep.subr.mxu0 0.0
      %2866 = vmatpush1.msra.mxu0 0.0
      %2867 = vmatprep.subr.mxu0 0.0
      %2868 = vmatpush1.msra.mxu0 0.0
      %2869 = vmatprep.subr.mxu0 0.0
      %2870 = vmatpush1.msra.mxu0 0.0
      %2871 = vmatprep.subr.mxu0 0.0
      %2872 = vmatpush1.msra.mxu0 0.0
      %2873 = vmatprep.subr.mxu0 0.0
      %2874 = vmatpush1.msra.mxu0 0.0
      %2875 = vmatprep.subr.mxu0 0.0
      %2876 = vmatpush1.msra.mxu0 0.0
      %2877 = vmatprep.subr.mxu0 0.0
      %2878 = vmatpush1.msra.mxu0 0.0
      %2879 = vmatprep.subr.mxu0 0.0
      %2880 = vmatpush1.msra.mxu0 0.0
      %2881 = vmatprep.subr.mxu0 0.0
      %2882 = vmatpush1.msra.mxu0 0.0
      %2883 = vmatprep.subr.mxu0 0.0
      %2884 = vmatpush1.msra.mxu0 0.0
      %2885 = vmatprep.subr.mxu0 0.0
      %2886 = vmatpush1.msra.mxu0 0.0
      %2887 = vmatprep.subr.mxu0 0.0
      %2888 = vmatpush1.msra.mxu0 0.0
      %2889 = vmatprep.subr.mxu0 0.0
      %2890 = vmatpush1.msra.mxu0 0.0
      %2891 = vmatprep.subr.mxu0 0.0
      %2892 = vmatpush1.msra.mxu0 0.0
      %2893 = vmatprep.mubr.f32.mxu0 0.0
      %2894 = vmatmul.mubr.f32.gmra.mrb[0].mxu0 %v2731
      %v2895 = vpop.f32.mrb[0].mxu0
      %v2896 = vadd.f32 0.0, %v2895
      %v2897 = vpop.f32.mrb[0].mxu0
      %2898 = vmatprep.mubr.f32.mxu0 0.0
      %2899 = vmatmul.mubr.f32.gmra.mrb[0].mxu0 %v2734
      %v2900 = vpop.f32.mrb[0].mxu0
      %v2901 = vadd.f32 0.0, %v2900
      %v2902 = vpop.f32.mrb[0].mxu0
      %2903 = vmatprep.mubr.f32.mxu0 0.0
      %2904 = vmatmul.mubr.f32.gmra.mrb[0].mxu0 %v2737
      %v2905 = vpop.f32.mrb[0].mxu0
      %v2906 = vadd.f32 0.0, %v2905
      %v2907 = vpop.f32.mrb[0].mxu0
      %2908 = vmatprep.mubr.f32.mxu0 0.0
      %2909 = vmatmul.mubr.f32.gmra.mrb[0].mxu0 %v2740
      %v2910 = vpop.f32.mrb[0].mxu0
      %v2911 = vadd.f32 0.0, %v2910
      %v2912 = vpop.f32.mrb[0].mxu0
      %2913 = vmatprep.mubr.f32.mxu0 0.0
      %2914 = vmatmul.mubr.f32.gmra.mrb[0].mxu0 %v2743
      %v2915 = vpop.f32.mrb[0].mxu0
      %v2916 = vadd.f32 0.0, %v2915
      %v2917 = vpop.f32.mrb[0].mxu0
      %2918 = vmatprep.mubr.f32.mxu0 0.0
      %2919 = vmatmul.mubr.f32.gmra.mrb[0].mxu0 %v2746
      %v2920 = vpop.f32.mrb[0].mxu0
      %v2921 = vadd.f32 0.0, %v2920
      %v2922 = vpop.f32.mrb[0].mxu0
      %2923 = vmatprep.mubr.f32.mxu0 0.0
      %2924 = vmatmul.mubr.f32.gmra.mrb[0].mxu0 %v2749
      %v2925 = vpop.f32.mrb[0].mxu0
      %v2926 = vadd.f32 0.0, %v2925
      %v2927 = vpop.f32.mrb[0].mxu0
      %2928 = vmatprep.mubr.f32.mxu0 0.0
      %2929 = vmatmul.mubr.f32.gmra.mrb[0].mxu0 %v2752
      %v2930 = vpop.f32.mrb[0].mxu0
      %v2931 = vadd.f32 0.0, %v2930
      %v2932 = vpop.f32.mrb[0].mxu0
      %2933 = vmatprep.mubr.f32.mxu0 0.0
      %2934 = vmatmul.mubr.f32.gmra.mrb[0].mxu0 %v2755
      %v2935 = vpop.f32.mrb[0].mxu0
      %v2936 = vadd.f32 0.0, %v2935
      %v2937 = vpop.f32.mrb[0].mxu0
      %2938 = vmatprep.mubr.f32.mxu0 0.0
      %2939 = vmatmul.mubr.f32.gmra.mrb[0].mxu0 %v2758
      %v2940 = vpop.f32.mrb[0].mxu0
      %v2941 = vadd.f32 0.0, %v2940
      %v2942 = vpop.f32.mrb[0].mxu0
      %2943 = vmatprep.mubr.f32.mxu0 0.0
      %2944 = vmatmul.mubr.f32.gmra.mrb[0].mxu0 %v2761
      %v2945 = vpop.f32.mrb[0].mxu0
      %v2946 = vadd.f32 0.0, %v2945
      %v2947 = vpop.f32.mrb[0].mxu0
      %2948 = vmatprep.mubr.f32.mxu0 0.0
      %2949 = vmatmul.mubr.f32.gmra.mrb[0].mxu0 %v2764
      %v2950 = vpop.f32.mrb[0].mxu0
      %v2951 = vadd.f32 0.0, %v2950
      %v2952 = vpop.f32.mrb[0].mxu0
      %2953 = vmatprep.mubr.f32.mxu0 0.0
      %2954 = vmatmul.mubr.f32.gmra.mrb[0].mxu0 %v2767
      %v2955 = vpop.f32.mrb[0].mxu0
      %v2956 = vadd.f32 0.0, %v2955
      %v2957 = vpop.f32.mrb[0].mxu0
      %2958 = vmatprep.mubr.f32.mxu0 0.0
      %2959 = vmatmul.mubr.f32.gmra.mrb[0].mxu0 %v2770
      %v2960 = vpop.f32.mrb[0].mxu0
      %v2961 = vadd.f32 0.0, %v2960
      %v2962 = vpop.f32.mrb[0].mxu0
      %2963 = vmatprep.mubr.f32.mxu0 0.0
      %2964 = vmatmul.mubr.f32.gmra.mrb[0].mxu0 %v2773
      %v2965 = vpop.f32.mrb[0].mxu0
      %v2966 = vadd.f32 0.0, %v2965
      %v2967 = vpop.f32.mrb[0].mxu0
      %2968 = vmatprep.mubr.f32.mxu0 0.0
      %2969 = vmatmul.mubr.f32.gmra.mrb[0].mxu0 %v2776
      %v2970 = vpop.f32.mrb[0].mxu0
      %v2971 = vadd.f32 0.0, %v2970
      %v2972 = vpop.f32.mrb[0].mxu0
      %2973 = vmatprep.mubr.f32.mxu0 0.0
      %2974 = vmatmul.mubr.f32.gmra.mrb[0].mxu0 %v2779
      %v2975 = vpop.f32.mrb[0].mxu0
      %v2976 = vadd.f32 0.0, %v2975
      %v2977 = vpop.f32.mrb[0].mxu0
      %2978 = vmatprep.mubr.f32.mxu0 0.0
      %2979 = vmatmul.mubr.f32.gmra.mrb[0].mxu0 %v2782
      %v2980 = vpop.f32.mrb[0].mxu0
      %v2981 = vadd.f32 0.0, %v2980
      %v2982 = vpop.f32.mrb[0].mxu0
      %2983 = vmatprep.mubr.f32.mxu0 0.0
      %2984 = vmatmul.mubr.f32.gmra.mrb[0].mxu0 %v2785
      %v2985 = vpop.f32.mrb[0].mxu0
      %v2986 = vadd.f32 0.0, %v2985
      %v2987 = vpop.f32.mrb[0].mxu0
      %2988 = vmatprep.mubr.f32.mxu0 0.0
      %2989 = vmatmul.mubr.f32.gmra.mrb[0].mxu0 %v2788
      %v2990 = vpop.f32.mrb[0].mxu0
      %v2991 = vadd.f32 0.0, %v2990
      %v2992 = vpop.f32.mrb[0].mxu0
      %2993 = vmatprep.mubr.f32.mxu0 0.0
      %2994 = vmatmul.mubr.f32.gmra.mrb[0].mxu0 %v2791
      %v2995 = vpop.f32.mrb[0].mxu0
      %v2996 = vadd.f32 0.0, %v2995
      %v2997 = vpop.f32.mrb[0].mxu0
      %2998 = vmatprep.mubr.f32.mxu0 0.0
      %2999 = vmatmul.mubr.f32.gmra.mrb[0].mxu0 %v2794
      %v3000 = vpop.f32.mrb[0].mxu0
      %v3001 = vadd.f32 0.0, %v3000
      %v3002 = vpop.f32.mrb[0].mxu0
      %3003 = vmatprep.mubr.f32.mxu0 0.0
      %3004 = vmatmul.mubr.f32.gmra.mrb[0].mxu0 %v2797
      %v3005 = vpop.f32.mrb[0].mxu0
      %v3006 = vadd.f32 0.0, %v3005
      %v3007 = vpop.f32.mrb[0].mxu0
      %3008 = vmatprep.mubr.f32.mxu0 0.0
      %3009 = vmatmul.mubr.f32.gmra.mrb[0].mxu0 %v2800
      %v3010 = vpop.f32.mrb[0].mxu0
      %v3011 = vadd.f32 0.0, %v3010
      %v3012 = vpop.f32.mrb[0].mxu0
      %3013 = vmatprep.mubr.f32.mxu0 0.0
      %3014 = vmatmul.mubr.f32.gmra.mrb[0].mxu0 %v2803
      %v3015 = vpop.f32.mrb[0].mxu0
      %v3016 = vadd.f32 0.0, %v3015
      %v3017 = vpop.f32.mrb[0].mxu0
      %3018 = vmatprep.mubr.f32.mxu0 0.0
      %3019 = vmatmul.mubr.f32.gmra.mrb[0].mxu0 %v2806
      %v3020 = vpop.f32.mrb[0].mxu0
      %v3021 = vadd.f32 0.0, %v3020
      %v3022 = vpop.f32.mrb[0].mxu0
      %3023 = vmatprep.mubr.f32.mxu0 0.0
      %3024 = vmatmul.mubr.f32.gmra.mrb[0].mxu0 %v2809
      %v3025 = vpop.f32.mrb[0].mxu0
      %v3026 = vadd.f32 0.0, %v3025
      %v3027 = vpop.f32.mrb[0].mxu0
      %3028 = vmatprep.mubr.f32.mxu0 0.0
      %3029 = vmatmul.mubr.f32.gmra.mrb[0].mxu0 %v2812
      %v3030 = vpop.f32.mrb[0].mxu0
      %v3031 = vadd.f32 0.0, %v3030
      %v3032 = vpop.f32.mrb[0].mxu0
      %3033 = vmatprep.mubr.f32.mxu0 0.0
      %3034 = vmatmul.mubr.f32.gmra.mrb[0].mxu0 %v2815
      %v3035 = vpop.f32.mrb[0].mxu0
      %v3036 = vadd.f32 0.0, %v3035
      %v3037 = vpop.f32.mrb[0].mxu0
      %3038 = vmatprep.mubr.f32.mxu0 0.0
      %3039 = vmatmul.mubr.f32.gmra.mrb[0].mxu0 %v2818
      %v3040 = vpop.f32.mrb[0].mxu0
      %v3041 = vadd.f32 0.0, %v3040
      %v3042 = vpop.f32.mrb[0].mxu0
      %3043 = vmatprep.mubr.f32.mxu0 0.0
      %3044 = vmatmul.mubr.f32.gmra.mrb[0].mxu0 %v2821
      %v3045 = vpop.f32.mrb[0].mxu0
      %v3046 = vadd.f32 0.0, %v3045
      %v3047 = vpop.f32.mrb[0].mxu0
      %3048 = vmatprep.mubr.f32.mxu0 0.0
      %3049 = vmatmul.mubr.f32.gmra.mrb[0].mxu0 %v2824
      %v3050 = vpop.f32.mrb[0].mxu0
      %v3051 = vadd.f32 0.0, %v3050
      %v3052 = vpop.f32.mrb[0].mxu0
      %3053 = vdwg.mxu0
      %v3054 = vadd.f32 %v2211, %v2896
      %v3055 = vadd.f32 %v2216, %v2901
      %v3056 = vadd.f32 %v2221, %v2906
      %v3057 = vadd.f32 %v2226, %v2911
      %v3058 = vadd.f32 %v2231, %v2916
      %v3059 = vadd.f32 %v2236, %v2921
      %v3060 = vadd.f32 %v2241, %v2926
      %v3061 = vadd.f32 %v2246, %v2931
      %v3062 = vadd.f32 %v2251, %v2936
      %v3063 = vadd.f32 %v2256, %v2941
      %v3064 = vadd.f32 %v2261, %v2946
      %v3065 = vadd.f32 %v2266, %v2951
      %v3066 = vadd.f32 %v2271, %v2956
      %v3067 = vadd.f32 %v2276, %v2961
      %v3068 = vadd.f32 %v2281, %v2966
      %v3069 = vadd.f32 %v2286, %v2971
      %v3070 = vadd.f32 %v2291, %v2976
      %v3071 = vadd.f32 %v2296, %v2981
      %v3072 = vadd.f32 %v2301, %v2986
      %v3073 = vadd.f32 %v2306, %v2991
      %v3074 = vadd.f32 %v2311, %v2996
      %v3075 = vadd.f32 %v2316, %v3001
      %v3076 = vadd.f32 %v2321, %v3006
      %v3077 = vadd.f32 %v2326, %v3011
      %v3078 = vadd.f32 %v2331, %v3016
      %v3079 = vadd.f32 %v2336, %v3021
      %v3080 = vadd.f32 %v2341, %v3026
      %v3081 = vadd.f32 %v2346, %v3031
      %v3082 = vadd.f32 %v2351, %v3036
      %v3083 = vadd.f32 %v2356, %v3041
      %v3084 = vadd.f32 %v2361, %v3046
      %v3085 = vadd.f32 %v2366, %v3051
      %3086 = vst.msk [vmem:[%s233] sm:$0xff] %vm381, %v3054
      %3087 = vst.msk [vmem:[%s233 + $0x8] sm:$0xff] %vm381, %v3055
      %3088 = vst.msk [vmem:[%s233 + $0x10] sm:$0xff] %vm381, %v3056
      %3089 = vst.msk [vmem:[%s233 + $0x18] sm:$0xff] %vm381, %v3057
      %3090 = vst.msk [vmem:[%s233 + $0x20] sm:$0xff] %vm381, %v3058
      %3091 = vst.msk [vmem:[%s233 + $0x28] sm:$0xff] %vm381, %v3059
      %3092 = vst.msk [vmem:[%s233 + $0x30] sm:$0xff] %vm381, %v3060
      %3093 = vst.msk [vmem:[%s233 + $0x38] sm:$0xff] %vm381, %v3061
      %3094 = vst.msk [vmem:[%s233 + $0x40] sm:$0xff] %vm381, %v3062
      %3095 = vst.msk [vmem:[%s233 + $0x48] sm:$0xff] %vm381, %v3063
      %3096 = vst.msk [vmem:[%s233 + $0x50] sm:$0xff] %vm381, %v3064
      %3097 = vst.msk [vmem:[%s233 + $0x58] sm:$0xff] %vm381, %v3065
      %3098 = vst.msk [vmem:[%s233 + $0x60] sm:$0xff] %vm381, %v3066
      %3099 = vst.msk [vmem:[%s233 + $0x68] sm:$0xff] %vm381, %v3067
      %3100 = vst.msk [vmem:[%s233 + $0x70] sm:$0xff] %vm381, %v3068
      %3101 = vst.msk [vmem:[%s233 + $0x78] sm:$0xff] %vm381, %v3069
      %3102 = vst.msk [vmem:[%s233 + $0x80] sm:$0xff] %vm381, %v3070
      %3103 = vst.msk [vmem:[%s233 + $0x88] sm:$0xff] %vm381, %v3071
      %3104 = vst.msk [vmem:[%s233 + $0x90] sm:$0xff] %vm381, %v3072
      %3105 = vst.msk [vmem:[%s233 + $0x98] sm:$0xff] %vm381, %v3073
      %3106 = vst.msk [vmem:[%s233 + $0xa0] sm:$0xff] %vm381, %v3074
      %3107 = vst.msk [vmem:[%s233 + $0xa8] sm:$0xff] %vm381, %v3075
      %3108 = vst.msk [vmem:[%s233 + $0xb0] sm:$0xff] %vm381, %v3076
      %3109 = vst.msk [vmem:[%s233 + $0xb8] sm:$0xff] %vm381, %v3077
      %3110 = vst.msk [vmem:[%s233 + $0xc0] sm:$0xff] %vm381, %v3078
      %3111 = vst.msk [vmem:[%s233 + $0xc8] sm:$0xff] %vm381, %v3079
      %3112 = vst.msk [vmem:[%s233 + $0xd0] sm:$0xff] %vm381, %v3080
      %3113 = vst.msk [vmem:[%s233 + $0xd8] sm:$0xff] %vm381, %v3081
      %3114 = vst.msk [vmem:[%s233 + $0xe0] sm:$0xff] %vm381, %v3082
      %3115 = vst.msk [vmem:[%s233 + $0xe8] sm:$0xff] %vm381, %v3083
      %3116 = vst.msk [vmem:[%s233 + $0xf0] sm:$0xff] %vm381, %v3084
      %3117 = vst.msk [vmem:[%s233 + $0xf8] sm:$0xff] %vm381, %v3085
      %v3118 = vsel %vm381, %v3054, 0.0
      %v3119 = vsel %vm381, %v3055, 0.0
      %v3120 = vadd.f32 %v3118, %v3119
      %v3121 = vsel %vm381, %v3056, 0.0
      %v3122 = vadd.f32 %v3120, %v3121
      %v3123 = vsel %vm381, %v3057, 0.0
      %v3124 = vadd.f32 %v3122, %v3123
      %v3125 = vsel %vm381, %v3058, 0.0
      %v3126 = vadd.f32 %v3124, %v3125
      %v3127 = vsel %vm381, %v3059, 0.0
      %v3128 = vadd.f32 %v3126, %v3127
      %v3129 = vsel %vm381, %v3060, 0.0
      %v3130 = vadd.f32 %v3128, %v3129
      %v3131 = vsel %vm381, %v3061, 0.0
      %v3132 = vadd.f32 %v3130, %v3131
      %v3133 = vsel %vm381, %v3062, 0.0
      %v3134 = vadd.f32 %v3132, %v3133
      %v3135 = vsel %vm381, %v3063, 0.0
      %v3136 = vadd.f32 %v3134, %v3135
      %v3137 = vsel %vm381, %v3064, 0.0
      %v3138 = vadd.f32 %v3136, %v3137
      %v3139 = vsel %vm381, %v3065, 0.0
      %v3140 = vadd.f32 %v3138, %v3139
      %v3141 = vsel %vm381, %v3066, 0.0
      %v3142 = vadd.f32 %v3140, %v3141
      %v3143 = vsel %vm381, %v3067, 0.0
      %v3144 = vadd.f32 %v3142, %v3143
      %v3145 = vsel %vm381, %v3068, 0.0
      %v3146 = vadd.f32 %v3144, %v3145
      %v3147 = vsel %vm381, %v3069, 0.0
      %v3148 = vadd.f32 %v3146, %v3147
      %v3149 = vsel %vm381, %v3070, 0.0
      %v3150 = vadd.f32 %v3148, %v3149
      %v3151 = vsel %vm381, %v3071, 0.0
      %v3152 = vadd.f32 %v3150, %v3151
      %v3153 = vsel %vm381, %v3072, 0.0
      %v3154 = vadd.f32 %v3152, %v3153
      %v3155 = vsel %vm381, %v3073, 0.0
      %v3156 = vadd.f32 %v3154, %v3155
      %v3157 = vsel %vm381, %v3074, 0.0
      %v3158 = vadd.f32 %v3156, %v3157
      %v3159 = vsel %vm381, %v3075, 0.0
      %v3160 = vadd.f32 %v3158, %v3159
      %v3161 = vsel %vm381, %v3076, 0.0
      %v3162 = vadd.f32 %v3160, %v3161
      %v3163 = vsel %vm381, %v3077, 0.0
      %v3164 = vadd.f32 %v3162, %v3163
      %v3165 = vsel %vm381, %v3078, 0.0
      %v3166 = vadd.f32 %v3164, %v3165
      %v3167 = vsel %vm381, %v3079, 0.0
      %v3168 = vadd.f32 %v3166, %v3167
      %v3169 = vsel %vm381, %v3080, 0.0
      %v3170 = vadd.f32 %v3168, %v3169
      %v3171 = vsel %vm381, %v3081, 0.0
      %v3172 = vadd.f32 %v3170, %v3171
      %v3173 = vsel %vm381, %v3082, 0.0
      %v3174 = vadd.f32 %v3172, %v3173
      %v3175 = vsel %vm381, %v3083, 0.0
      %v3176 = vadd.f32 %v3174, %v3175
      %v3177 = vsel %vm381, %v3084, 0.0
      %v3178 = vadd.f32 %v3176, %v3177
      %v3179 = vsel %vm381, %v3085, 0.0
      %v3180 = vadd.f32 %v3178, %v3179
      %v3181 = vrot.slane %v3180, 4
      %v3182 = vadd.f32 %v3180, %v3181
      %v3183 = vrot.slane %v3182, 2
      %v3184 = vadd.f32 %v3182, %v3183
      %v3185 = vrot.slane %v3184, 1
      %v3186 = vadd.f32 %v3184, %v3185
      %v3187 = vmul.f32 %v3054, %v3054
      %v3188 = vmul.f32 %v3055, %v3055
      %v3189 = vmul.f32 %v3056, %v3056
      %v3190 = vmul.f32 %v3057, %v3057
      %v3191 = vmul.f32 %v3058, %v3058
      %v3192 = vmul.f32 %v3059, %v3059
      %v3193 = vmul.f32 %v3060, %v3060
      %v3194 = vmul.f32 %v3061, %v3061
      %v3195 = vmul.f32 %v3062, %v3062
      %v3196 = vmul.f32 %v3063, %v3063
      %v3197 = vmul.f32 %v3064, %v3064
      %v3198 = vmul.f32 %v3065, %v3065
      %v3199 = vmul.f32 %v3066, %v3066
      %v3200 = vmul.f32 %v3067, %v3067
      %v3201 = vmul.f32 %v3068, %v3068
      %v3202 = vmul.f32 %v3069, %v3069
      %v3203 = vmul.f32 %v3070, %v3070
      %v3204 = vmul.f32 %v3071, %v3071
      %v3205 = vmul.f32 %v3072, %v3072
      %v3206 = vmul.f32 %v3073, %v3073
      %v3207 = vmul.f32 %v3074, %v3074
      %v3208 = vmul.f32 %v3075, %v3075
      %v3209 = vmul.f32 %v3076, %v3076
      %v3210 = vmul.f32 %v3077, %v3077
      %v3211 = vmul.f32 %v3078, %v3078
      %v3212 = vmul.f32 %v3079, %v3079
      %v3213 = vmul.f32 %v3080, %v3080
      %v3214 = vmul.f32 %v3081, %v3081
      %v3215 = vmul.f32 %v3082, %v3082
      %v3216 = vmul.f32 %v3083, %v3083
      %v3217 = vmul.f32 %v3084, %v3084
      %v3218 = vmul.f32 %v3085, %v3085
      %v3219 = vsel %vm381, %v3187, 0.0
      %v3220 = vsel %vm381, %v3188, 0.0
      %v3221 = vadd.f32 %v3219, %v3220
      %v3222 = vsel %vm381, %v3189, 0.0
      %v3223 = vadd.f32 %v3221, %v3222
      %v3224 = vsel %vm381, %v3190, 0.0
      %v3225 = vadd.f32 %v3223, %v3224
      %v3226 = vsel %vm381, %v3191, 0.0
      %v3227 = vadd.f32 %v3225, %v3226
      %v3228 = vsel %vm381, %v3192, 0.0
      %v3229 = vadd.f32 %v3227, %v3228
      %v3230 = vsel %vm381, %v3193, 0.0
      %v3231 = vadd.f32 %v3229, %v3230
      %v3232 = vsel %vm381, %v3194, 0.0
      %v3233 = vadd.f32 %v3231, %v3232
      %v3234 = vsel %vm381, %v3195, 0.0
      %v3235 = vadd.f32 %v3233, %v3234
      %v3236 = vsel %vm381, %v3196, 0.0
      %v3237 = vadd.f32 %v3235, %v3236
      %v3238 = vsel %vm381, %v3197, 0.0
      %v3239 = vadd.f32 %v3237, %v3238
      %v3240 = vsel %vm381, %v3198, 0.0
      %v3241 = vadd.f32 %v3239, %v3240
      %v3242 = vsel %vm381, %v3199, 0.0
      %v3243 = vadd.f32 %v3241, %v3242
      %v3244 = vsel %vm381, %v3200, 0.0
      %v3245 = vadd.f32 %v3243, %v3244
      %v3246 = vsel %vm381, %v3201, 0.0
      %v3247 = vadd.f32 %v3245, %v3246
      %v3248 = vsel %vm381, %v3202, 0.0
      %v3249 = vadd.f32 %v3247, %v3248
      %v3250 = vsel %vm381, %v3203, 0.0
      %v3251 = vadd.f32 %v3249, %v3250
      %v3252 = vsel %vm381, %v3204, 0.0
      %v3253 = vadd.f32 %v3251, %v3252
      %v3254 = vsel %vm381, %v3205, 0.0
      %v3255 = vadd.f32 %v3253, %v3254
      %v3256 = vsel %vm381, %v3206, 0.0
      %v3257 = vadd.f32 %v3255, %v3256
      %v3258 = vsel %vm381, %v3207, 0.0
      %v3259 = vadd.f32 %v3257, %v3258
      %v3260 = vsel %vm381, %v3208, 0.0
      %v3261 = vadd.f32 %v3259, %v3260
      %v3262 = vsel %vm381, %v3209, 0.0
      %v3263 = vadd.f32 %v3261, %v3262
      %v3264 = vsel %vm381, %v3210, 0.0
      %v3265 = vadd.f32 %v3263, %v3264
      %v3266 = vsel %vm381, %v3211, 0.0
      %v3267 = vadd.f32 %v3265, %v3266
      %v3268 = vsel %vm381, %v3212, 0.0
      %v3269 = vadd.f32 %v3267, %v3268
      %v3270 = vsel %vm381, %v3213, 0.0
      %v3271 = vadd.f32 %v3269, %v3270
      %v3272 = vsel %vm381, %v3214, 0.0
      %v3273 = vadd.f32 %v3271, %v3272
      %v3274 = vsel %vm381, %v3215, 0.0
      %v3275 = vadd.f32 %v3273, %v3274
      %v3276 = vsel %vm381, %v3216, 0.0
      %v3277 = vadd.f32 %v3275, %v3276
      %v3278 = vsel %vm381, %v3217, 0.0
      %v3279 = vadd.f32 %v3277, %v3278
      %v3280 = vsel %vm381, %v3218, 0.0
      %v3281 = vadd.f32 %v3279, %v3280
      %v3282 = vrot.slane %v3281, 4
      %v3283 = vadd.f32 %v3281, %v3282
      %v3284 = vrot.slane %v3283, 2
      %v3285 = vadd.f32 %v3283, %v3284
      %v3286 = vrot.slane %v3285, 1
      %v3287 = vadd.f32 %v3285, %v3286
      %vm3288 = vcmask 1040384
      %v3289 = vsel %vm3288, %v3186, %v3287
      %vm3290 = vcmask 25600
      %3291 = vst.msk [vmem:[%s238] sm:$0x3] %vm3290, %v3289
      %s3292 = smul.u32 32, %s17
      %p3293 = scmp.lt.s32.totalorder %s3292, 63
      %s3294 = scalar_select %p3293, %s3292, 63
      %s3295 = smul.addr %s3294, 8
      %s3296 = scalar_lea.vmem %s4, %s3295
      %p3297 = scmp.lt.s32.totalorder %s17, 1
      %s3298 = scalar_select %p3297, %s17, 1
      %s3299 = smul.addr %s3298, 2
      %s3300 = scalar_lea.vmem %s5, %s3299
      // Predicated region
      $region37: #{bottleneck_forward.5} parent=35 // pred_check
        %p3301 = pneg %p124
      $region38: #{bottleneck_forward.5} parent=35 // pred_check_branch
        %3303 = sbr.rel (%p3301) target = $region40
      $region39: #{bottleneck_forward.5} parent=35 // pred_region
        %s3304 = smul.u32 32, %s17
      $region40: #{bottleneck_forward.5} parent=35 // pred_fallthru
        _
      // Predicated region
      $region41: #{bottleneck_forward.5} parent=35 // pred_check
        %p3305 = pneg %p150
      $region42: #{bottleneck_forward.5} parent=35 // pred_check_branch
        %3307 = sbr.rel (%p3305) target = $region44
      $region43: #{bottleneck_forward.5} parent=35 // pred_region
        _
      $region44: #{bottleneck_forward.5} parent=35 // pred_fallthru
        _
    $region36: #{bottleneck_forward.5} parent=5 // pred_fallthru
      _
    %p3308 = scmp.le.s32.totalorder 2, %s12
    // Predicated region
    $region45: #{bottleneck_forward.5} parent=5 // pred_check
      %p3309 = pneg %p3308
    $region46: #{bottleneck_forward.5} parent=5 // pred_check_branch
      %3311 = sbr.rel (%p3309) target = $region48
    $region47: #{bottleneck_forward.5} parent=5 // pred_region
      %s3312 = ssub.s32 %s12, 2
      // Predicated region
      $region49: #{bottleneck_forward.5} parent=47 // pred_check
        %p3313 = pneg %p130
      $region50: #{bottleneck_forward.5} parent=47 // pred_check_branch
        %3315 = sbr.rel (%p3313) target = $region52
      $region51: #{bottleneck_forward.5} parent=47 // pred_region
        %s3316 = smul.u32 32, %s18
        %p3317 = scmp.lt.s32.totalorder %s3316, 63
        %s3318 = scalar_select %p3317, %s3316, 63
        %s3319 = smul.addr %s3318, 8
        %s3320 = scalar_lea.vmem %s4, %s3319
      $region52: #{bottleneck_forward.5} parent=47 // pred_fallthru
        _
      // Predicated region
      $region53: #{bottleneck_forward.5} parent=47 // pred_check
        %p3321 = pneg %p156
      $region54: #{bottleneck_forward.5} parent=47 // pred_check_branch
        %3323 = sbr.rel (%p3321) target = $region56
      $region55: #{bottleneck_forward.5} parent=47 // pred_region
        %p3324 = scmp.lt.s32.totalorder %s18, 1
        %s3325 = scalar_select %p3324, %s18, 1
        %s3326 = smul.addr %s3325, 2
        %s3327 = scalar_lea.vmem %s5, %s3326
      $region56: #{bottleneck_forward.5} parent=47 // pred_fallthru
        _
    $region48: #{bottleneck_forward.5} parent=5 // pred_fallthru
      _
  $region6: #{bottleneck_forward.5} parent=0 // loop_footer
    %s16 = sadd.s32 1, %s12
  $region7: #{bottleneck_forward.5} parent=0 // loop_footer_branch
    %11 = sbr.rel target = $region3
  $region8: #{bottleneck_forward.5} parent=0 // loop_exit
    _

</llo_original>
